<compile_context>
chip_gen: v7x
topology: tpu7x:2x2x1
jax: 0.10.0
libtpu: 0.0.40
codegen_flags: <defaults>
</compile_context>

<pallas_src>
import functools
import math

import jax
import jax.numpy as jnp
from jax.experimental import pallas as pl
from jax.experimental.pallas import tpu as pltpu


def _patch_embed_kernel(x_ref, w_ref, b_ref, o_ref, *, C, P, HB):
    """hb patch rows: out[h, w, e] = bias[e] + sum_{c,p,q} x[c,h,p,w,q]*wgt[c,p,q,e].

    x_ref: (C, HB, P, nW, P)  -- block of patch rows in the original layout
    w_ref: (C, P, P, E)       -- conv weight, rearranged once on the host
    b_ref: (1, E)
    o_ref: (HB, nW, E)
    """
    nW = x_ref.shape[3]
    E = w_ref.shape[3]
    bias = b_ref[...].astype(jnp.float32)            # (1, E), broadcasts below
    for h in range(HB):
        acc = jnp.zeros((nW, E), jnp.float32)
        # Contraction over K = C*P*P as C*P partial (nW, P) @ (P, E) matmuls
        # with f32 accumulation. All slices are static leading-dim indices ->
        # plain VMEM loads, no in-kernel relayout / transposes.
        for c in range(C):
            for p in range(P):
                acc = acc + jnp.dot(x_ref[c, h, p], w_ref[c, p],
                                    preferred_element_type=jnp.float32)
        o_ref[h] = (acc + bias).astype(o_ref.dtype)


def _pick_rows_per_step(nH, C, P, nW, E, itemsize):
    """Largest divisor of nH keeping the static unroll and VMEM tile modest."""
    max_unroll = 512                      # hb*C*P matmul instructions per step
    max_tile_bytes = 4 * 1024 * 1024      # x block + out block per step
    best = 1
    for hb in range(1, nH + 1):
        if nH % hb:
            continue
        unroll = hb * C * P
        tile = C * hb * P * nW * P * itemsize + hb * nW * E * 4
        if unroll <= max_unroll and tile <= max_tile_bytes:
            best = hb
    return best


def patch_embed(x, weight, bias, patch_size, *, compute_dtype=None,
                rows_per_step=None):
    """PatchEmbed.forward.

    x:      (B, C, T, H, W) video, NCTHW
    weight: (E, C, P, P)    Conv2d weight (PyTorch OIHW layout)
    bias:   (E,)            Conv2d bias
    Returns (tokens (B*T, nH*nW, E) float32, T, nW) -- matching the PyTorch
    module's `(x, T, W)` return.
    """
    B, C, T, H, W = x.shape
    P = int(patch_size)
    E = weight.shape[0]
    # TODO(synk): PyTorch Conv2d silently floors for non-divisible sizes; here
    # we require exact divisibility (true for all TimeSformer configs).
    assert H % P == 0 and W % P == 0, "img_size must be divisible by patch_size"
    nH, nW = H // P, W // P

    itemsize = jnp.dtype(compute_dtype or x.dtype).itemsize
    hb = rows_per_step or _pick_rows_per_step(nH, C, P, nW, E, itemsize)
    assert nH % hb == 0, "rows_per_step must divide H // patch_size"

    # Free view reshape only: merge (B, C) and split H->(nH,P), W->(nW,P).
    # No transpose, no HBM copy.
    x6 = x.reshape(B * C, T, nH, P, nW, P)
    # One-time rearrange of the (small) conv weight to (C, P, P, E).
    w_r = jnp.transpose(weight, (1, 2, 3, 0))
    if compute_dtype is not None:
        x6 = x6.astype(compute_dtype)
        w_r = w_r.astype(compute_dtype)
    b_r = bias.reshape(1, E).astype(jnp.float32)

    # Per-step VMEM: double-buffered x block + resident weight + bias + output.
    x_blk = C * hb * P * nW * P * itemsize
    w_bytes = C * P * P * E * itemsize
    out_blk = hb * nW * E * 4
    need = 2 * (x_blk + out_blk) + 2 * (w_bytes + E * 4) + (1 << 20)
    vmem_limit = int(min(64 * 1024 * 1024, max(8 * 1024 * 1024, need)))

    flops = 2 * B * T * nH * nW * (C * P * P) * E
    bytes_accessed = int(x6.size * itemsize + w_r.size * itemsize
                         + b_r.size * 4 + B * T * nH * nW * E * 4)

    kernel = functools.partial(_patch_embed_kernel, C=C, P=P, HB=hb)

    out = pl.pallas_call(
        kernel,
        grid=(B, T, nH // hb),
        in_specs=[
            # hb patch rows per step: x[b, :, t, h*hb:(h+1)*hb rows, :, :].
            # First dim of x6 is B*C with block size C -> block index b.
            pl.BlockSpec((C, None, hb, P, nW, P),
                         lambda b, t, h: (b, t, h, 0, 0, 0)),
            # Conv weight: constant block index -> stays VMEM-resident.
            pl.BlockSpec((C, P, P, E), lambda b, t, h: (0, 0, 0, 0)),
            # Bias: constant block index -> resident.
            pl.BlockSpec((1, E), lambda b, t, h: (0, 0)),
        ],
        out_specs=pl.BlockSpec((None, None, hb, nW, E),
                               lambda b, t, h: (b, t, h, 0, 0)),
        out_shape=jax.ShapeDtypeStruct((B, T, nH, nW, E), jnp.float32),
        compiler_params=pltpu.CompilerParams(
            dimension_semantics=("parallel", "parallel", "parallel"),
            vmem_limit_bytes=vmem_limit,
        ),
        cost_estimate=pl.CostEstimate(
            flops=flops, transcendentals=0, bytes_accessed=bytes_accessed),
    )(x6, w_r, b_r)

    # (B, T, nH, nW, E) -> (B*T, nH*nW, E): merges adjacent dims only (free).
    tokens = out.reshape(B * T, nH * nW, E)
    return tokens, T, nW


if __name__ == "__main__":
    key = jax.random.PRNGKey(0)
    kx, kw, kb = jax.random.split(key, 3)

    # Small shapes implied by the 5-D NCTHW forward.
    B, C, T, H, W = 2, 3, 2, 16, 16
    P, E = 8, 128          # E chosen lane-aligned (multiple of 128)

    x = jax.random.normal(kx, (B, C, T, H, W), jnp.float32)
    fan_in = C * P * P
    bound = 1.0 / math.sqrt(fan_in)   # nn.Conv2d default (kaiming_uniform) bound
    weight = jax.random.uniform(kw, (E, C, P, P), jnp.float32, -bound, bound)
    bias = jax.random.uniform(kb, (E,), jnp.float32, -bound, bound)

    # --- Pallas PatchEmbed (native f32 MXU path) ---
    tokens, T_out, W_out = patch_embed(x, weight, bias, P)
    tokens = jax.block_until_ready(tokens)
    nH, nW = H // P, W // P
    assert tokens.shape == (B * T, nH * nW, E)
    assert T_out == T and W_out == nW

    # --- Reference: the Conv2d-based forward, evaluated by XLA ---
    xt = jnp.transpose(x, (0, 2, 1, 3, 4)).reshape(B * T, C, H, W)
    ref = jax.lax.conv_general_dilated(
        xt, weight, (P, P), "VALID",
        dimension_numbers=("NCHW", "OIHW", "NCHW"),
        precision=jax.lax.Precision.HIGHEST)
    ref = ref.reshape(B * T, E, nH * nW).transpose(0, 2, 1) + bias[None, None, :]
    assert bool(jnp.allclose(tokens, ref, rtol=1e-3, atol=1e-3))

    # --- bf16 MXU-input path (f32 accumulation), relaxed tolerance ---
    tokens_bf16, _, _ = patch_embed(x, weight, bias, P,
                                    compute_dtype=jnp.bfloat16)
    tokens_bf16 = jax.block_until_ready(tokens_bf16)
    assert bool(jnp.allclose(tokens_bf16, ref, rtol=3e-2, atol=3e-2))

    print("KERNEL_OK")
</pallas_src>

<mosaic_0001>
module attributes {stable_mosaic.version = 11 : i64} {
  func.func @_patch_embed_kernel(%arg0: i32, %arg1: i32, %arg2: i32, %arg3: memref<3x1x2x8x2x8xf32, #tpu.memory_space<vmem>>, %arg4: memref<3x8x8x128xf32, #tpu.memory_space<vmem>>, %arg5: memref<1x128xf32, #tpu.memory_space<vmem>>, %arg6: memref<1x1x2x2x128xf32, #tpu.memory_space<vmem>>) attributes {dimension_semantics = [#tpu.dimension_semantics<parallel>, #tpu.dimension_semantics<parallel>, #tpu.dimension_semantics<parallel>], iteration_bounds = array<i64: 2, 2, 1>, scalar_prefetch = 0 : i64, scratch_operands = 0 : i64, tpu.core_type = #tpu.core_type<tc>, window_params = [{transform_indices = @transform_0, window_bounds = array<i64: 3, 1, 2, 8, 2, 8>}, {pipeline_mode = #tpu.pipeline_mode<synchronous>, transform_indices = @transform_1, window_bounds = array<i64: 3, 8, 8, 128>}, {pipeline_mode = #tpu.pipeline_mode<synchronous>, transform_indices = @transform_2, window_bounds = array<i64: 1, 128>}, {transform_indices = @transform_3, window_bounds = array<i64: 1, 1, 2, 2, 128>}]} {
    %c0 = arith.constant 0 : index
    %c0_0 = arith.constant 0 : index
    %0 = vector.load %arg5[%c0, %c0_0] : memref<1x128xf32, #tpu.memory_space<vmem>>, vector<1x128xf32>
    %cst = arith.constant 0.000000e+00 : f32
    %1 = vector.broadcast %cst : f32 to vector<2x128xf32>
    %c0_1 = arith.constant 0 : index
    %c0_2 = arith.constant 0 : index
    %c0_3 = arith.constant 0 : index
    %c0_4 = arith.constant 0 : index
    %c0_5 = arith.constant 0 : index
    %c0_6 = arith.constant 0 : index
    %2 = vector.load %arg3[%c0_1, %c0_2, %c0_3, %c0_4, %c0_5, %c0_6] : memref<3x1x2x8x2x8xf32, #tpu.memory_space<vmem>>, vector<1x1x1x1x2x8xf32>
    %3 = vector.shape_cast %2 : vector<1x1x1x1x2x8xf32> to vector<2x8xf32>
    %c0_7 = arith.constant 0 : index
    %c0_8 = arith.constant 0 : index
    %c0_9 = arith.constant 0 : index
    %c0_10 = arith.constant 0 : index
    %4 = vector.load %arg4[%c0_7, %c0_8, %c0_9, %c0_10] : memref<3x8x8x128xf32, #tpu.memory_space<vmem>>, vector<1x1x8x128xf32>
    %5 = vector.shape_cast %4 : vector<1x1x8x128xf32> to vector<8x128xf32>
    %cst_11 = arith.constant dense<0.000000e+00> : vector<2x128xf32>
    %6 = tpu.matmul %3, %5, %cst_11 {dimension_numbers = #tpu.dot_dimension_numbers<[1], [0], [0], [1], [0, 0, 1, 1], [], []>} : vector<2x8xf32>, vector<8x128xf32>, vector<2x128xf32> -> vector<2x128xf32>
    %7 = arith.addf %1, %6 : vector<2x128xf32>
    %c0_12 = arith.constant 0 : index
    %c0_13 = arith.constant 0 : index
    %c0_14 = arith.constant 0 : index
    %c1 = arith.constant 1 : index
    %c0_15 = arith.constant 0 : index
    %c0_16 = arith.constant 0 : index
    %8 = vector.load %arg3[%c0_12, %c0_13, %c0_14, %c1, %c0_15, %c0_16] : memref<3x1x2x8x2x8xf32, #tpu.memory_space<vmem>>, vector<1x1x1x1x2x8xf32>
    %9 = vector.shape_cast %8 : vector<1x1x1x1x2x8xf32> to vector<2x8xf32>
    %c0_17 = arith.constant 0 : index
    %c1_18 = arith.constant 1 : index
    %c0_19 = arith.constant 0 : index
    %c0_20 = arith.constant 0 : index
    %10 = vector.load %arg4[%c0_17, %c1_18, %c0_19, %c0_20] : memref<3x8x8x128xf32, #tpu.memory_space<vmem>>, vector<1x1x8x128xf32>
    %11 = vector.shape_cast %10 : vector<1x1x8x128xf32> to vector<8x128xf32>
    %cst_21 = arith.constant dense<0.000000e+00> : vector<2x128xf32>
    %12 = tpu.matmul %9, %11, %cst_21 {dimension_numbers = #tpu.dot_dimension_numbers<[1], [0], [0], [1], [0, 0, 1, 1], [], []>} : vector<2x8xf32>, vector<8x128xf32>, vector<2x128xf32> -> vector<2x128xf32>
    %13 = arith.addf %7, %12 : vector<2x128xf32>
    %c0_22 = arith.constant 0 : index
    %c0_23 = arith.constant 0 : index
    %c0_24 = arith.constant 0 : index
    %c2 = arith.constant 2 : index
    %c0_25 = arith.constant 0 : index
    %c0_26 = arith.constant 0 : index
    %14 = vector.load %arg3[%c0_22, %c0_23, %c0_24, %c2, %c0_25, %c0_26] : memref<3x1x2x8x2x8xf32, #tpu.memory_space<vmem>>, vector<1x1x1x1x2x8xf32>
    %15 = vector.shape_cast %14 : vector<1x1x1x1x2x8xf32> to vector<2x8xf32>
    %c0_27 = arith.constant 0 : index
    %c2_28 = arith.constant 2 : index
    %c0_29 = arith.constant 0 : index
    %c0_30 = arith.constant 0 : index
    %16 = vector.load %arg4[%c0_27, %c2_28, %c0_29, %c0_30] : memref<3x8x8x128xf32, #tpu.memory_space<vmem>>, vector<1x1x8x128xf32>
    %17 = vector.shape_cast %16 : vector<1x1x8x128xf32> to vector<8x128xf32>
    %cst_31 = arith.constant dense<0.000000e+00> : vector<2x128xf32>
    %18 = tpu.matmul %15, %17, %cst_31 {dimension_numbers = #tpu.dot_dimension_numbers<[1], [0], [0], [1], [0, 0, 1, 1], [], []>} : vector<2x8xf32>, vector<8x128xf32>, vector<2x128xf32> -> vector<2x128xf32>
    %19 = arith.addf %13, %18 : vector<2x128xf32>
    %c0_32 = arith.constant 0 : index
    %c0_33 = arith.constant 0 : index
    %c0_34 = arith.constant 0 : index
    %c3 = arith.constant 3 : index
    %c0_35 = arith.constant 0 : index
    %c0_36 = arith.constant 0 : index
    %20 = vector.load %arg3[%c0_32, %c0_33, %c0_34, %c3, %c0_35, %c0_36] : memref<3x1x2x8x2x8xf32, #tpu.memory_space<vmem>>, vector<1x1x1x1x2x8xf32>
    %21 = vector.shape_cast %20 : vector<1x1x1x1x2x8xf32> to vector<2x8xf32>
    %c0_37 = arith.constant 0 : index
    %c3_38 = arith.constant 3 : index
    %c0_39 = arith.constant 0 : index
    %c0_40 = arith.constant 0 : index
    %22 = vector.load %arg4[%c0_37, %c3_38, %c0_39, %c0_40] : memref<3x8x8x128xf32, #tpu.memory_space<vmem>>, vector<1x1x8x128xf32>
    %23 = vector.shape_cast %22 : vector<1x1x8x128xf32> to vector<8x128xf32>
    %cst_41 = arith.constant dense<0.000000e+00> : vector<2x128xf32>
    %24 = tpu.matmul %21, %23, %cst_41 {dimension_numbers = #tpu.dot_dimension_numbers<[1], [0], [0], [1], [0, 0, 1, 1], [], []>} : vector<2x8xf32>, vector<8x128xf32>, vector<2x128xf32> -> vector<2x128xf32>
    %25 = arith.addf %19, %24 : vector<2x128xf32>
    %c0_42 = arith.constant 0 : index
    %c0_43 = arith.constant 0 : index
    %c0_44 = arith.constant 0 : index
    %c4 = arith.constant 4 : index
    %c0_45 = arith.constant 0 : index
    %c0_46 = arith.constant 0 : index
    %26 = vector.load %arg3[%c0_42, %c0_43, %c0_44, %c4, %c0_45, %c0_46] : memref<3x1x2x8x2x8xf32, #tpu.memory_space<vmem>>, vector<1x1x1x1x2x8xf32>
    %27 = vector.shape_cast %26 : vector<1x1x1x1x2x8xf32> to vector<2x8xf32>
    %c0_47 = arith.constant 0 : index
    %c4_48 = arith.constant 4 : index
    %c0_49 = arith.constant 0 : index
    %c0_50 = arith.constant 0 : index
    %28 = vector.load %arg4[%c0_47, %c4_48, %c0_49, %c0_50] : memref<3x8x8x128xf32, #tpu.memory_space<vmem>>, vector<1x1x8x128xf32>
    %29 = vector.shape_cast %28 : vector<1x1x8x128xf32> to vector<8x128xf32>
    %cst_51 = arith.constant dense<0.000000e+00> : vector<2x128xf32>
    %30 = tpu.matmul %27, %29, %cst_51 {dimension_numbers = #tpu.dot_dimension_numbers<[1], [0], [0], [1], [0, 0, 1, 1], [], []>} : vector<2x8xf32>, vector<8x128xf32>, vector<2x128xf32> -> vector<2x128xf32>
    %31 = arith.addf %25, %30 : vector<2x128xf32>
    %c0_52 = arith.constant 0 : index
    %c0_53 = arith.constant 0 : index
    %c0_54 = arith.constant 0 : index
    %c5 = arith.constant 5 : index
    %c0_55 = arith.constant 0 : index
    %c0_56 = arith.constant 0 : index
    %32 = vector.load %arg3[%c0_52, %c0_53, %c0_54, %c5, %c0_55, %c0_56] : memref<3x1x2x8x2x8xf32, #tpu.memory_space<vmem>>, vector<1x1x1x1x2x8xf32>
    %33 = vector.shape_cast %32 : vector<1x1x1x1x2x8xf32> to vector<2x8xf32>
    %c0_57 = arith.constant 0 : index
    %c5_58 = arith.constant 5 : index
    %c0_59 = arith.constant 0 : index
    %c0_60 = arith.constant 0 : index
    %34 = vector.load %arg4[%c0_57, %c5_58, %c0_59, %c0_60] : memref<3x8x8x128xf32, #tpu.memory_space<vmem>>, vector<1x1x8x128xf32>
    %35 = vector.shape_cast %34 : vector<1x1x8x128xf32> to vector<8x128xf32>
    %cst_61 = arith.constant dense<0.000000e+00> : vector<2x128xf32>
    %36 = tpu.matmul %33, %35, %cst_61 {dimension_numbers = #tpu.dot_dimension_numbers<[1], [0], [0], [1], [0, 0, 1, 1], [], []>} : vector<2x8xf32>, vector<8x128xf32>, vector<2x128xf32> -> vector<2x128xf32>
    %37 = arith.addf %31, %36 : vector<2x128xf32>
    %c0_62 = arith.constant 0 : index
    %c0_63 = arith.constant 0 : index
    %c0_64 = arith.constant 0 : index
    %c6 = arith.constant 6 : index
    %c0_65 = arith.constant 0 : index
    %c0_66 = arith.constant 0 : index
    %38 = vector.load %arg3[%c0_62, %c0_63, %c0_64, %c6, %c0_65, %c0_66] : memref<3x1x2x8x2x8xf32, #tpu.memory_space<vmem>>, vector<1x1x1x1x2x8xf32>
    %39 = vector.shape_cast %38 : vector<1x1x1x1x2x8xf32> to vector<2x8xf32>
    %c0_67 = arith.constant 0 : index
    %c6_68 = arith.constant 6 : index
    %c0_69 = arith.constant 0 : index
    %c0_70 = arith.constant 0 : index
    %40 = vector.load %arg4[%c0_67, %c6_68, %c0_69, %c0_70] : memref<3x8x8x128xf32, #tpu.memory_space<vmem>>, vector<1x1x8x128xf32>
    %41 = vector.shape_cast %40 : vector<1x1x8x128xf32> to vector<8x128xf32>
    %cst_71 = arith.constant dense<0.000000e+00> : vector<2x128xf32>
    %42 = tpu.matmul %39, %41, %cst_71 {dimension_numbers = #tpu.dot_dimension_numbers<[1], [0], [0], [1], [0, 0, 1, 1], [], []>} : vector<2x8xf32>, vector<8x128xf32>, vector<2x128xf32> -> vector<2x128xf32>
    %43 = arith.addf %37, %42 : vector<2x128xf32>
    %c0_72 = arith.constant 0 : index
    %c0_73 = arith.constant 0 : index
    %c0_74 = arith.constant 0 : index
    %c7 = arith.constant 7 : index
    %c0_75 = arith.constant 0 : index
    %c0_76 = arith.constant 0 : index
    %44 = vector.load %arg3[%c0_72, %c0_73, %c0_74, %c7, %c0_75, %c0_76] : memref<3x1x2x8x2x8xf32, #tpu.memory_space<vmem>>, vector<1x1x1x1x2x8xf32>
    %45 = vector.shape_cast %44 : vector<1x1x1x1x2x8xf32> to vector<2x8xf32>
    %c0_77 = arith.constant 0 : index
    %c7_78 = arith.constant 7 : index
    %c0_79 = arith.constant 0 : index
    %c0_80 = arith.constant 0 : index
    %46 = vector.load %arg4[%c0_77, %c7_78, %c0_79, %c0_80] : memref<3x8x8x128xf32, #tpu.memory_space<vmem>>, vector<1x1x8x128xf32>
    %47 = vector.shape_cast %46 : vector<1x1x8x128xf32> to vector<8x128xf32>
    %cst_81 = arith.constant dense<0.000000e+00> : vector<2x128xf32>
    %48 = tpu.matmul %45, %47, %cst_81 {dimension_numbers = #tpu.dot_dimension_numbers<[1], [0], [0], [1], [0, 0, 1, 1], [], []>} : vector<2x8xf32>, vector<8x128xf32>, vector<2x128xf32> -> vector<2x128xf32>
    %49 = arith.addf %43, %48 : vector<2x128xf32>
    %c1_82 = arith.constant 1 : index
    %c0_83 = arith.constant 0 : index
    %c0_84 = arith.constant 0 : index
    %c0_85 = arith.constant 0 : index
    %c0_86 = arith.constant 0 : index
    %c0_87 = arith.constant 0 : index
    %50 = vector.load %arg3[%c1_82, %c0_83, %c0_84, %c0_85, %c0_86, %c0_87] : memref<3x1x2x8x2x8xf32, #tpu.memory_space<vmem>>, vector<1x1x1x1x2x8xf32>
    %51 = vector.shape_cast %50 : vector<1x1x1x1x2x8xf32> to vector<2x8xf32>
    %c1_88 = arith.constant 1 : index
    %c0_89 = arith.constant 0 : index
    %c0_90 = arith.constant 0 : index
    %c0_91 = arith.constant 0 : index
    %52 = vector.load %arg4[%c1_88, %c0_89, %c0_90, %c0_91] : memref<3x8x8x128xf32, #tpu.memory_space<vmem>>, vector<1x1x8x128xf32>
    %53 = vector.shape_cast %52 : vector<1x1x8x128xf32> to vector<8x128xf32>
    %cst_92 = arith.constant dense<0.000000e+00> : vector<2x128xf32>
    %54 = tpu.matmul %51, %53, %cst_92 {dimension_numbers = #tpu.dot_dimension_numbers<[1], [0], [0], [1], [0, 0, 1, 1], [], []>} : vector<2x8xf32>, vector<8x128xf32>, vector<2x128xf32> -> vector<2x128xf32>
    %55 = arith.addf %49, %54 : vector<2x128xf32>
    %c1_93 = arith.constant 1 : index
    %c0_94 = arith.constant 0 : index
    %c0_95 = arith.constant 0 : index
    %c1_96 = arith.constant 1 : index
    %c0_97 = arith.constant 0 : index
    %c0_98 = arith.constant 0 : index
    %56 = vector.load %arg3[%c1_93, %c0_94, %c0_95, %c1_96, %c0_97, %c0_98] : memref<3x1x2x8x2x8xf32, #tpu.memory_space<vmem>>, vector<1x1x1x1x2x8xf32>
    %57 = vector.shape_cast %56 : vector<1x1x1x1x2x8xf32> to vector<2x8xf32>
    %c1_99 = arith.constant 1 : index
    %c1_100 = arith.constant 1 : index
    %c0_101 = arith.constant 0 : index
    %c0_102 = arith.constant 0 : index
    %58 = vector.load %arg4[%c1_99, %c1_100, %c0_101, %c0_102] : memref<3x8x8x128xf32, #tpu.memory_space<vmem>>, vector<1x1x8x128xf32>
    %59 = vector.shape_cast %58 : vector<1x1x8x128xf32> to vector<8x128xf32>
    %cst_103 = arith.constant dense<0.000000e+00> : vector<2x128xf32>
    %60 = tpu.matmul %57, %59, %cst_103 {dimension_numbers = #tpu.dot_dimension_numbers<[1], [0], [0], [1], [0, 0, 1, 1], [], []>} : vector<2x8xf32>, vector<8x128xf32>, vector<2x128xf32> -> vector<2x128xf32>
    %61 = arith.addf %55, %60 : vector<2x128xf32>
    %c1_104 = arith.constant 1 : index
    %c0_105 = arith.constant 0 : index
    %c0_106 = arith.constant 0 : index
    %c2_107 = arith.constant 2 : index
    %c0_108 = arith.constant 0 : index
    %c0_109 = arith.constant 0 : index
    %62 = vector.load %arg3[%c1_104, %c0_105, %c0_106, %c2_107, %c0_108, %c0_109] : memref<3x1x2x8x2x8xf32, #tpu.memory_space<vmem>>, vector<1x1x1x1x2x8xf32>
    %63 = vector.shape_cast %62 : vector<1x1x1x1x2x8xf32> to vector<2x8xf32>
    %c1_110 = arith.constant 1 : index
    %c2_111 = arith.constant 2 : index
    %c0_112 = arith.constant 0 : index
    %c0_113 = arith.constant 0 : index
    %64 = vector.load %arg4[%c1_110, %c2_111, %c0_112, %c0_113] : memref<3x8x8x128xf32, #tpu.memory_space<vmem>>, vector<1x1x8x128xf32>
    %65 = vector.shape_cast %64 : vector<1x1x8x128xf32> to vector<8x128xf32>
    %cst_114 = arith.constant dense<0.000000e+00> : vector<2x128xf32>
    %66 = tpu.matmul %63, %65, %cst_114 {dimension_numbers = #tpu.dot_dimension_numbers<[1], [0], [0], [1], [0, 0, 1, 1], [], []>} : vector<2x8xf32>, vector<8x128xf32>, vector<2x128xf32> -> vector<2x128xf32>
    %67 = arith.addf %61, %66 : vector<2x128xf32>
    %c1_115 = arith.constant 1 : index
    %c0_116 = arith.constant 0 : index
    %c0_117 = arith.constant 0 : index
    %c3_118 = arith.constant 3 : index
    %c0_119 = arith.constant 0 : index
    %c0_120 = arith.constant 0 : index
    %68 = vector.load %arg3[%c1_115, %c0_116, %c0_117, %c3_118, %c0_119, %c0_120] : memref<3x1x2x8x2x8xf32, #tpu.memory_space<vmem>>, vector<1x1x1x1x2x8xf32>
    %69 = vector.shape_cast %68 : vector<1x1x1x1x2x8xf32> to vector<2x8xf32>
    %c1_121 = arith.constant 1 : index
    %c3_122 = arith.constant 3 : index
    %c0_123 = arith.constant 0 : index
    %c0_124 = arith.constant 0 : index
    %70 = vector.load %arg4[%c1_121, %c3_122, %c0_123, %c0_124] : memref<3x8x8x128xf32, #tpu.memory_space<vmem>>, vector<1x1x8x128xf32>
    %71 = vector.shape_cast %70 : vector<1x1x8x128xf32> to vector<8x128xf32>
    %cst_125 = arith.constant dense<0.000000e+00> : vector<2x128xf32>
    %72 = tpu.matmul %69, %71, %cst_125 {dimension_numbers = #tpu.dot_dimension_numbers<[1], [0], [0], [1], [0, 0, 1, 1], [], []>} : vector<2x8xf32>, vector<8x128xf32>, vector<2x128xf32> -> vector<2x128xf32>
    %73 = arith.addf %67, %72 : vector<2x128xf32>
    %c1_126 = arith.constant 1 : index
    %c0_127 = arith.constant 0 : index
    %c0_128 = arith.constant 0 : index
    %c4_129 = arith.constant 4 : index
    %c0_130 = arith.constant 0 : index
    %c0_131 = arith.constant 0 : index
    %74 = vector.load %arg3[%c1_126, %c0_127, %c0_128, %c4_129, %c0_130, %c0_131] : memref<3x1x2x8x2x8xf32, #tpu.memory_space<vmem>>, vector<1x1x1x1x2x8xf32>
    %75 = vector.shape_cast %74 : vector<1x1x1x1x2x8xf32> to vector<2x8xf32>
    %c1_132 = arith.constant 1 : index
    %c4_133 = arith.constant 4 : index
    %c0_134 = arith.constant 0 : index
    %c0_135 = arith.constant 0 : index
    %76 = vector.load %arg4[%c1_132, %c4_133, %c0_134, %c0_135] : memref<3x8x8x128xf32, #tpu.memory_space<vmem>>, vector<1x1x8x128xf32>
    %77 = vector.shape_cast %76 : vector<1x1x8x128xf32> to vector<8x128xf32>
    %cst_136 = arith.constant dense<0.000000e+00> : vector<2x128xf32>
    %78 = tpu.matmul %75, %77, %cst_136 {dimension_numbers = #tpu.dot_dimension_numbers<[1], [0], [0], [1], [0, 0, 1, 1], [], []>} : vector<2x8xf32>, vector<8x128xf32>, vector<2x128xf32> -> vector<2x128xf32>
    %79 = arith.addf %73, %78 : vector<2x128xf32>
    %c1_137 = arith.constant 1 : index
    %c0_138 = arith.constant 0 : index
    %c0_139 = arith.constant 0 : index
    %c5_140 = arith.constant 5 : index
    %c0_141 = arith.constant 0 : index
    %c0_142 = arith.constant 0 : index
    %80 = vector.load %arg3[%c1_137, %c0_138, %c0_139, %c5_140, %c0_141, %c0_142] : memref<3x1x2x8x2x8xf32, #tpu.memory_space<vmem>>, vector<1x1x1x1x2x8xf32>
    %81 = vector.shape_cast %80 : vector<1x1x1x1x2x8xf32> to vector<2x8xf32>
    %c1_143 = arith.constant 1 : index
    %c5_144 = arith.constant 5 : index
    %c0_145 = arith.constant 0 : index
    %c0_146 = arith.constant 0 : index
    %82 = vector.load %arg4[%c1_143, %c5_144, %c0_145, %c0_146] : memref<3x8x8x128xf32, #tpu.memory_space<vmem>>, vector<1x1x8x128xf32>
    %83 = vector.shape_cast %82 : vector<1x1x8x128xf32> to vector<8x128xf32>
    %cst_147 = arith.constant dense<0.000000e+00> : vector<2x128xf32>
    %84 = tpu.matmul %81, %83, %cst_147 {dimension_numbers = #tpu.dot_dimension_numbers<[1], [0], [0], [1], [0, 0, 1, 1], [], []>} : vector<2x8xf32>, vector<8x128xf32>, vector<2x128xf32> -> vector<2x128xf32>
    %85 = arith.addf %79, %84 : vector<2x128xf32>
    %c1_148 = arith.constant 1 : index
    %c0_149 = arith.constant 0 : index
    %c0_150 = arith.constant 0 : index
    %c6_151 = arith.constant 6 : index
    %c0_152 = arith.constant 0 : index
    %c0_153 = arith.constant 0 : index
    %86 = vector.load %arg3[%c1_148, %c0_149, %c0_150, %c6_151, %c0_152, %c0_153] : memref<3x1x2x8x2x8xf32, #tpu.memory_space<vmem>>, vector<1x1x1x1x2x8xf32>
    %87 = vector.shape_cast %86 : vector<1x1x1x1x2x8xf32> to vector<2x8xf32>
    %c1_154 = arith.constant 1 : index
    %c6_155 = arith.constant 6 : index
    %c0_156 = arith.constant 0 : index
    %c0_157 = arith.constant 0 : index
    %88 = vector.load %arg4[%c1_154, %c6_155, %c0_156, %c0_157] : memref<3x8x8x128xf32, #tpu.memory_space<vmem>>, vector<1x1x8x128xf32>
    %89 = vector.shape_cast %88 : vector<1x1x8x128xf32> to vector<8x128xf32>
    %cst_158 = arith.constant dense<0.000000e+00> : vector<2x128xf32>
    %90 = tpu.matmul %87, %89, %cst_158 {dimension_numbers = #tpu.dot_dimension_numbers<[1], [0], [0], [1], [0, 0, 1, 1], [], []>} : vector<2x8xf32>, vector<8x128xf32>, vector<2x128xf32> -> vector<2x128xf32>
    %91 = arith.addf %85, %90 : vector<2x128xf32>
    %c1_159 = arith.constant 1 : index
    %c0_160 = arith.constant 0 : index
    %c0_161 = arith.constant 0 : index
    %c7_162 = arith.constant 7 : index
    %c0_163 = arith.constant 0 : index
    %c0_164 = arith.constant 0 : index
    %92 = vector.load %arg3[%c1_159, %c0_160, %c0_161, %c7_162, %c0_163, %c0_164] : memref<3x1x2x8x2x8xf32, #tpu.memory_space<vmem>>, vector<1x1x1x1x2x8xf32>
    %93 = vector.shape_cast %92 : vector<1x1x1x1x2x8xf32> to vector<2x8xf32>
    %c1_165 = arith.constant 1 : index
    %c7_166 = arith.constant 7 : index
    %c0_167 = arith.constant 0 : index
    %c0_168 = arith.constant 0 : index
    %94 = vector.load %arg4[%c1_165, %c7_166, %c0_167, %c0_168] : memref<3x8x8x128xf32, #tpu.memory_space<vmem>>, vector<1x1x8x128xf32>
    %95 = vector.shape_cast %94 : vector<1x1x8x128xf32> to vector<8x128xf32>
    %cst_169 = arith.constant dense<0.000000e+00> : vector<2x128xf32>
    %96 = tpu.matmul %93, %95, %cst_169 {dimension_numbers = #tpu.dot_dimension_numbers<[1], [0], [0], [1], [0, 0, 1, 1], [], []>} : vector<2x8xf32>, vector<8x128xf32>, vector<2x128xf32> -> vector<2x128xf32>
    %97 = arith.addf %91, %96 : vector<2x128xf32>
    %c2_170 = arith.constant 2 : index
    %c0_171 = arith.constant 0 : index
    %c0_172 = arith.constant 0 : index
    %c0_173 = arith.constant 0 : index
    %c0_174 = arith.constant 0 : index
    %c0_175 = arith.constant 0 : index
    %98 = vector.load %arg3[%c2_170, %c0_171, %c0_172, %c0_173, %c0_174, %c0_175] : memref<3x1x2x8x2x8xf32, #tpu.memory_space<vmem>>, vector<1x1x1x1x2x8xf32>
    %99 = vector.shape_cast %98 : vector<1x1x1x1x2x8xf32> to vector<2x8xf32>
    %c2_176 = arith.constant 2 : index
    %c0_177 = arith.constant 0 : index
    %c0_178 = arith.constant 0 : index
    %c0_179 = arith.constant 0 : index
    %100 = vector.load %arg4[%c2_176, %c0_177, %c0_178, %c0_179] : memref<3x8x8x128xf32, #tpu.memory_space<vmem>>, vector<1x1x8x128xf32>
    %101 = vector.shape_cast %100 : vector<1x1x8x128xf32> to vector<8x128xf32>
    %cst_180 = arith.constant dense<0.000000e+00> : vector<2x128xf32>
    %102 = tpu.matmul %99, %101, %cst_180 {dimension_numbers = #tpu.dot_dimension_numbers<[1], [0], [0], [1], [0, 0, 1, 1], [], []>} : vector<2x8xf32>, vector<8x128xf32>, vector<2x128xf32> -> vector<2x128xf32>
    %103 = arith.addf %97, %102 : vector<2x128xf32>
    %c2_181 = arith.constant 2 : index
    %c0_182 = arith.constant 0 : index
    %c0_183 = arith.constant 0 : index
    %c1_184 = arith.constant 1 : index
    %c0_185 = arith.constant 0 : index
    %c0_186 = arith.constant 0 : index
    %104 = vector.load %arg3[%c2_181, %c0_182, %c0_183, %c1_184, %c0_185, %c0_186] : memref<3x1x2x8x2x8xf32, #tpu.memory_space<vmem>>, vector<1x1x1x1x2x8xf32>
    %105 = vector.shape_cast %104 : vector<1x1x1x1x2x8xf32> to vector<2x8xf32>
    %c2_187 = arith.constant 2 : index
    %c1_188 = arith.constant 1 : index
    %c0_189 = arith.constant 0 : index
    %c0_190 = arith.constant 0 : index
    %106 = vector.load %arg4[%c2_187, %c1_188, %c0_189, %c0_190] : memref<3x8x8x128xf32, #tpu.memory_space<vmem>>, vector<1x1x8x128xf32>
    %107 = vector.shape_cast %106 : vector<1x1x8x128xf32> to vector<8x128xf32>
    %cst_191 = arith.constant dense<0.000000e+00> : vector<2x128xf32>
    %108 = tpu.matmul %105, %107, %cst_191 {dimension_numbers = #tpu.dot_dimension_numbers<[1], [0], [0], [1], [0, 0, 1, 1], [], []>} : vector<2x8xf32>, vector<8x128xf32>, vector<2x128xf32> -> vector<2x128xf32>
    %109 = arith.addf %103, %108 : vector<2x128xf32>
    %c2_192 = arith.constant 2 : index
    %c0_193 = arith.constant 0 : index
    %c0_194 = arith.constant 0 : index
    %c2_195 = arith.constant 2 : index
    %c0_196 = arith.constant 0 : index
    %c0_197 = arith.constant 0 : index
    %110 = vector.load %arg3[%c2_192, %c0_193, %c0_194, %c2_195, %c0_196, %c0_197] : memref<3x1x2x8x2x8xf32, #tpu.memory_space<vmem>>, vector<1x1x1x1x2x8xf32>
    %111 = vector.shape_cast %110 : vector<1x1x1x1x2x8xf32> to vector<2x8xf32>
    %c2_198 = arith.constant 2 : index
    %c2_199 = arith.constant 2 : index
    %c0_200 = arith.constant 0 : index
    %c0_201 = arith.constant 0 : index
    %112 = vector.load %arg4[%c2_198, %c2_199, %c0_200, %c0_201] : memref<3x8x8x128xf32, #tpu.memory_space<vmem>>, vector<1x1x8x128xf32>
    %113 = vector.shape_cast %112 : vector<1x1x8x128xf32> to vector<8x128xf32>
    %cst_202 = arith.constant dense<0.000000e+00> : vector<2x128xf32>
    %114 = tpu.matmul %111, %113, %cst_202 {dimension_numbers = #tpu.dot_dimension_numbers<[1], [0], [0], [1], [0, 0, 1, 1], [], []>} : vector<2x8xf32>, vector<8x128xf32>, vector<2x128xf32> -> vector<2x128xf32>
    %115 = arith.addf %109, %114 : vector<2x128xf32>
    %c2_203 = arith.constant 2 : index
    %c0_204 = arith.constant 0 : index
    %c0_205 = arith.constant 0 : index
    %c3_206 = arith.constant 3 : index
    %c0_207 = arith.constant 0 : index
    %c0_208 = arith.constant 0 : index
    %116 = vector.load %arg3[%c2_203, %c0_204, %c0_205, %c3_206, %c0_207, %c0_208] : memref<3x1x2x8x2x8xf32, #tpu.memory_space<vmem>>, vector<1x1x1x1x2x8xf32>
    %117 = vector.shape_cast %116 : vector<1x1x1x1x2x8xf32> to vector<2x8xf32>
    %c2_209 = arith.constant 2 : index
    %c3_210 = arith.constant 3 : index
    %c0_211 = arith.constant 0 : index
    %c0_212 = arith.constant 0 : index
    %118 = vector.load %arg4[%c2_209, %c3_210, %c0_211, %c0_212] : memref<3x8x8x128xf32, #tpu.memory_space<vmem>>, vector<1x1x8x128xf32>
    %119 = vector.shape_cast %118 : vector<1x1x8x128xf32> to vector<8x128xf32>
    %cst_213 = arith.constant dense<0.000000e+00> : vector<2x128xf32>
    %120 = tpu.matmul %117, %119, %cst_213 {dimension_numbers = #tpu.dot_dimension_numbers<[1], [0], [0], [1], [0, 0, 1, 1], [], []>} : vector<2x8xf32>, vector<8x128xf32>, vector<2x128xf32> -> vector<2x128xf32>
    %121 = arith.addf %115, %120 : vector<2x128xf32>
    %c2_214 = arith.constant 2 : index
    %c0_215 = arith.constant 0 : index
    %c0_216 = arith.constant 0 : index
    %c4_217 = arith.constant 4 : index
    %c0_218 = arith.constant 0 : index
    %c0_219 = arith.constant 0 : index
    %122 = vector.load %arg3[%c2_214, %c0_215, %c0_216, %c4_217, %c0_218, %c0_219] : memref<3x1x2x8x2x8xf32, #tpu.memory_space<vmem>>, vector<1x1x1x1x2x8xf32>
    %123 = vector.shape_cast %122 : vector<1x1x1x1x2x8xf32> to vector<2x8xf32>
    %c2_220 = arith.constant 2 : index
    %c4_221 = arith.constant 4 : index
    %c0_222 = arith.constant 0 : index
    %c0_223 = arith.constant 0 : index
    %124 = vector.load %arg4[%c2_220, %c4_221, %c0_222, %c0_223] : memref<3x8x8x128xf32, #tpu.memory_space<vmem>>, vector<1x1x8x128xf32>
    %125 = vector.shape_cast %124 : vector<1x1x8x128xf32> to vector<8x128xf32>
    %cst_224 = arith.constant dense<0.000000e+00> : vector<2x128xf32>
    %126 = tpu.matmul %123, %125, %cst_224 {dimension_numbers = #tpu.dot_dimension_numbers<[1], [0], [0], [1], [0, 0, 1, 1], [], []>} : vector<2x8xf32>, vector<8x128xf32>, vector<2x128xf32> -> vector<2x128xf32>
    %127 = arith.addf %121, %126 : vector<2x128xf32>
    %c2_225 = arith.constant 2 : index
    %c0_226 = arith.constant 0 : index
    %c0_227 = arith.constant 0 : index
    %c5_228 = arith.constant 5 : index
    %c0_229 = arith.constant 0 : index
    %c0_230 = arith.constant 0 : index
    %128 = vector.load %arg3[%c2_225, %c0_226, %c0_227, %c5_228, %c0_229, %c0_230] : memref<3x1x2x8x2x8xf32, #tpu.memory_space<vmem>>, vector<1x1x1x1x2x8xf32>
    %129 = vector.shape_cast %128 : vector<1x1x1x1x2x8xf32> to vector<2x8xf32>
    %c2_231 = arith.constant 2 : index
    %c5_232 = arith.constant 5 : index
    %c0_233 = arith.constant 0 : index
    %c0_234 = arith.constant 0 : index
    %130 = vector.load %arg4[%c2_231, %c5_232, %c0_233, %c0_234] : memref<3x8x8x128xf32, #tpu.memory_space<vmem>>, vector<1x1x8x128xf32>
    %131 = vector.shape_cast %130 : vector<1x1x8x128xf32> to vector<8x128xf32>
    %cst_235 = arith.constant dense<0.000000e+00> : vector<2x128xf32>
    %132 = tpu.matmul %129, %131, %cst_235 {dimension_numbers = #tpu.dot_dimension_numbers<[1], [0], [0], [1], [0, 0, 1, 1], [], []>} : vector<2x8xf32>, vector<8x128xf32>, vector<2x128xf32> -> vector<2x128xf32>
    %133 = arith.addf %127, %132 : vector<2x128xf32>
    %c2_236 = arith.constant 2 : index
    %c0_237 = arith.constant 0 : index
    %c0_238 = arith.constant 0 : index
    %c6_239 = arith.constant 6 : index
    %c0_240 = arith.constant 0 : index
    %c0_241 = arith.constant 0 : index
    %134 = vector.load %arg3[%c2_236, %c0_237, %c0_238, %c6_239, %c0_240, %c0_241] : memref<3x1x2x8x2x8xf32, #tpu.memory_space<vmem>>, vector<1x1x1x1x2x8xf32>
    %135 = vector.shape_cast %134 : vector<1x1x1x1x2x8xf32> to vector<2x8xf32>
    %c2_242 = arith.constant 2 : index
    %c6_243 = arith.constant 6 : index
    %c0_244 = arith.constant 0 : index
    %c0_245 = arith.constant 0 : index
    %136 = vector.load %arg4[%c2_242, %c6_243, %c0_244, %c0_245] : memref<3x8x8x128xf32, #tpu.memory_space<vmem>>, vector<1x1x8x128xf32>
    %137 = vector.shape_cast %136 : vector<1x1x8x128xf32> to vector<8x128xf32>
    %cst_246 = arith.constant dense<0.000000e+00> : vector<2x128xf32>
    %138 = tpu.matmul %135, %137, %cst_246 {dimension_numbers = #tpu.dot_dimension_numbers<[1], [0], [0], [1], [0, 0, 1, 1], [], []>} : vector<2x8xf32>, vector<8x128xf32>, vector<2x128xf32> -> vector<2x128xf32>
    %139 = arith.addf %133, %138 : vector<2x128xf32>
    %c2_247 = arith.constant 2 : index
    %c0_248 = arith.constant 0 : index
    %c0_249 = arith.constant 0 : index
    %c7_250 = arith.constant 7 : index
    %c0_251 = arith.constant 0 : index
    %c0_252 = arith.constant 0 : index
    %140 = vector.load %arg3[%c2_247, %c0_248, %c0_249, %c7_250, %c0_251, %c0_252] : memref<3x1x2x8x2x8xf32, #tpu.memory_space<vmem>>, vector<1x1x1x1x2x8xf32>
    %141 = vector.shape_cast %140 : vector<1x1x1x1x2x8xf32> to vector<2x8xf32>
    %c2_253 = arith.constant 2 : index
    %c7_254 = arith.constant 7 : index
    %c0_255 = arith.constant 0 : index
    %c0_256 = arith.constant 0 : index
    %142 = vector.load %arg4[%c2_253, %c7_254, %c0_255, %c0_256] : memref<3x8x8x128xf32, #tpu.memory_space<vmem>>, vector<1x1x8x128xf32>
    %143 = vector.shape_cast %142 : vector<1x1x8x128xf32> to vector<8x128xf32>
    %cst_257 = arith.constant dense<0.000000e+00> : vector<2x128xf32>
    %144 = tpu.matmul %141, %143, %cst_257 {dimension_numbers = #tpu.dot_dimension_numbers<[1], [0], [0], [1], [0, 0, 1, 1], [], []>} : vector<2x8xf32>, vector<8x128xf32>, vector<2x128xf32> -> vector<2x128xf32>
    %145 = arith.addf %139, %144 : vector<2x128xf32>
    %146 = vector.broadcast %0 : vector<1x128xf32> to vector<2x128xf32>
    %147 = arith.addf %145, %146 : vector<2x128xf32>
    %c0_258 = arith.constant 0 : index
    %c0_259 = arith.constant 0 : index
    %c0_260 = arith.constant 0 : index
    %c0_261 = arith.constant 0 : index
    %c0_262 = arith.constant 0 : index
    %148 = vector.load %arg6[%c0_258, %c0_259, %c0_260, %c0_261, %c0_262] : memref<1x1x2x2x128xf32, #tpu.memory_space<vmem>>, vector<1x1x1x2x128xf32>
    %149 = vector.shape_cast %148 : vector<1x1x1x2x128xf32> to vector<2x128xf32>
    %150 = vector.shape_cast %147 : vector<2x128xf32> to vector<1x1x1x2x128xf32>
    tpu.vector_store %arg6[%c0_258, %c0_259, %c0_260, %c0_261, %c0_262], %150 {strides = array<i32>} : memref<1x1x2x2x128xf32, #tpu.memory_space<vmem>>, vector<1x1x1x2x128xf32>,
    %cst_263 = arith.constant 0.000000e+00 : f32
    %151 = vector.broadcast %cst_263 : f32 to vector<2x128xf32>
    %c0_264 = arith.constant 0 : index
    %c0_265 = arith.constant 0 : index
    %c1_266 = arith.constant 1 : index
    %c0_267 = arith.constant 0 : index
    %c0_268 = arith.constant 0 : index
    %c0_269 = arith.constant 0 : index
    %152 = vector.load %arg3[%c0_264, %c0_265, %c1_266, %c0_267, %c0_268, %c0_269] : memref<3x1x2x8x2x8xf32, #tpu.memory_space<vmem>>, vector<1x1x1x1x2x8xf32>
    %153 = vector.shape_cast %152 : vector<1x1x1x1x2x8xf32> to vector<2x8xf32>
    %c0_270 = arith.constant 0 : index
    %c0_271 = arith.constant 0 : index
    %c0_272 = arith.constant 0 : index
    %c0_273 = arith.constant 0 : index
    %154 = vector.load %arg4[%c0_270, %c0_271, %c0_272, %c0_273] : memref<3x8x8x128xf32, #tpu.memory_space<vmem>>, vector<1x1x8x128xf32>
    %155 = vector.shape_cast %154 : vector<1x1x8x128xf32> to vector<8x128xf32>
    %cst_274 = arith.constant dense<0.000000e+00> : vector<2x128xf32>
    %156 = tpu.matmul %153, %155, %cst_274 {dimension_numbers = #tpu.dot_dimension_numbers<[1], [0], [0], [1], [0, 0, 1, 1], [], []>} : vector<2x8xf32>, vector<8x128xf32>, vector<2x128xf32> -> vector<2x128xf32>
    %157 = arith.addf %151, %156 : vector<2x128xf32>
    %c0_275 = arith.constant 0 : index
    %c0_276 = arith.constant 0 : index
    %c1_277 = arith.constant 1 : index
    %c1_278 = arith.constant 1 : index
    %c0_279 = arith.constant 0 : index
    %c0_280 = arith.constant 0 : index
    %158 = vector.load %arg3[%c0_275, %c0_276, %c1_277, %c1_278, %c0_279, %c0_280] : memref<3x1x2x8x2x8xf32, #tpu.memory_space<vmem>>, vector<1x1x1x1x2x8xf32>
    %159 = vector.shape_cast %158 : vector<1x1x1x1x2x8xf32> to vector<2x8xf32>
    %c0_281 = arith.constant 0 : index
    %c1_282 = arith.constant 1 : index
    %c0_283 = arith.constant 0 : index
    %c0_284 = arith.constant 0 : index
    %160 = vector.load %arg4[%c0_281, %c1_282, %c0_283, %c0_284] : memref<3x8x8x128xf32, #tpu.memory_space<vmem>>, vector<1x1x8x128xf32>
    %161 = vector.shape_cast %160 : vector<1x1x8x128xf32> to vector<8x128xf32>
    %cst_285 = arith.constant dense<0.000000e+00> : vector<2x128xf32>
    %162 = tpu.matmul %159, %161, %cst_285 {dimension_numbers = #tpu.dot_dimension_numbers<[1], [0], [0], [1], [0, 0, 1, 1], [], []>} : vector<2x8xf32>, vector<8x128xf32>, vector<2x128xf32> -> vector<2x128xf32>
    %163 = arith.addf %157, %162 : vector<2x128xf32>
    %c0_286 = arith.constant 0 : index
    %c0_287 = arith.constant 0 : index
    %c1_288 = arith.constant 1 : index
    %c2_289 = arith.constant 2 : index
    %c0_290 = arith.constant 0 : index
    %c0_291 = arith.constant 0 : index
    %164 = vector.load %arg3[%c0_286, %c0_287, %c1_288, %c2_289, %c0_290, %c0_291] : memref<3x1x2x8x2x8xf32, #tpu.memory_space<vmem>>, vector<1x1x1x1x2x8xf32>
    %165 = vector.shape_cast %164 : vector<1x1x1x1x2x8xf32> to vector<2x8xf32>
    %c0_292 = arith.constant 0 : index
    %c2_293 = arith.constant 2 : index
    %c0_294 = arith.constant 0 : index
    %c0_295 = arith.constant 0 : index
    %166 = vector.load %arg4[%c0_292, %c2_293, %c0_294, %c0_295] : memref<3x8x8x128xf32, #tpu.memory_space<vmem>>, vector<1x1x8x128xf32>
    %167 = vector.shape_cast %166 : vector<1x1x8x128xf32> to vector<8x128xf32>
    %cst_296 = arith.constant dense<0.000000e+00> : vector<2x128xf32>
    %168 = tpu.matmul %165, %167, %cst_296 {dimension_numbers = #tpu.dot_dimension_numbers<[1], [0], [0], [1], [0, 0, 1, 1], [], []>} : vector<2x8xf32>, vector<8x128xf32>, vector<2x128xf32> -> vector<2x128xf32>
    %169 = arith.addf %163, %168 : vector<2x128xf32>
    %c0_297 = arith.constant 0 : index
    %c0_298 = arith.constant 0 : index
    %c1_299 = arith.constant 1 : index
    %c3_300 = arith.constant 3 : index
    %c0_301 = arith.constant 0 : index
    %c0_302 = arith.constant 0 : index
    %170 = vector.load %arg3[%c0_297, %c0_298, %c1_299, %c3_300, %c0_301, %c0_302] : memref<3x1x2x8x2x8xf32, #tpu.memory_space<vmem>>, vector<1x1x1x1x2x8xf32>
    %171 = vector.shape_cast %170 : vector<1x1x1x1x2x8xf32> to vector<2x8xf32>
    %c0_303 = arith.constant 0 : index
    %c3_304 = arith.constant 3 : index
    %c0_305 = arith.constant 0 : index
    %c0_306 = arith.constant 0 : index
    %172 = vector.load %arg4[%c0_303, %c3_304, %c0_305, %c0_306] : memref<3x8x8x128xf32, #tpu.memory_space<vmem>>, vector<1x1x8x128xf32>
    %173 = vector.shape_cast %172 : vector<1x1x8x128xf32> to vector<8x128xf32>
    %cst_307 = arith.constant dense<0.000000e+00> : vector<2x128xf32>
    %174 = tpu.matmul %171, %173, %cst_307 {dimension_numbers = #tpu.dot_dimension_numbers<[1], [0], [0], [1], [0, 0, 1, 1], [], []>} : vector<2x8xf32>, vector<8x128xf32>, vector<2x128xf32> -> vector<2x128xf32>
    %175 = arith.addf %169, %174 : vector<2x128xf32>
    %c0_308 = arith.constant 0 : index
    %c0_309 = arith.constant 0 : index
    %c1_310 = arith.constant 1 : index
    %c4_311 = arith.constant 4 : index
    %c0_312 = arith.constant 0 : index
    %c0_313 = arith.constant 0 : index
    %176 = vector.load %arg3[%c0_308, %c0_309, %c1_310, %c4_311, %c0_312, %c0_313] : memref<3x1x2x8x2x8xf32, #tpu.memory_space<vmem>>, vector<1x1x1x1x2x8xf32>
    %177 = vector.shape_cast %176 : vector<1x1x1x1x2x8xf32> to vector<2x8xf32>
    %c0_314 = arith.constant 0 : index
    %c4_315 = arith.constant 4 : index
    %c0_316 = arith.constant 0 : index
    %c0_317 = arith.constant 0 : index
    %178 = vector.load %arg4[%c0_314, %c4_315, %c0_316, %c0_317] : memref<3x8x8x128xf32, #tpu.memory_space<vmem>>, vector<1x1x8x128xf32>
    %179 = vector.shape_cast %178 : vector<1x1x8x128xf32> to vector<8x128xf32>
    %cst_318 = arith.constant dense<0.000000e+00> : vector<2x128xf32>
    %180 = tpu.matmul %177, %179, %cst_318 {dimension_numbers = #tpu.dot_dimension_numbers<[1], [0], [0], [1], [0, 0, 1, 1], [], []>} : vector<2x8xf32>, vector<8x128xf32>, vector<2x128xf32> -> vector<2x128xf32>
    %181 = arith.addf %175, %180 : vector<2x128xf32>
    %c0_319 = arith.constant 0 : index
    %c0_320 = arith.constant 0 : index
    %c1_321 = arith.constant 1 : index
    %c5_322 = arith.constant 5 : index
    %c0_323 = arith.constant 0 : index
    %c0_324 = arith.constant 0 : index
    %182 = vector.load %arg3[%c0_319, %c0_320, %c1_321, %c5_322, %c0_323, %c0_324] : memref<3x1x2x8x2x8xf32, #tpu.memory_space<vmem>>, vector<1x1x1x1x2x8xf32>
    %183 = vector.shape_cast %182 : vector<1x1x1x1x2x8xf32> to vector<2x8xf32>
    %c0_325 = arith.constant 0 : index
    %c5_326 = arith.constant 5 : index
    %c0_327 = arith.constant 0 : index
    %c0_328 = arith.constant 0 : index
    %184 = vector.load %arg4[%c0_325, %c5_326, %c0_327, %c0_328] : memref<3x8x8x128xf32, #tpu.memory_space<vmem>>, vector<1x1x8x128xf32>
    %185 = vector.shape_cast %184 : vector<1x1x8x128xf32> to vector<8x128xf32>
    %cst_329 = arith.constant dense<0.000000e+00> : vector<2x128xf32>
    %186 = tpu.matmul %183, %185, %cst_329 {dimension_numbers = #tpu.dot_dimension_numbers<[1], [0], [0], [1], [0, 0, 1, 1], [], []>} : vector<2x8xf32>, vector<8x128xf32>, vector<2x128xf32> -> vector<2x128xf32>
    %187 = arith.addf %181, %186 : vector<2x128xf32>
    %c0_330 = arith.constant 0 : index
    %c0_331 = arith.constant 0 : index
    %c1_332 = arith.constant 1 : index
    %c6_333 = arith.constant 6 : index
    %c0_334 = arith.constant 0 : index
    %c0_335 = arith.constant 0 : index
    %188 = vector.load %arg3[%c0_330, %c0_331, %c1_332, %c6_333, %c0_334, %c0_335] : memref<3x1x2x8x2x8xf32, #tpu.memory_space<vmem>>, vector<1x1x1x1x2x8xf32>
    %189 = vector.shape_cast %188 : vector<1x1x1x1x2x8xf32> to vector<2x8xf32>
    %c0_336 = arith.constant 0 : index
    %c6_337 = arith.constant 6 : index
    %c0_338 = arith.constant 0 : index
    %c0_339 = arith.constant 0 : index
    %190 = vector.load %arg4[%c0_336, %c6_337, %c0_338, %c0_339] : memref<3x8x8x128xf32, #tpu.memory_space<vmem>>, vector<1x1x8x128xf32>
    %191 = vector.shape_cast %190 : vector<1x1x8x128xf32> to vector<8x128xf32>
    %cst_340 = arith.constant dense<0.000000e+00> : vector<2x128xf32>
    %192 = tpu.matmul %189, %191, %cst_340 {dimension_numbers = #tpu.dot_dimension_numbers<[1], [0], [0], [1], [0, 0, 1, 1], [], []>} : vector<2x8xf32>, vector<8x128xf32>, vector<2x128xf32> -> vector<2x128xf32>
    %193 = arith.addf %187, %192 : vector<2x128xf32>
    %c0_341 = arith.constant 0 : index
    %c0_342 = arith.constant 0 : index
    %c1_343 = arith.constant 1 : index
    %c7_344 = arith.constant 7 : index
    %c0_345 = arith.constant 0 : index
    %c0_346 = arith.constant 0 : index
    %194 = vector.load %arg3[%c0_341, %c0_342, %c1_343, %c7_344, %c0_345, %c0_346] : memref<3x1x2x8x2x8xf32, #tpu.memory_space<vmem>>, vector<1x1x1x1x2x8xf32>
    %195 = vector.shape_cast %194 : vector<1x1x1x1x2x8xf32> to vector<2x8xf32>
    %c0_347 = arith.constant 0 : index
    %c7_348 = arith.constant 7 : index
    %c0_349 = arith.constant 0 : index
    %c0_350 = arith.constant 0 : index
    %196 = vector.load %arg4[%c0_347, %c7_348, %c0_349, %c0_350] : memref<3x8x8x128xf32, #tpu.memory_space<vmem>>, vector<1x1x8x128xf32>
    %197 = vector.shape_cast %196 : vector<1x1x8x128xf32> to vector<8x128xf32>
    %cst_351 = arith.constant dense<0.000000e+00> : vector<2x128xf32>
    %198 = tpu.matmul %195, %197, %cst_351 {dimension_numbers = #tpu.dot_dimension_numbers<[1], [0], [0], [1], [0, 0, 1, 1], [], []>} : vector<2x8xf32>, vector<8x128xf32>, vector<2x128xf32> -> vector<2x128xf32>
    %199 = arith.addf %193, %198 : vector<2x128xf32>
    %c1_352 = arith.constant 1 : index
    %c0_353 = arith.constant 0 : index
    %c1_354 = arith.constant 1 : index
    %c0_355 = arith.constant 0 : index
    %c0_356 = arith.constant 0 : index
    %c0_357 = arith.constant 0 : index
    %200 = vector.load %arg3[%c1_352, %c0_353, %c1_354, %c0_355, %c0_356, %c0_357] : memref<3x1x2x8x2x8xf32, #tpu.memory_space<vmem>>, vector<1x1x1x1x2x8xf32>
    %201 = vector.shape_cast %200 : vector<1x1x1x1x2x8xf32> to vector<2x8xf32>
    %c1_358 = arith.constant 1 : index
    %c0_359 = arith.constant 0 : index
    %c0_360 = arith.constant 0 : index
    %c0_361 = arith.constant 0 : index
    %202 = vector.load %arg4[%c1_358, %c0_359, %c0_360, %c0_361] : memref<3x8x8x128xf32, #tpu.memory_space<vmem>>, vector<1x1x8x128xf32>
    %203 = vector.shape_cast %202 : vector<1x1x8x128xf32> to vector<8x128xf32>
    %cst_362 = arith.constant dense<0.000000e+00> : vector<2x128xf32>
    %204 = tpu.matmul %201, %203, %cst_362 {dimension_numbers = #tpu.dot_dimension_numbers<[1], [0], [0], [1], [0, 0, 1, 1], [], []>} : vector<2x8xf32>, vector<8x128xf32>, vector<2x128xf32> -> vector<2x128xf32>
    %205 = arith.addf %199, %204 : vector<2x128xf32>
    %c1_363 = arith.constant 1 : index
    %c0_364 = arith.constant 0 : index
    %c1_365 = arith.constant 1 : index
    %c1_366 = arith.constant 1 : index
    %c0_367 = arith.constant 0 : index
    %c0_368 = arith.constant 0 : index
    %206 = vector.load %arg3[%c1_363, %c0_364, %c1_365, %c1_366, %c0_367, %c0_368] : memref<3x1x2x8x2x8xf32, #tpu.memory_space<vmem>>, vector<1x1x1x1x2x8xf32>
    %207 = vector.shape_cast %206 : vector<1x1x1x1x2x8xf32> to vector<2x8xf32>
    %c1_369 = arith.constant 1 : index
    %c1_370 = arith.constant 1 : index
    %c0_371 = arith.constant 0 : index
    %c0_372 = arith.constant 0 : index
    %208 = vector.load %arg4[%c1_369, %c1_370, %c0_371, %c0_372] : memref<3x8x8x128xf32, #tpu.memory_space<vmem>>, vector<1x1x8x128xf32>
    %209 = vector.shape_cast %208 : vector<1x1x8x128xf32> to vector<8x128xf32>
    %cst_373 = arith.constant dense<0.000000e+00> : vector<2x128xf32>
    %210 = tpu.matmul %207, %209, %cst_373 {dimension_numbers = #tpu.dot_dimension_numbers<[1], [0], [0], [1], [0, 0, 1, 1], [], []>} : vector<2x8xf32>, vector<8x128xf32>, vector<2x128xf32> -> vector<2x128xf32>
    %211 = arith.addf %205, %210 : vector<2x128xf32>
    %c1_374 = arith.constant 1 : index
    %c0_375 = arith.constant 0 : index
    %c1_376 = arith.constant 1 : index
    %c2_377 = arith.constant 2 : index
    %c0_378 = arith.constant 0 : index
    %c0_379 = arith.constant 0 : index
    %212 = vector.load %arg3[%c1_374, %c0_375, %c1_376, %c2_377, %c0_378, %c0_379] : memref<3x1x2x8x2x8xf32, #tpu.memory_space<vmem>>, vector<1x1x1x1x2x8xf32>
    %213 = vector.shape_cast %212 : vector<1x1x1x1x2x8xf32> to vector<2x8xf32>
    %c1_380 = arith.constant 1 : index
    %c2_381 = arith.constant 2 : index
    %c0_382 = arith.constant 0 : index
    %c0_383 = arith.constant 0 : index
    %214 = vector.load %arg4[%c1_380, %c2_381, %c0_382, %c0_383] : memref<3x8x8x128xf32, #tpu.memory_space<vmem>>, vector<1x1x8x128xf32>
    %215 = vector.shape_cast %214 : vector<1x1x8x128xf32> to vector<8x128xf32>
    %cst_384 = arith.constant dense<0.000000e+00> : vector<2x128xf32>
    %216 = tpu.matmul %213, %215, %cst_384 {dimension_numbers = #tpu.dot_dimension_numbers<[1], [0], [0], [1], [0, 0, 1, 1], [], []>} : vector<2x8xf32>, vector<8x128xf32>, vector<2x128xf32> -> vector<2x128xf32>
    %217 = arith.addf %211, %216 : vector<2x128xf32>
    %c1_385 = arith.constant 1 : index
    %c0_386 = arith.constant 0 : index
    %c1_387 = arith.constant 1 : index
    %c3_388 = arith.constant 3 : index
    %c0_389 = arith.constant 0 : index
    %c0_390 = arith.constant 0 : index
    %218 = vector.load %arg3[%c1_385, %c0_386, %c1_387, %c3_388, %c0_389, %c0_390] : memref<3x1x2x8x2x8xf32, #tpu.memory_space<vmem>>, vector<1x1x1x1x2x8xf32>
    %219 = vector.shape_cast %218 : vector<1x1x1x1x2x8xf32> to vector<2x8xf32>
    %c1_391 = arith.constant 1 : index
    %c3_392 = arith.constant 3 : index
    %c0_393 = arith.constant 0 : index
    %c0_394 = arith.constant 0 : index
    %220 = vector.load %arg4[%c1_391, %c3_392, %c0_393, %c0_394] : memref<3x8x8x128xf32, #tpu.memory_space<vmem>>, vector<1x1x8x128xf32>
    %221 = vector.shape_cast %220 : vector<1x1x8x128xf32> to vector<8x128xf32>
    %cst_395 = arith.constant dense<0.000000e+00> : vector<2x128xf32>
    %222 = tpu.matmul %219, %221, %cst_395 {dimension_numbers = #tpu.dot_dimension_numbers<[1], [0], [0], [1], [0, 0, 1, 1], [], []>} : vector<2x8xf32>, vector<8x128xf32>, vector<2x128xf32> -> vector<2x128xf32>
    %223 = arith.addf %217, %222 : vector<2x128xf32>
    %c1_396 = arith.constant 1 : index
    %c0_397 = arith.constant 0 : index
    %c1_398 = arith.constant 1 : index
    %c4_399 = arith.constant 4 : index
    %c0_400 = arith.constant 0 : index
    %c0_401 = arith.constant 0 : index
    %224 = vector.load %arg3[%c1_396, %c0_397, %c1_398, %c4_399, %c0_400, %c0_401] : memref<3x1x2x8x2x8xf32, #tpu.memory_space<vmem>>, vector<1x1x1x1x2x8xf32>
    %225 = vector.shape_cast %224 : vector<1x1x1x1x2x8xf32> to vector<2x8xf32>
    %c1_402 = arith.constant 1 : index
    %c4_403 = arith.constant 4 : index
    %c0_404 = arith.constant 0 : index
    %c0_405 = arith.constant 0 : index
    %226 = vector.load %arg4[%c1_402, %c4_403, %c0_404, %c0_405] : memref<3x8x8x128xf32, #tpu.memory_space<vmem>>, vector<1x1x8x128xf32>
    %227 = vector.shape_cast %226 : vector<1x1x8x128xf32> to vector<8x128xf32>
    %cst_406 = arith.constant dense<0.000000e+00> : vector<2x128xf32>
    %228 = tpu.matmul %225, %227, %cst_406 {dimension_numbers = #tpu.dot_dimension_numbers<[1], [0], [0], [1], [0, 0, 1, 1], [], []>} : vector<2x8xf32>, vector<8x128xf32>, vector<2x128xf32> -> vector<2x128xf32>
    %229 = arith.addf %223, %228 : vector<2x128xf32>
    %c1_407 = arith.constant 1 : index
    %c0_408 = arith.constant 0 : index
    %c1_409 = arith.constant 1 : index
    %c5_410 = arith.constant 5 : index
    %c0_411 = arith.constant 0 : index
    %c0_412 = arith.constant 0 : index
    %230 = vector.load %arg3[%c1_407, %c0_408, %c1_409, %c5_410, %c0_411, %c0_412] : memref<3x1x2x8x2x8xf32, #tpu.memory_space<vmem>>, vector<1x1x1x1x2x8xf32>
    %231 = vector.shape_cast %230 : vector<1x1x1x1x2x8xf32> to vector<2x8xf32>
    %c1_413 = arith.constant 1 : index
    %c5_414 = arith.constant 5 : index
    %c0_415 = arith.constant 0 : index
    %c0_416 = arith.constant 0 : index
    %232 = vector.load %arg4[%c1_413, %c5_414, %c0_415, %c0_416] : memref<3x8x8x128xf32, #tpu.memory_space<vmem>>, vector<1x1x8x128xf32>
    %233 = vector.shape_cast %232 : vector<1x1x8x128xf32> to vector<8x128xf32>
    %cst_417 = arith.constant dense<0.000000e+00> : vector<2x128xf32>
    %234 = tpu.matmul %231, %233, %cst_417 {dimension_numbers = #tpu.dot_dimension_numbers<[1], [0], [0], [1], [0, 0, 1, 1], [], []>} : vector<2x8xf32>, vector<8x128xf32>, vector<2x128xf32> -> vector<2x128xf32>
    %235 = arith.addf %229, %234 : vector<2x128xf32>
    %c1_418 = arith.constant 1 : index
    %c0_419 = arith.constant 0 : index
    %c1_420 = arith.constant 1 : index
    %c6_421 = arith.constant 6 : index
    %c0_422 = arith.constant 0 : index
    %c0_423 = arith.constant 0 : index
    %236 = vector.load %arg3[%c1_418, %c0_419, %c1_420, %c6_421, %c0_422, %c0_423] : memref<3x1x2x8x2x8xf32, #tpu.memory_space<vmem>>, vector<1x1x1x1x2x8xf32>
    %237 = vector.shape_cast %236 : vector<1x1x1x1x2x8xf32> to vector<2x8xf32>
    %c1_424 = arith.constant 1 : index
    %c6_425 = arith.constant 6 : index
    %c0_426 = arith.constant 0 : index
    %c0_427 = arith.constant 0 : index
    %238 = vector.load %arg4[%c1_424, %c6_425, %c0_426, %c0_427] : memref<3x8x8x128xf32, #tpu.memory_space<vmem>>, vector<1x1x8x128xf32>
    %239 = vector.shape_cast %238 : vector<1x1x8x128xf32> to vector<8x128xf32>
    %cst_428 = arith.constant dense<0.000000e+00> : vector<2x128xf32>
    %240 = tpu.matmul %237, %239, %cst_428 {dimension_numbers = #tpu.dot_dimension_numbers<[1], [0], [0], [1], [0, 0, 1, 1], [], []>} : vector<2x8xf32>, vector<8x128xf32>, vector<2x128xf32> -> vector<2x128xf32>
    %241 = arith.addf %235, %240 : vector<2x128xf32>
    %c1_429 = arith.constant 1 : index
    %c0_430 = arith.constant 0 : index
    %c1_431 = arith.constant 1 : index
    %c7_432 = arith.constant 7 : index
    %c0_433 = arith.constant 0 : index
    %c0_434 = arith.constant 0 : index
    %242 = vector.load %arg3[%c1_429, %c0_430, %c1_431, %c7_432, %c0_433, %c0_434] : memref<3x1x2x8x2x8xf32, #tpu.memory_space<vmem>>, vector<1x1x1x1x2x8xf32>
    %243 = vector.shape_cast %242 : vector<1x1x1x1x2x8xf32> to vector<2x8xf32>
    %c1_435 = arith.constant 1 : index
    %c7_436 = arith.constant 7 : index
    %c0_437 = arith.constant 0 : index
    %c0_438 = arith.constant 0 : index
    %244 = vector.load %arg4[%c1_435, %c7_436, %c0_437, %c0_438] : memref<3x8x8x128xf32, #tpu.memory_space<vmem>>, vector<1x1x8x128xf32>
    %245 = vector.shape_cast %244 : vector<1x1x8x128xf32> to vector<8x128xf32>
    %cst_439 = arith.constant dense<0.000000e+00> : vector<2x128xf32>
    %246 = tpu.matmul %243, %245, %cst_439 {dimension_numbers = #tpu.dot_dimension_numbers<[1], [0], [0], [1], [0, 0, 1, 1], [], []>} : vector<2x8xf32>, vector<8x128xf32>, vector<2x128xf32> -> vector<2x128xf32>
    %247 = arith.addf %241, %246 : vector<2x128xf32>
    %c2_440 = arith.constant 2 : index
    %c0_441 = arith.constant 0 : index
    %c1_442 = arith.constant 1 : index
    %c0_443 = arith.constant 0 : index
    %c0_444 = arith.constant 0 : index
    %c0_445 = arith.constant 0 : index
    %248 = vector.load %arg3[%c2_440, %c0_441, %c1_442, %c0_443, %c0_444, %c0_445] : memref<3x1x2x8x2x8xf32, #tpu.memory_space<vmem>>, vector<1x1x1x1x2x8xf32>
    %249 = vector.shape_cast %248 : vector<1x1x1x1x2x8xf32> to vector<2x8xf32>
    %c2_446 = arith.constant 2 : index
    %c0_447 = arith.constant 0 : index
    %c0_448 = arith.constant 0 : index
    %c0_449 = arith.constant 0 : index
    %250 = vector.load %arg4[%c2_446, %c0_447, %c0_448, %c0_449] : memref<3x8x8x128xf32, #tpu.memory_space<vmem>>, vector<1x1x8x128xf32>
    %251 = vector.shape_cast %250 : vector<1x1x8x128xf32> to vector<8x128xf32>
    %cst_450 = arith.constant dense<0.000000e+00> : vector<2x128xf32>
    %252 = tpu.matmul %249, %251, %cst_450 {dimension_numbers = #tpu.dot_dimension_numbers<[1], [0], [0], [1], [0, 0, 1, 1], [], []>} : vector<2x8xf32>, vector<8x128xf32>, vector<2x128xf32> -> vector<2x128xf32>
    %253 = arith.addf %247, %252 : vector<2x128xf32>
    %c2_451 = arith.constant 2 : index
    %c0_452 = arith.constant 0 : index
    %c1_453 = arith.constant 1 : index
    %c1_454 = arith.constant 1 : index
    %c0_455 = arith.constant 0 : index
    %c0_456 = arith.constant 0 : index
    %254 = vector.load %arg3[%c2_451, %c0_452, %c1_453, %c1_454, %c0_455, %c0_456] : memref<3x1x2x8x2x8xf32, #tpu.memory_space<vmem>>, vector<1x1x1x1x2x8xf32>
    %255 = vector.shape_cast %254 : vector<1x1x1x1x2x8xf32> to vector<2x8xf32>
    %c2_457 = arith.constant 2 : index
    %c1_458 = arith.constant 1 : index
    %c0_459 = arith.constant 0 : index
    %c0_460 = arith.constant 0 : index
    %256 = vector.load %arg4[%c2_457, %c1_458, %c0_459, %c0_460] : memref<3x8x8x128xf32, #tpu.memory_space<vmem>>, vector<1x1x8x128xf32>
    %257 = vector.shape_cast %256 : vector<1x1x8x128xf32> to vector<8x128xf32>
    %cst_461 = arith.constant dense<0.000000e+00> : vector<2x128xf32>
    %258 = tpu.matmul %255, %257, %cst_461 {dimension_numbers = #tpu.dot_dimension_numbers<[1], [0], [0], [1], [0, 0, 1, 1], [], []>} : vector<2x8xf32>, vector<8x128xf32>, vector<2x128xf32> -> vector<2x128xf32>
    %259 = arith.addf %253, %258 : vector<2x128xf32>
    %c2_462 = arith.constant 2 : index
    %c0_463 = arith.constant 0 : index
    %c1_464 = arith.constant 1 : index
    %c2_465 = arith.constant 2 : index
    %c0_466 = arith.constant 0 : index
    %c0_467 = arith.constant 0 : index
    %260 = vector.load %arg3[%c2_462, %c0_463, %c1_464, %c2_465, %c0_466, %c0_467] : memref<3x1x2x8x2x8xf32, #tpu.memory_space<vmem>>, vector<1x1x1x1x2x8xf32>
    %261 = vector.shape_cast %260 : vector<1x1x1x1x2x8xf32> to vector<2x8xf32>
    %c2_468 = arith.constant 2 : index
    %c2_469 = arith.constant 2 : index
    %c0_470 = arith.constant 0 : index
    %c0_471 = arith.constant 0 : index
    %262 = vector.load %arg4[%c2_468, %c2_469, %c0_470, %c0_471] : memref<3x8x8x128xf32, #tpu.memory_space<vmem>>, vector<1x1x8x128xf32>
    %263 = vector.shape_cast %262 : vector<1x1x8x128xf32> to vector<8x128xf32>
    %cst_472 = arith.constant dense<0.000000e+00> : vector<2x128xf32>
    %264 = tpu.matmul %261, %263, %cst_472 {dimension_numbers = #tpu.dot_dimension_numbers<[1], [0], [0], [1], [0, 0, 1, 1], [], []>} : vector<2x8xf32>, vector<8x128xf32>, vector<2x128xf32> -> vector<2x128xf32>
    %265 = arith.addf %259, %264 : vector<2x128xf32>
    %c2_473 = arith.constant 2 : index
    %c0_474 = arith.constant 0 : index
    %c1_475 = arith.constant 1 : index
    %c3_476 = arith.constant 3 : index
    %c0_477 = arith.constant 0 : index
    %c0_478 = arith.constant 0 : index
    %266 = vector.load %arg3[%c2_473, %c0_474, %c1_475, %c3_476, %c0_477, %c0_478] : memref<3x1x2x8x2x8xf32, #tpu.memory_space<vmem>>, vector<1x1x1x1x2x8xf32>
    %267 = vector.shape_cast %266 : vector<1x1x1x1x2x8xf32> to vector<2x8xf32>
    %c2_479 = arith.constant 2 : index
    %c3_480 = arith.constant 3 : index
    %c0_481 = arith.constant 0 : index
    %c0_482 = arith.constant 0 : index
    %268 = vector.load %arg4[%c2_479, %c3_480, %c0_481, %c0_482] : memref<3x8x8x128xf32, #tpu.memory_space<vmem>>, vector<1x1x8x128xf32>
    %269 = vector.shape_cast %268 : vector<1x1x8x128xf32> to vector<8x128xf32>
    %cst_483 = arith.constant dense<0.000000e+00> : vector<2x128xf32>
    %270 = tpu.matmul %267, %269, %cst_483 {dimension_numbers = #tpu.dot_dimension_numbers<[1], [0], [0], [1], [0, 0, 1, 1], [], []>} : vector<2x8xf32>, vector<8x128xf32>, vector<2x128xf32> -> vector<2x128xf32>
    %271 = arith.addf %265, %270 : vector<2x128xf32>
    %c2_484 = arith.constant 2 : index
    %c0_485 = arith.constant 0 : index
    %c1_486 = arith.constant 1 : index
    %c4_487 = arith.constant 4 : index
    %c0_488 = arith.constant 0 : index
    %c0_489 = arith.constant 0 : index
    %272 = vector.load %arg3[%c2_484, %c0_485, %c1_486, %c4_487, %c0_488, %c0_489] : memref<3x1x2x8x2x8xf32, #tpu.memory_space<vmem>>, vector<1x1x1x1x2x8xf32>
    %273 = vector.shape_cast %272 : vector<1x1x1x1x2x8xf32> to vector<2x8xf32>
    %c2_490 = arith.constant 2 : index
    %c4_491 = arith.constant 4 : index
    %c0_492 = arith.constant 0 : index
    %c0_493 = arith.constant 0 : index
    %274 = vector.load %arg4[%c2_490, %c4_491, %c0_492, %c0_493] : memref<3x8x8x128xf32, #tpu.memory_space<vmem>>, vector<1x1x8x128xf32>
    %275 = vector.shape_cast %274 : vector<1x1x8x128xf32> to vector<8x128xf32>
    %cst_494 = arith.constant dense<0.000000e+00> : vector<2x128xf32>
    %276 = tpu.matmul %273, %275, %cst_494 {dimension_numbers = #tpu.dot_dimension_numbers<[1], [0], [0], [1], [0, 0, 1, 1], [], []>} : vector<2x8xf32>, vector<8x128xf32>, vector<2x128xf32> -> vector<2x128xf32>
    %277 = arith.addf %271, %276 : vector<2x128xf32>
    %c2_495 = arith.constant 2 : index
    %c0_496 = arith.constant 0 : index
    %c1_497 = arith.constant 1 : index
    %c5_498 = arith.constant 5 : index
    %c0_499 = arith.constant 0 : index
    %c0_500 = arith.constant 0 : index
    %278 = vector.load %arg3[%c2_495, %c0_496, %c1_497, %c5_498, %c0_499, %c0_500] : memref<3x1x2x8x2x8xf32, #tpu.memory_space<vmem>>, vector<1x1x1x1x2x8xf32>
    %279 = vector.shape_cast %278 : vector<1x1x1x1x2x8xf32> to vector<2x8xf32>
    %c2_501 = arith.constant 2 : index
    %c5_502 = arith.constant 5 : index
    %c0_503 = arith.constant 0 : index
    %c0_504 = arith.constant 0 : index
    %280 = vector.load %arg4[%c2_501, %c5_502, %c0_503, %c0_504] : memref<3x8x8x128xf32, #tpu.memory_space<vmem>>, vector<1x1x8x128xf32>
    %281 = vector.shape_cast %280 : vector<1x1x8x128xf32> to vector<8x128xf32>
    %cst_505 = arith.constant dense<0.000000e+00> : vector<2x128xf32>
    %282 = tpu.matmul %279, %281, %cst_505 {dimension_numbers = #tpu.dot_dimension_numbers<[1], [0], [0], [1], [0, 0, 1, 1], [], []>} : vector<2x8xf32>, vector<8x128xf32>, vector<2x128xf32> -> vector<2x128xf32>
    %283 = arith.addf %277, %282 : vector<2x128xf32>
    %c2_506 = arith.constant 2 : index
    %c0_507 = arith.constant 0 : index
    %c1_508 = arith.constant 1 : index
    %c6_509 = arith.constant 6 : index
    %c0_510 = arith.constant 0 : index
    %c0_511 = arith.constant 0 : index
    %284 = vector.load %arg3[%c2_506, %c0_507, %c1_508, %c6_509, %c0_510, %c0_511] : memref<3x1x2x8x2x8xf32, #tpu.memory_space<vmem>>, vector<1x1x1x1x2x8xf32>
    %285 = vector.shape_cast %284 : vector<1x1x1x1x2x8xf32> to vector<2x8xf32>
    %c2_512 = arith.constant 2 : index
    %c6_513 = arith.constant 6 : index
    %c0_514 = arith.constant 0 : index
    %c0_515 = arith.constant 0 : index
    %286 = vector.load %arg4[%c2_512, %c6_513, %c0_514, %c0_515] : memref<3x8x8x128xf32, #tpu.memory_space<vmem>>, vector<1x1x8x128xf32>
    %287 = vector.shape_cast %286 : vector<1x1x8x128xf32> to vector<8x128xf32>
    %cst_516 = arith.constant dense<0.000000e+00> : vector<2x128xf32>
    %288 = tpu.matmul %285, %287, %cst_516 {dimension_numbers = #tpu.dot_dimension_numbers<[1], [0], [0], [1], [0, 0, 1, 1], [], []>} : vector<2x8xf32>, vector<8x128xf32>, vector<2x128xf32> -> vector<2x128xf32>
    %289 = arith.addf %283, %288 : vector<2x128xf32>
    %c2_517 = arith.constant 2 : index
    %c0_518 = arith.constant 0 : index
    %c1_519 = arith.constant 1 : index
    %c7_520 = arith.constant 7 : index
    %c0_521 = arith.constant 0 : index
    %c0_522 = arith.constant 0 : index
    %290 = vector.load %arg3[%c2_517, %c0_518, %c1_519, %c7_520, %c0_521, %c0_522] : memref<3x1x2x8x2x8xf32, #tpu.memory_space<vmem>>, vector<1x1x1x1x2x8xf32>
    %291 = vector.shape_cast %290 : vector<1x1x1x1x2x8xf32> to vector<2x8xf32>
    %c2_523 = arith.constant 2 : index
    %c7_524 = arith.constant 7 : index
    %c0_525 = arith.constant 0 : index
    %c0_526 = arith.constant 0 : index
    %292 = vector.load %arg4[%c2_523, %c7_524, %c0_525, %c0_526] : memref<3x8x8x128xf32, #tpu.memory_space<vmem>>, vector<1x1x8x128xf32>
    %293 = vector.shape_cast %292 : vector<1x1x8x128xf32> to vector<8x128xf32>
    %cst_527 = arith.constant dense<0.000000e+00> : vector<2x128xf32>
    %294 = tpu.matmul %291, %293, %cst_527 {dimension_numbers = #tpu.dot_dimension_numbers<[1], [0], [0], [1], [0, 0, 1, 1], [], []>} : vector<2x8xf32>, vector<8x128xf32>, vector<2x128xf32> -> vector<2x128xf32>
    %295 = arith.addf %289, %294 : vector<2x128xf32>
    %296 = vector.broadcast %0 : vector<1x128xf32> to vector<2x128xf32>
    %297 = arith.addf %295, %296 : vector<2x128xf32>
    %c0_528 = arith.constant 0 : index
    %c0_529 = arith.constant 0 : index
    %c1_530 = arith.constant 1 : index
    %c0_531 = arith.constant 0 : index
    %c0_532 = arith.constant 0 : index
    %298 = vector.load %arg6[%c0_528, %c0_529, %c1_530, %c0_531, %c0_532] : memref<1x1x2x2x128xf32, #tpu.memory_space<vmem>>, vector<1x1x1x2x128xf32>
    %299 = vector.shape_cast %298 : vector<1x1x1x2x128xf32> to vector<2x128xf32>
    %300 = vector.shape_cast %297 : vector<2x128xf32> to vector<1x1x1x2x128xf32>
    tpu.vector_store %arg6[%c0_528, %c0_529, %c1_530, %c0_531, %c0_532], %300 {strides = array<i32>} : memref<1x1x2x2x128xf32, #tpu.memory_space<vmem>>, vector<1x1x1x2x128xf32>,
    return
  }
  func.func @transform_0(%arg0: i32, %arg1: i32, %arg2: i32) -> (i32, i32, i32, i32, i32, i32) {
    %c0_i32 = arith.constant 0 : i32
    %c0_i32_0 = arith.constant 0 : i32
    %c0_i32_1 = arith.constant 0 : i32
    %c0_i32_2 = arith.constant 0 : i32
    return %arg0, %arg1, %arg2, %c0_i32, %c0_i32_0, %c0_i32_1 : i32, i32, i32, i32, i32, i32
  }
  func.func @transform_1(%arg0: i32, %arg1: i32, %arg2: i32) -> (i32, i32, i32, i32) {
    %c0_i32 = arith.constant 0 : i32
    %c0_i32_0 = arith.constant 0 : i32
    %c0_i32_1 = arith.constant 0 : i32
    %c0_i32_2 = arith.constant 0 : i32
    %c0_i32_3 = arith.constant 0 : i32
    return %c0_i32, %c0_i32_0, %c0_i32_1, %c0_i32_2 : i32, i32, i32, i32
  }
  func.func @transform_2(%arg0: i32, %arg1: i32, %arg2: i32) -> (i32, i32) {
    %c0_i32 = arith.constant 0 : i32
    %c0_i32_0 = arith.constant 0 : i32
    %c0_i32_1 = arith.constant 0 : i32
    return %c0_i32, %c0_i32_0 : i32, i32
  }
  func.func @transform_3(%arg0: i32, %arg1: i32, %arg2: i32) -> (i32, i32, i32, i32, i32) {
    %c0_i32 = arith.constant 0 : i32
    %c0_i32_0 = arith.constant 0 : i32
    %c0_i32_1 = arith.constant 0 : i32
    return %arg0, %arg1, %arg2, %c0_i32, %c0_i32_0 : i32, i32, i32, i32, i32
  }
}

</mosaic_0001>

<llo_original>
// kernel: tpu_custom_call.1
$region0: #{tpu_custom_call.1}
  #allocation0 [shape = 'u32[]', space=smem, size = 0x4, offset = 0x4, fixed_abs, tag = 'smem constant byte address 0x4 - core index']
  #allocation1 [shape = 'u32[144,128]{1,0:T(1,128)}', space=vmem, size = 0x12000, scoped, tag = 'internal scratch']
  #allocation8 [shape = 's32[]', space=sflag, size = 0x4, offset = 0, fixed_abs, tag = 'sflag constant byte address 0x0 - dummy sync flag']
  %s0 = inlined_call_operand.hbm [shape: f32[6,2,2,8,2,8], index: 0, kind: input, shape index: {}]
  %s1 = inlined_call_operand.hbm [shape: f32[3,8,8,128], index: 1, kind: input, shape index: {}]
  %s2 = inlined_call_operand.vmem [shape: f32[1,128], index: 2, kind: input, shape index: {}]
  %s3 = inlined_call_operand.hbm [shape: f32[2,2,2,2,128], index: 3, kind: output, shape index: {}]
  %s4 = sld [smem:[#allocation0]]
  $region53: #{tpu_custom_call.1} parent=0
    _
  %s6 = ssub.s32 1, %s4
  %s7 = scalar_select 0, %s6, %s4
  $region1: #{tpu_custom_call.1} parent=0
    #allocation2 [shape = 'u8[98304]{0}', space=vmem, size = 0x18000, scoped, tag = 'input window, operand 0']
    #allocation3 [shape = 's32[2]{0}', space=sflag, size = 0x8, scoped, tag = 'scoped memory for tpu_custom_call.1']
    #allocation4 [shape = 's32[2]{0}', space=sflag, size = 0x8, scoped, tag = 'scoped memory for tpu_custom_call.1']
    #allocation5 [shape = 'u8[98304]{0}', space=vmem, size = 0x18000, scoped, tag = 'input window, operand 1, single buffered']
    #allocation6 [shape = 's32[1]{0}', space=sflag, size = 0x4, scoped, tag = 'scoped memory for tpu_custom_call.1']
    #allocation7 [shape = 'u8[4096]{0}', space=vmem, size = 0x1000, scoped, tag = 'output window, operand 0']
    %8 = vsyncpa [#allocation3], 0
    %s9 = scalar_lea.sflag [#allocation3], 1
    %10 = vsyncpa %s9, 0
    %11 = vsyncpa [#allocation6], 0
    %12 = vsyncpa [#allocation4], 0
    %s13 = scalar_lea.sflag [#allocation4], 1
    %14 = vsyncpa %s13, 0
    loop: start=0, step=1, limit=6
    $region2: #{tpu_custom_call.1} parent=1 // loop_pre_header
      _
    $region3: #{tpu_custom_call.1} parent=1 // loop_header
      %s16 = sphi 0, %s20
      %p17 = scmp.ge.s32.totalorder %s16, 6
      %s23 = sphi 0, %s42
      %s24 = sphi 0, %s38
      %s25 = sphi 0, %s34
      %s26 = sphi 0, %s23
      %s27 = sphi 0, %s24
      %s28 = sphi 0, %s25
      %s29 = sphi 0, %s26
      %s30 = sphi 0, %s27
      %s31 = sphi 0, %s28
      %s49 = sphi 0, %s51
      %s52 = sphi 0, %s49
      %s53 = sphi 0, %s52
      %s69 = sphi 0, %s53
      %s73 = sphi 0, %s73
      %s75 = sphi 0, %s73
      %s76 = sphi 0, %s75
      %s90 = sphi 0, %s76
      %s94 = sphi 0, %s94
      %s96 = sphi 0, %s94
      %s97 = sphi 0, %s96
      %s111 = sphi 0, %s97
      %s121 = sphi 0, %s123
      %s124 = sphi 0, %s121
      %s125 = sphi 0, %s124
      %s141 = sphi 0, %s125
    $region4: #{tpu_custom_call.1} parent=1 // loop_header_branch
      %19 = sbr.rel (%p17) target = $region8
    $region5: #{tpu_custom_call.1} parent=1 // loop_body
      %s21 = ssub.s32 %s16, 1
      %s22 = ssub.s32 %s16, 2
      %s32 = sadd.s32 1, %s25
      %p33 = scmp.ge.s32.totalorder %s32, 1
      %s34 = scalar_select %p33, 0, %s32
      %s35 = sadd.s32 1, %s24
      %s36 = scalar_select %p33, %s35, %s24
      %p37 = scmp.ge.s32.totalorder %s36, 2
      %s38 = scalar_select %p37, 0, %s36
      %s39 = sadd.s32 1, %s23
      %s40 = scalar_select %p37, %s39, %s23
      %p41 = scmp.ge.s32.totalorder %s40, 2
      %s42 = scalar_select %p41, 0, %s40
      %s43 = ssub.s32 %s23, %s42
      %s44 = ssub.s32 %s24, %s38
      %s45 = sor.u32 %s43, %s44
      %s46 = ssub.s32 %s25, %s34
      %s47 = sor.u32 %s45, %s46
      %p48 = scmp.eq.s32.totalorder %s47, 0
      %s50 = sadd.s32 %s49, 1
      %s51 = scalar_select %p48, %s49, %s50
      %p54 = pneg %p48
      %p55 = scmp.eq.s32.totalorder %s16, 3
      %p56 = por %p54, %p55
      %p57 = scmp.ne.s32.totalorder %s49, %s52
      %p58 = scmp.eq.s32.totalorder %s16, 0
      %p59 = por %p57, %p58
      %p60 = scmp.ne.s32.totalorder %s49, %s52
      %p61 = scmp.eq.s32.totalorder %s21, 3
      %p62 = por %p60, %p61
      %p63 = scmp.ne.s32.totalorder %s52, %s53
      %p64 = scmp.eq.s32.totalorder %s21, 0
      %p65 = por %p63, %p64
      %p66 = scmp.ne.s32.totalorder %s52, %s53
      %p67 = scmp.eq.s32.totalorder %s22, 3
      %p68 = por %p66, %p67
      %p70 = scmp.ne.s32.totalorder %s53, %s69
      %p71 = scmp.eq.s32.totalorder %s22, 0
      %p72 = por %p70, %p71
      %s74 = sadd.s32 %s73, 1
      %p77 = scmp.eq.s32.totalorder %s16, 3
      %p78 = scmp.ne.s32.totalorder %s73, %s75
      %p79 = scmp.eq.s32.totalorder %s16, 0
      %p80 = por %p78, %p79
      %p81 = scmp.ne.s32.totalorder %s73, %s75
      %p82 = scmp.eq.s32.totalorder %s21, 3
      %p83 = por %p81, %p82
      %p84 = scmp.ne.s32.totalorder %s75, %s76
      %p85 = scmp.eq.s32.totalorder %s21, 0
      %p86 = por %p84, %p85
      %p87 = scmp.ne.s32.totalorder %s75, %s76
      %p88 = scmp.eq.s32.totalorder %s22, 3
      %p89 = por %p87, %p88
      %p91 = scmp.ne.s32.totalorder %s76, %s90
      %p92 = scmp.eq.s32.totalorder %s22, 0
      %p93 = por %p91, %p92
      %s95 = sadd.s32 %s94, 1
      %p98 = scmp.eq.s32.totalorder %s16, 3
      %p99 = scmp.ne.s32.totalorder %s94, %s96
      %p100 = scmp.eq.s32.totalorder %s16, 0
      %p101 = por %p99, %p100
      %p102 = scmp.ne.s32.totalorder %s94, %s96
      %p103 = scmp.eq.s32.totalorder %s21, 3
      %p104 = por %p102, %p103
      %p105 = scmp.ne.s32.totalorder %s96, %s97
      %p106 = scmp.eq.s32.totalorder %s21, 0
      %p107 = por %p105, %p106
      %p108 = scmp.ne.s32.totalorder %s96, %s97
      %p109 = scmp.eq.s32.totalorder %s22, 3
      %p110 = por %p108, %p109
      %p112 = scmp.ne.s32.totalorder %s97, %s111
      %p113 = scmp.eq.s32.totalorder %s22, 0
      %p114 = por %p112, %p113
      %s115 = ssub.s32 %s23, %s42
      %s116 = ssub.s32 %s24, %s38
      %s117 = sor.u32 %s115, %s116
      %s118 = ssub.s32 %s25, %s34
      %s119 = sor.u32 %s117, %s118
      %p120 = scmp.eq.s32.totalorder %s119, 0
      %s122 = sadd.s32 %s121, 1
      %s123 = scalar_select %p120, %s121, %s122
      %p126 = pneg %p120
      %p127 = scmp.eq.s32.totalorder %s16, 3
      %p128 = por %p126, %p127
      %p129 = scmp.ne.s32.totalorder %s121, %s124
      %p130 = scmp.eq.s32.totalorder %s16, 0
      %p131 = por %p129, %p130
      %p132 = scmp.ne.s32.totalorder %s121, %s124
      %p133 = scmp.eq.s32.totalorder %s21, 3
      %p134 = por %p132, %p133
      %p135 = scmp.ne.s32.totalorder %s124, %s125
      %p136 = scmp.eq.s32.totalorder %s21, 0
      %p137 = por %p135, %p136
      %p138 = scmp.ne.s32.totalorder %s124, %s125
      %p139 = scmp.eq.s32.totalorder %s22, 3
      %p140 = por %p138, %p139
      %p142 = scmp.ne.s32.totalorder %s125, %s141
      %p143 = scmp.eq.s32.totalorder %s22, 0
      %p144 = por %p142, %p143
      %p145 = scmp.le.s32.totalorder 1, %s16
      %p146 = scmp.lt.s32.totalorder %s16, 5
      %p147 = pnand %p145, %p146
      %p148 = pneg %p147
      // Predicated region
      $region9: #{tpu_custom_call.1} parent=5 // pred_check
        _
      $region10: #{tpu_custom_call.1} parent=5 // pred_check_branch
        %150 = sbr.rel (%p147) target = $region12
      $region11: #{tpu_custom_call.1} parent=5 // pred_region
        %s151 = ssub.s32 %s16, 1
        // Predicated region
        $region13: #{tpu_custom_call.1} parent=11 // pred_check
          %p152 = pneg %p86
        $region14: #{tpu_custom_call.1} parent=11 // pred_check_branch
          %154 = sbr.rel (%p152) target = $region16
        $region15: #{tpu_custom_call.1} parent=11 // pred_region
          %s156 = ssub.s32 3072, 3072
          %157 = vsyncadd [#allocation6], %s156
          %s158 = sshll.u32 [#allocation5], 4
          %s159 = int_to_ptr.vmem [resolvable:$true] %s158
          %164 = dma.hbm_to_vmem [thread:$0]  %s1, 3072, %s159, [#allocation6], 128, 128, 8
        $region16: #{tpu_custom_call.1} parent=11 // pred_fallthru
          _
        // Predicated region
        $region17: #{tpu_custom_call.1} parent=11 // pred_check
          %p165 = pneg %p107
        $region18: #{tpu_custom_call.1} parent=11 // pred_check_branch
          %167 = sbr.rel (%p165) target = $region20
        $region19: #{tpu_custom_call.1} parent=11 // pred_region
          _
        $region20: #{tpu_custom_call.1} parent=11 // pred_fallthru
          _
      $region12: #{tpu_custom_call.1} parent=5 // pred_fallthru
        _
      %p168 = scmp.lt.s32.totalorder %s16, 4
      // Predicated region
      $region21: #{tpu_custom_call.1} parent=5 // pred_check
        %p169 = pneg %p168
      $region22: #{tpu_custom_call.1} parent=5 // pred_check_branch
        %171 = sbr.rel (%p169) target = $region24
      $region23: #{tpu_custom_call.1} parent=5 // pred_region
        // Predicated region
        $region25: #{tpu_custom_call.1} parent=23 // pred_check
          %p172 = pneg %p59
        $region26: #{tpu_custom_call.1} parent=23 // pred_check_branch
          %174 = sbr.rel (%p172) target = $region28
        $region27: #{tpu_custom_call.1} parent=23 // pred_region
          #allocation9 [shape = 'u32[6]{0}', space=smem, size = 0x18, scoped, tag = 'DMA stride descriptor']
          %s175 = sand.u32 %s49, 1
          %s176 = scalar_lea.sflag [#allocation3], %s175
          %s177 = sand.u32 %s49, 1
          %s178 = smul.addr %s177, 96
          %s179 = scalar_lea.vmem [#allocation2], %s178
          %s180 = smul.u32 3, %s23
          %s181 = smul.u32 2, %s25
          %s183 = ssub.s32 1536, 1536
          %184 = vsyncadd %s176, %s183
          %s185 = smul.addr %s181, 8
          %s186 = smul.addr %s24, 16
          %s187 = sadd.s32 %s185, %s186
          %s188 = smul.addr %s180, 32
          %s189 = sadd.s32 %s187, %s188
          %s190 = smul.addr %s189, 32
          %s191 = scalar_lea.hbm %s0, %s190
          %s193 = sshll.u32 1, 14
          %s194 = sxor.u32 4294967295, %s193
          %s196 = sld [smem:[#allocation0]]
          %s197 = sadd.s32 2, %s196
          %s199 = sshll.u32 7, 26
          %s200 = sxor.u32 4294967295, %s199
          %s201 = sand.u32 0, %s200
          %s202 = sshll.u32 %s197, 26
          %s203 = sor.u32 %s201, %s202
          %s204 = sshll.u32 %s179, 4
          %s205 = int_to_ptr.vmem [resolvable:$true] %s204
          %211 = sst [smem:[#allocation9]] 1024
          %s212 = scalar_lea.smem [#allocation9], 1
          %213 = sst [smem:[%s212]] 512
          %s214 = scalar_lea.smem [#allocation9], 2
          %215 = sst [smem:[%s214]] 16
          %s216 = scalar_lea.smem [#allocation9], 3
          %217 = sst [smem:[%s216]] 32
          %s218 = scalar_lea.smem [#allocation9], 4
          %219 = sst [smem:[%s218]] 32
          %s220 = scalar_lea.smem [#allocation9], 5
          %221 = sst [smem:[%s220]] 2
          %223 = dma.general %s191, 1536, %s205, %s176, [#allocation8], [#allocation9], %s203, 0
        $region28: #{tpu_custom_call.1} parent=23 // pred_fallthru
          _
      $region24: #{tpu_custom_call.1} parent=5 // pred_fallthru
        _
      %p224 = scmp.le.s32.totalorder 1, %s16
      %p225 = scmp.lt.s32.totalorder %s16, 5
      %p226 = pnand %p224, %p225
      %p227 = pneg %p226
      // Predicated region
      $region29: #{tpu_custom_call.1} parent=5 // pred_check
        _
      $region30: #{tpu_custom_call.1} parent=5 // pred_check_branch
        %229 = sbr.rel (%p226) target = $region32
      $region31: #{tpu_custom_call.1} parent=5 // pred_region
        %s230 = ssub.s32 %s16, 1
        %s231 = sand.u32 %s52, 1
        %s232 = scalar_lea.sflag [#allocation3], %s231
        %s233 = sand.u32 %s52, 1
        %s234 = smul.addr %s233, 96
        %s235 = scalar_lea.vmem [#allocation2], %s234
        // Predicated region
        $region33: #{tpu_custom_call.1} parent=31 // pred_check
          %p236 = pneg %p65
        $region34: #{tpu_custom_call.1} parent=31 // pred_check_branch
          %238 = sbr.rel (%p236) target = $region36
        $region35: #{tpu_custom_call.1} parent=31 // pred_region
          %239 = dma.done %s232, 1536
        $region36: #{tpu_custom_call.1} parent=31 // pred_fallthru
          _
        // Predicated region
        $region37: #{tpu_custom_call.1} parent=31 // pred_check
          %p240 = pneg %p86
        $region38: #{tpu_custom_call.1} parent=31 // pred_check_branch
          %242 = sbr.rel (%p240) target = $region40
        $region39: #{tpu_custom_call.1} parent=31 // pred_region
          %243 = dma.done [#allocation6], 3072
        $region40: #{tpu_custom_call.1} parent=31 // pred_fallthru
          _
        %s244 = sand.u32 %s52, 1
        %s245 = scalar_lea.sflag [#allocation3], %s244
        %s246 = sand.u32 %s52, 1
        %s247 = smul.addr %s246, 96
        %s248 = scalar_lea.vmem [#allocation2], %s247
        %p249 = pneg %p65
        %p250 = pneg %p62
        %p251 = pneg %p86
        %p252 = pneg %p83
        %p253 = pneg %p107
        %p254 = pneg %p104
        %p255 = pneg %p137
        %p256 = pneg %p134
        %s257 = sand.u32 %s124, 1
        %s258 = scalar_lea.sflag [#allocation4], %s257
        %s259 = sand.u32 %s124, 1
        %s260 = smul.addr %s259, 4
        %s261 = scalar_lea.vmem [#allocation7], %s260
        %s262 = smul.u32 3, %s26
        %s263 = smul.u32 2, %s28
        %s264 = smul.u32 2, %s28
        %v265 = vld [vmem:[%s2] sm:$0x1]
        %v266 = vld [vmem:[%s235] sm:$0x3]
        %v267 = vld [vmem:[#allocation5] sm:$0xff]
        %s268 = scalar_lea.vmem %s235, 2 [#allocation2]
        %v269 = vld [vmem:[%s268] sm:$0x3]
        %s270 = scalar_lea.vmem [#allocation5], 8
        %v271 = vld [vmem:[%s270] sm:$0xff]
        %vm272 = vcmask 64512
        %v274 = vsel %vm272, %v269, 0
        %276 = vmatprep.subr.mxu0 0.0
        %277 = vmatpush1.msra.mxu0 %v271
        %278 = vmatprep.subr.mxu0 0.0
        %279 = vmatpush1.msra.mxu0 0.0
        %280 = vmatprep.subr.mxu0 0.0
        %281 = vmatpush1.msra.mxu0 0.0
        %282 = vmatprep.subr.mxu0 0.0
        %283 = vmatpush1.msra.mxu0 0.0
        %284 = vmatprep.subr.mxu0 0.0
        %285 = vmatpush1.msra.mxu0 0.0
        %286 = vmatprep.subr.mxu0 0.0
        %287 = vmatpush1.msra.mxu0 0.0
        %288 = vmatprep.subr.mxu0 0.0
        %289 = vmatpush1.msra.mxu0 0.0
        %290 = vmatprep.subr.mxu0 0.0
        %291 = vmatpush1.msra.mxu0 0.0
        %292 = vmatprep.subr.mxu0 0.0
        %293 = vmatpush1.msra.mxu0 0.0
        %294 = vmatprep.subr.mxu0 0.0
        %295 = vmatpush1.msra.mxu0 0.0
        %296 = vmatprep.subr.mxu0 0.0
        %297 = vmatpush1.msra.mxu0 0.0
        %298 = vmatprep.subr.mxu0 0.0
        %299 = vmatpush1.msra.mxu0 0.0
        %300 = vmatprep.subr.mxu0 0.0
        %301 = vmatpush1.msra.mxu0 0.0
        %302 = vmatprep.subr.mxu0 0.0
        %303 = vmatpush1.msra.mxu0 0.0
        %304 = vmatprep.subr.mxu0 0.0
        %305 = vmatpush1.msra.mxu0 0.0
        %306 = vmatprep.subr.mxu0 0.0
        %307 = vmatpush1.msra.mxu0 0.0
        %308 = vmatprep.subr.mxu0 0.0
        %309 = vmatpush1.msra.mxu0 0.0
        %310 = vmatprep.subr.mxu0 0.0
        %311 = vmatpush1.msra.mxu0 0.0
        %312 = vmatprep.subr.mxu0 0.0
        %313 = vmatpush1.msra.mxu0 0.0
        %314 = vmatprep.subr.mxu0 0.0
        %315 = vmatpush1.msra.mxu0 0.0
        %316 = vmatprep.subr.mxu0 0.0
        %317 = vmatpush1.msra.mxu0 0.0
        %318 = vmatprep.subr.mxu0 0.0
        %319 = vmatpush1.msra.mxu0 0.0
        %320 = vmatprep.subr.mxu0 0.0
        %321 = vmatpush1.msra.mxu0 0.0
        %322 = vmatprep.subr.mxu0 0.0
        %323 = vmatpush1.msra.mxu0 0.0
        %324 = vmatprep.subr.mxu0 0.0
        %325 = vmatpush1.msra.mxu0 0.0
        %326 = vmatprep.subr.mxu0 0.0
        %327 = vmatpush1.msra.mxu0 0.0
        %328 = vmatprep.subr.mxu0 0.0
        %329 = vmatpush1.msra.mxu0 0.0
        %330 = vmatprep.subr.mxu0 0.0
        %331 = vmatpush1.msra.mxu0 0.0
        %332 = vmatprep.subr.mxu0 0.0
        %333 = vmatpush1.msra.mxu0 0.0
        %334 = vmatprep.subr.mxu0 0.0
        %335 = vmatpush1.msra.mxu0 0.0
        %336 = vmatprep.subr.mxu0 0.0
        %337 = vmatpush1.msra.mxu0 0.0
        %338 = vmatprep.subr.mxu0 0.0
        %339 = vmatpush1.msra.mxu0 0.0
        %340 = vmatprep.mubr.f32.mxu0 0.0
        %341 = vmatmul.mubr.f32.gmra.mrb[0].mxu0 %v274
        %v342 = vpop.f32.mrb[0].mxu0
        %v343 = vadd.f32 0.0, %v342
        %v344 = vpop.f32.mrb[0].mxu0
        %345 = vdwg.mxu0
        %v347 = vsel %vm272, %v266, 0
        %349 = vmatprep.subr.mxu0 0.0
        %350 = vmatpush1.msra.mxu0 %v267
        %351 = vmatprep.subr.mxu0 0.0
        %352 = vmatpush1.msra.mxu0 0.0
        %353 = vmatprep.subr.mxu0 0.0
        %354 = vmatpush1.msra.mxu0 0.0
        %355 = vmatprep.subr.mxu0 0.0
        %356 = vmatpush1.msra.mxu0 0.0
        %357 = vmatprep.subr.mxu0 0.0
        %358 = vmatpush1.msra.mxu0 0.0
        %359 = vmatprep.subr.mxu0 0.0
        %360 = vmatpush1.msra.mxu0 0.0
        %361 = vmatprep.subr.mxu0 0.0
        %362 = vmatpush1.msra.mxu0 0.0
        %363 = vmatprep.subr.mxu0 0.0
        %364 = vmatpush1.msra.mxu0 0.0
        %365 = vmatprep.subr.mxu0 0.0
        %366 = vmatpush1.msra.mxu0 0.0
        %367 = vmatprep.subr.mxu0 0.0
        %368 = vmatpush1.msra.mxu0 0.0
        %369 = vmatprep.subr.mxu0 0.0
        %370 = vmatpush1.msra.mxu0 0.0
        %371 = vmatprep.subr.mxu0 0.0
        %372 = vmatpush1.msra.mxu0 0.0
        %373 = vmatprep.subr.mxu0 0.0
        %374 = vmatpush1.msra.mxu0 0.0
        %375 = vmatprep.subr.mxu0 0.0
        %376 = vmatpush1.msra.mxu0 0.0
        %377 = vmatprep.subr.mxu0 0.0
        %378 = vmatpush1.msra.mxu0 0.0
        %379 = vmatprep.subr.mxu0 0.0
        %380 = vmatpush1.msra.mxu0 0.0
        %381 = vmatprep.subr.mxu0 0.0
        %382 = vmatpush1.msra.mxu0 0.0
        %383 = vmatprep.subr.mxu0 0.0
        %384 = vmatpush1.msra.mxu0 0.0
        %385 = vmatprep.subr.mxu0 0.0
        %386 = vmatpush1.msra.mxu0 0.0
        %387 = vmatprep.subr.mxu0 0.0
        %388 = vmatpush1.msra.mxu0 0.0
        %389 = vmatprep.subr.mxu0 0.0
        %390 = vmatpush1.msra.mxu0 0.0
        %391 = vmatprep.subr.mxu0 0.0
        %392 = vmatpush1.msra.mxu0 0.0
        %393 = vmatprep.subr.mxu0 0.0
        %394 = vmatpush1.msra.mxu0 0.0
        %395 = vmatprep.subr.mxu0 0.0
        %396 = vmatpush1.msra.mxu0 0.0
        %397 = vmatprep.subr.mxu0 0.0
        %398 = vmatpush1.msra.mxu0 0.0
        %399 = vmatprep.subr.mxu0 0.0
        %400 = vmatpush1.msra.mxu0 0.0
        %401 = vmatprep.subr.mxu0 0.0
        %402 = vmatpush1.msra.mxu0 0.0
        %403 = vmatprep.subr.mxu0 0.0
        %404 = vmatpush1.msra.mxu0 0.0
        %405 = vmatprep.subr.mxu0 0.0
        %406 = vmatpush1.msra.mxu0 0.0
        %407 = vmatprep.subr.mxu0 0.0
        %408 = vmatpush1.msra.mxu0 0.0
        %409 = vmatprep.subr.mxu0 0.0
        %410 = vmatpush1.msra.mxu0 0.0
        %411 = vmatprep.subr.mxu0 0.0
        %412 = vmatpush1.msra.mxu0 0.0
        %413 = vmatprep.mubr.f32.mxu0 0.0
        %414 = vmatmul.mubr.f32.gmra.mrb[0].mxu0 %v347
        %v415 = vpop.f32.mrb[0].mxu0
        %v416 = vadd.f32 %v343, %v415
        %v417 = vpop.f32.mrb[0].mxu0
        %418 = vdwg.mxu0
        %s419 = scalar_lea.vmem %s235, 4 [#allocation2]
        %v420 = vld [vmem:[%s419] sm:$0x3]
        %s421 = scalar_lea.vmem [#allocation5], 16
        %v422 = vld [vmem:[%s421] sm:$0xff]
        %v424 = vsel %vm272, %v420, 0
        %426 = vmatprep.subr.mxu0 0.0
        %427 = vmatpush1.msra.mxu0 %v422
        %428 = vmatprep.subr.mxu0 0.0
        %429 = vmatpush1.msra.mxu0 0.0
        %430 = vmatprep.subr.mxu0 0.0
        %431 = vmatpush1.msra.mxu0 0.0
        %432 = vmatprep.subr.mxu0 0.0
        %433 = vmatpush1.msra.mxu0 0.0
        %434 = vmatprep.subr.mxu0 0.0
        %435 = vmatpush1.msra.mxu0 0.0
        %436 = vmatprep.subr.mxu0 0.0
        %437 = vmatpush1.msra.mxu0 0.0
        %438 = vmatprep.subr.mxu0 0.0
        %439 = vmatpush1.msra.mxu0 0.0
        %440 = vmatprep.subr.mxu0 0.0
        %441 = vmatpush1.msra.mxu0 0.0
        %442 = vmatprep.subr.mxu0 0.0
        %443 = vmatpush1.msra.mxu0 0.0
        %444 = vmatprep.subr.mxu0 0.0
        %445 = vmatpush1.msra.mxu0 0.0
        %446 = vmatprep.subr.mxu0 0.0
        %447 = vmatpush1.msra.mxu0 0.0
        %448 = vmatprep.subr.mxu0 0.0
        %449 = vmatpush1.msra.mxu0 0.0
        %450 = vmatprep.subr.mxu0 0.0
        %451 = vmatpush1.msra.mxu0 0.0
        %452 = vmatprep.subr.mxu0 0.0
        %453 = vmatpush1.msra.mxu0 0.0
        %454 = vmatprep.subr.mxu0 0.0
        %455 = vmatpush1.msra.mxu0 0.0
        %456 = vmatprep.subr.mxu0 0.0
        %457 = vmatpush1.msra.mxu0 0.0
        %458 = vmatprep.subr.mxu0 0.0
        %459 = vmatpush1.msra.mxu0 0.0
        %460 = vmatprep.subr.mxu0 0.0
        %461 = vmatpush1.msra.mxu0 0.0
        %462 = vmatprep.subr.mxu0 0.0
        %463 = vmatpush1.msra.mxu0 0.0
        %464 = vmatprep.subr.mxu0 0.0
        %465 = vmatpush1.msra.mxu0 0.0
        %466 = vmatprep.subr.mxu0 0.0
        %467 = vmatpush1.msra.mxu0 0.0
        %468 = vmatprep.subr.mxu0 0.0
        %469 = vmatpush1.msra.mxu0 0.0
        %470 = vmatprep.subr.mxu0 0.0
        %471 = vmatpush1.msra.mxu0 0.0
        %472 = vmatprep.subr.mxu0 0.0
        %473 = vmatpush1.msra.mxu0 0.0
        %474 = vmatprep.subr.mxu0 0.0
        %475 = vmatpush1.msra.mxu0 0.0
        %476 = vmatprep.subr.mxu0 0.0
        %477 = vmatpush1.msra.mxu0 0.0
        %478 = vmatprep.subr.mxu0 0.0
        %479 = vmatpush1.msra.mxu0 0.0
        %480 = vmatprep.subr.mxu0 0.0
        %481 = vmatpush1.msra.mxu0 0.0
        %482 = vmatprep.subr.mxu0 0.0
        %483 = vmatpush1.msra.mxu0 0.0
        %484 = vmatprep.subr.mxu0 0.0
        %485 = vmatpush1.msra.mxu0 0.0
        %486 = vmatprep.subr.mxu0 0.0
        %487 = vmatpush1.msra.mxu0 0.0
        %488 = vmatprep.subr.mxu0 0.0
        %489 = vmatpush1.msra.mxu0 0.0
        %490 = vmatprep.mubr.f32.mxu0 0.0
        %491 = vmatmul.mubr.f32.gmra.mrb[0].mxu0 %v424
        %v492 = vpop.f32.mrb[0].mxu0
        %v493 = vadd.f32 0.0, %v492
        %v494 = vpop.f32.mrb[0].mxu0
        %495 = vdwg.mxu0
        %v496 = vadd.f32 %v416, %v493
        %s497 = scalar_lea.vmem %s235, 6 [#allocation2]
        %v498 = vld [vmem:[%s497] sm:$0x3]
        %s499 = scalar_lea.vmem [#allocation5], 24
        %v500 = vld [vmem:[%s499] sm:$0xff]
        %v502 = vsel %vm272, %v498, 0
        %504 = vmatprep.subr.mxu0 0.0
        %505 = vmatpush1.msra.mxu0 %v500
        %506 = vmatprep.subr.mxu0 0.0
        %507 = vmatpush1.msra.mxu0 0.0
        %508 = vmatprep.subr.mxu0 0.0
        %509 = vmatpush1.msra.mxu0 0.0
        %510 = vmatprep.subr.mxu0 0.0
        %511 = vmatpush1.msra.mxu0 0.0
        %512 = vmatprep.subr.mxu0 0.0
        %513 = vmatpush1.msra.mxu0 0.0
        %514 = vmatprep.subr.mxu0 0.0
        %515 = vmatpush1.msra.mxu0 0.0
        %516 = vmatprep.subr.mxu0 0.0
        %517 = vmatpush1.msra.mxu0 0.0
        %518 = vmatprep.subr.mxu0 0.0
        %519 = vmatpush1.msra.mxu0 0.0
        %520 = vmatprep.subr.mxu0 0.0
        %521 = vmatpush1.msra.mxu0 0.0
        %522 = vmatprep.subr.mxu0 0.0
        %523 = vmatpush1.msra.mxu0 0.0
        %524 = vmatprep.subr.mxu0 0.0
        %525 = vmatpush1.msra.mxu0 0.0
        %526 = vmatprep.subr.mxu0 0.0
        %527 = vmatpush1.msra.mxu0 0.0
        %528 = vmatprep.subr.mxu0 0.0
        %529 = vmatpush1.msra.mxu0 0.0
        %530 = vmatprep.subr.mxu0 0.0
        %531 = vmatpush1.msra.mxu0 0.0
        %532 = vmatprep.subr.mxu0 0.0
        %533 = vmatpush1.msra.mxu0 0.0
        %534 = vmatprep.subr.mxu0 0.0
        %535 = vmatpush1.msra.mxu0 0.0
        %536 = vmatprep.subr.mxu0 0.0
        %537 = vmatpush1.msra.mxu0 0.0
        %538 = vmatprep.subr.mxu0 0.0
        %539 = vmatpush1.msra.mxu0 0.0
        %540 = vmatprep.subr.mxu0 0.0
        %541 = vmatpush1.msra.mxu0 0.0
        %542 = vmatprep.subr.mxu0 0.0
        %543 = vmatpush1.msra.mxu0 0.0
        %544 = vmatprep.subr.mxu0 0.0
        %545 = vmatpush1.msra.mxu0 0.0
        %546 = vmatprep.subr.mxu0 0.0
        %547 = vmatpush1.msra.mxu0 0.0
        %548 = vmatprep.subr.mxu0 0.0
        %549 = vmatpush1.msra.mxu0 0.0
        %550 = vmatprep.subr.mxu0 0.0
        %551 = vmatpush1.msra.mxu0 0.0
        %552 = vmatprep.subr.mxu0 0.0
        %553 = vmatpush1.msra.mxu0 0.0
        %554 = vmatprep.subr.mxu0 0.0
        %555 = vmatpush1.msra.mxu0 0.0
        %556 = vmatprep.subr.mxu0 0.0
        %557 = vmatpush1.msra.mxu0 0.0
        %558 = vmatprep.subr.mxu0 0.0
        %559 = vmatpush1.msra.mxu0 0.0
        %560 = vmatprep.subr.mxu0 0.0
        %561 = vmatpush1.msra.mxu0 0.0
        %562 = vmatprep.subr.mxu0 0.0
        %563 = vmatpush1.msra.mxu0 0.0
        %564 = vmatprep.subr.mxu0 0.0
        %565 = vmatpush1.msra.mxu0 0.0
        %566 = vmatprep.subr.mxu0 0.0
        %567 = vmatpush1.msra.mxu0 0.0
        %568 = vmatprep.mubr.f32.mxu0 0.0
        %569 = vmatmul.mubr.f32.gmra.mrb[0].mxu0 %v502
        %v570 = vpop.f32.mrb[0].mxu0
        %v571 = vadd.f32 0.0, %v570
        %v572 = vpop.f32.mrb[0].mxu0
        %573 = vdwg.mxu0
        %v574 = vadd.f32 %v496, %v571
        %s575 = scalar_lea.vmem %s235, 8 [#allocation2]
        %v576 = vld [vmem:[%s575] sm:$0x3]
        %s577 = scalar_lea.vmem [#allocation5], 32
        %v578 = vld [vmem:[%s577] sm:$0xff]
        %v580 = vsel %vm272, %v576, 0
        %582 = vmatprep.subr.mxu0 0.0
        %583 = vmatpush1.msra.mxu0 %v578
        %584 = vmatprep.subr.mxu0 0.0
        %585 = vmatpush1.msra.mxu0 0.0
        %586 = vmatprep.subr.mxu0 0.0
        %587 = vmatpush1.msra.mxu0 0.0
        %588 = vmatprep.subr.mxu0 0.0
        %589 = vmatpush1.msra.mxu0 0.0
        %590 = vmatprep.subr.mxu0 0.0
        %591 = vmatpush1.msra.mxu0 0.0
        %592 = vmatprep.subr.mxu0 0.0
        %593 = vmatpush1.msra.mxu0 0.0
        %594 = vmatprep.subr.mxu0 0.0
        %595 = vmatpush1.msra.mxu0 0.0
        %596 = vmatprep.subr.mxu0 0.0
        %597 = vmatpush1.msra.mxu0 0.0
        %598 = vmatprep.subr.mxu0 0.0
        %599 = vmatpush1.msra.mxu0 0.0
        %600 = vmatprep.subr.mxu0 0.0
        %601 = vmatpush1.msra.mxu0 0.0
        %602 = vmatprep.subr.mxu0 0.0
        %603 = vmatpush1.msra.mxu0 0.0
        %604 = vmatprep.subr.mxu0 0.0
        %605 = vmatpush1.msra.mxu0 0.0
        %606 = vmatprep.subr.mxu0 0.0
        %607 = vmatpush1.msra.mxu0 0.0
        %608 = vmatprep.subr.mxu0 0.0
        %609 = vmatpush1.msra.mxu0 0.0
        %610 = vmatprep.subr.mxu0 0.0
        %611 = vmatpush1.msra.mxu0 0.0
        %612 = vmatprep.subr.mxu0 0.0
        %613 = vmatpush1.msra.mxu0 0.0
        %614 = vmatprep.subr.mxu0 0.0
        %615 = vmatpush1.msra.mxu0 0.0
        %616 = vmatprep.subr.mxu0 0.0
        %617 = vmatpush1.msra.mxu0 0.0
        %618 = vmatprep.subr.mxu0 0.0
        %619 = vmatpush1.msra.mxu0 0.0
        %620 = vmatprep.subr.mxu0 0.0
        %621 = vmatpush1.msra.mxu0 0.0
        %622 = vmatprep.subr.mxu0 0.0
        %623 = vmatpush1.msra.mxu0 0.0
        %624 = vmatprep.subr.mxu0 0.0
        %625 = vmatpush1.msra.mxu0 0.0
        %626 = vmatprep.subr.mxu0 0.0
        %627 = vmatpush1.msra.mxu0 0.0
        %628 = vmatprep.subr.mxu0 0.0
        %629 = vmatpush1.msra.mxu0 0.0
        %630 = vmatprep.subr.mxu0 0.0
        %631 = vmatpush1.msra.mxu0 0.0
        %632 = vmatprep.subr.mxu0 0.0
        %633 = vmatpush1.msra.mxu0 0.0
        %634 = vmatprep.subr.mxu0 0.0
        %635 = vmatpush1.msra.mxu0 0.0
        %636 = vmatprep.subr.mxu0 0.0
        %637 = vmatpush1.msra.mxu0 0.0
        %638 = vmatprep.subr.mxu0 0.0
        %639 = vmatpush1.msra.mxu0 0.0
        %640 = vmatprep.subr.mxu0 0.0
        %641 = vmatpush1.msra.mxu0 0.0
        %642 = vmatprep.subr.mxu0 0.0
        %643 = vmatpush1.msra.mxu0 0.0
        %644 = vmatprep.subr.mxu0 0.0
        %645 = vmatpush1.msra.mxu0 0.0
        %646 = vmatprep.mubr.f32.mxu0 0.0
        %647 = vmatmul.mubr.f32.gmra.mrb[0].mxu0 %v580
        %v648 = vpop.f32.mrb[0].mxu0
        %v649 = vadd.f32 0.0, %v648
        %v650 = vpop.f32.mrb[0].mxu0
        %651 = vdwg.mxu0
        %v652 = vadd.f32 %v574, %v649
        %s653 = scalar_lea.vmem %s235, 10 [#allocation2]
        %v654 = vld [vmem:[%s653] sm:$0x3]
        %s655 = scalar_lea.vmem [#allocation5], 40
        %v656 = vld [vmem:[%s655] sm:$0xff]
        %v658 = vsel %vm272, %v654, 0
        %660 = vmatprep.subr.mxu0 0.0
        %661 = vmatpush1.msra.mxu0 %v656
        %662 = vmatprep.subr.mxu0 0.0
        %663 = vmatpush1.msra.mxu0 0.0
        %664 = vmatprep.subr.mxu0 0.0
        %665 = vmatpush1.msra.mxu0 0.0
        %666 = vmatprep.subr.mxu0 0.0
        %667 = vmatpush1.msra.mxu0 0.0
        %668 = vmatprep.subr.mxu0 0.0
        %669 = vmatpush1.msra.mxu0 0.0
        %670 = vmatprep.subr.mxu0 0.0
        %671 = vmatpush1.msra.mxu0 0.0
        %672 = vmatprep.subr.mxu0 0.0
        %673 = vmatpush1.msra.mxu0 0.0
        %674 = vmatprep.subr.mxu0 0.0
        %675 = vmatpush1.msra.mxu0 0.0
        %676 = vmatprep.subr.mxu0 0.0
        %677 = vmatpush1.msra.mxu0 0.0
        %678 = vmatprep.subr.mxu0 0.0
        %679 = vmatpush1.msra.mxu0 0.0
        %680 = vmatprep.subr.mxu0 0.0
        %681 = vmatpush1.msra.mxu0 0.0
        %682 = vmatprep.subr.mxu0 0.0
        %683 = vmatpush1.msra.mxu0 0.0
        %684 = vmatprep.subr.mxu0 0.0
        %685 = vmatpush1.msra.mxu0 0.0
        %686 = vmatprep.subr.mxu0 0.0
        %687 = vmatpush1.msra.mxu0 0.0
        %688 = vmatprep.subr.mxu0 0.0
        %689 = vmatpush1.msra.mxu0 0.0
        %690 = vmatprep.subr.mxu0 0.0
        %691 = vmatpush1.msra.mxu0 0.0
        %692 = vmatprep.subr.mxu0 0.0
        %693 = vmatpush1.msra.mxu0 0.0
        %694 = vmatprep.subr.mxu0 0.0
        %695 = vmatpush1.msra.mxu0 0.0
        %696 = vmatprep.subr.mxu0 0.0
        %697 = vmatpush1.msra.mxu0 0.0
        %698 = vmatprep.subr.mxu0 0.0
        %699 = vmatpush1.msra.mxu0 0.0
        %700 = vmatprep.subr.mxu0 0.0
        %701 = vmatpush1.msra.mxu0 0.0
        %702 = vmatprep.subr.mxu0 0.0
        %703 = vmatpush1.msra.mxu0 0.0
        %704 = vmatprep.subr.mxu0 0.0
        %705 = vmatpush1.msra.mxu0 0.0
        %706 = vmatprep.subr.mxu0 0.0
        %707 = vmatpush1.msra.mxu0 0.0
        %708 = vmatprep.subr.mxu0 0.0
        %709 = vmatpush1.msra.mxu0 0.0
        %710 = vmatprep.subr.mxu0 0.0
        %711 = vmatpush1.msra.mxu0 0.0
        %712 = vmatprep.subr.mxu0 0.0
        %713 = vmatpush1.msra.mxu0 0.0
        %714 = vmatprep.subr.mxu0 0.0
        %715 = vmatpush1.msra.mxu0 0.0
        %716 = vmatprep.subr.mxu0 0.0
        %717 = vmatpush1.msra.mxu0 0.0
        %718 = vmatprep.subr.mxu0 0.0
        %719 = vmatpush1.msra.mxu0 0.0
        %720 = vmatprep.subr.mxu0 0.0
        %721 = vmatpush1.msra.mxu0 0.0
        %722 = vmatprep.subr.mxu0 0.0
        %723 = vmatpush1.msra.mxu0 0.0
        %724 = vmatprep.mubr.f32.mxu0 0.0
        %725 = vmatmul.mubr.f32.gmra.mrb[0].mxu0 %v658
        %v726 = vpop.f32.mrb[0].mxu0
        %v727 = vadd.f32 0.0, %v726
        %v728 = vpop.f32.mrb[0].mxu0
        %729 = vdwg.mxu0
        %v730 = vadd.f32 %v652, %v727
        %s731 = scalar_lea.vmem %s235, 12 [#allocation2]
        %v732 = vld [vmem:[%s731] sm:$0x3]
        %s733 = scalar_lea.vmem [#allocation5], 48
        %v734 = vld [vmem:[%s733] sm:$0xff]
        %v736 = vsel %vm272, %v732, 0
        %738 = vmatprep.subr.mxu0 0.0
        %739 = vmatpush1.msra.mxu0 %v734
        %740 = vmatprep.subr.mxu0 0.0
        %741 = vmatpush1.msra.mxu0 0.0
        %742 = vmatprep.subr.mxu0 0.0
        %743 = vmatpush1.msra.mxu0 0.0
        %744 = vmatprep.subr.mxu0 0.0
        %745 = vmatpush1.msra.mxu0 0.0
        %746 = vmatprep.subr.mxu0 0.0
        %747 = vmatpush1.msra.mxu0 0.0
        %748 = vmatprep.subr.mxu0 0.0
        %749 = vmatpush1.msra.mxu0 0.0
        %750 = vmatprep.subr.mxu0 0.0
        %751 = vmatpush1.msra.mxu0 0.0
        %752 = vmatprep.subr.mxu0 0.0
        %753 = vmatpush1.msra.mxu0 0.0
        %754 = vmatprep.subr.mxu0 0.0
        %755 = vmatpush1.msra.mxu0 0.0
        %756 = vmatprep.subr.mxu0 0.0
        %757 = vmatpush1.msra.mxu0 0.0
        %758 = vmatprep.subr.mxu0 0.0
        %759 = vmatpush1.msra.mxu0 0.0
        %760 = vmatprep.subr.mxu0 0.0
        %761 = vmatpush1.msra.mxu0 0.0
        %762 = vmatprep.subr.mxu0 0.0
        %763 = vmatpush1.msra.mxu0 0.0
        %764 = vmatprep.subr.mxu0 0.0
        %765 = vmatpush1.msra.mxu0 0.0
        %766 = vmatprep.subr.mxu0 0.0
        %767 = vmatpush1.msra.mxu0 0.0
        %768 = vmatprep.subr.mxu0 0.0
        %769 = vmatpush1.msra.mxu0 0.0
        %770 = vmatprep.subr.mxu0 0.0
        %771 = vmatpush1.msra.mxu0 0.0
        %772 = vmatprep.subr.mxu0 0.0
        %773 = vmatpush1.msra.mxu0 0.0
        %774 = vmatprep.subr.mxu0 0.0
        %775 = vmatpush1.msra.mxu0 0.0
        %776 = vmatprep.subr.mxu0 0.0
        %777 = vmatpush1.msra.mxu0 0.0
        %778 = vmatprep.subr.mxu0 0.0
        %779 = vmatpush1.msra.mxu0 0.0
        %780 = vmatprep.subr.mxu0 0.0
        %781 = vmatpush1.msra.mxu0 0.0
        %782 = vmatprep.subr.mxu0 0.0
        %783 = vmatpush1.msra.mxu0 0.0
        %784 = vmatprep.subr.mxu0 0.0
        %785 = vmatpush1.msra.mxu0 0.0
        %786 = vmatprep.subr.mxu0 0.0
        %787 = vmatpush1.msra.mxu0 0.0
        %788 = vmatprep.subr.mxu0 0.0
        %789 = vmatpush1.msra.mxu0 0.0
        %790 = vmatprep.subr.mxu0 0.0
        %791 = vmatpush1.msra.mxu0 0.0
        %792 = vmatprep.subr.mxu0 0.0
        %793 = vmatpush1.msra.mxu0 0.0
        %794 = vmatprep.subr.mxu0 0.0
        %795 = vmatpush1.msra.mxu0 0.0
        %796 = vmatprep.subr.mxu0 0.0
        %797 = vmatpush1.msra.mxu0 0.0
        %798 = vmatprep.subr.mxu0 0.0
        %799 = vmatpush1.msra.mxu0 0.0
        %800 = vmatprep.subr.mxu0 0.0
        %801 = vmatpush1.msra.mxu0 0.0
        %802 = vmatprep.mubr.f32.mxu0 0.0
        %803 = vmatmul.mubr.f32.gmra.mrb[0].mxu0 %v736
        %v804 = vpop.f32.mrb[0].mxu0
        %v805 = vadd.f32 0.0, %v804
        %v806 = vpop.f32.mrb[0].mxu0
        %807 = vdwg.mxu0
        %v808 = vadd.f32 %v730, %v805
        %s809 = scalar_lea.vmem %s235, 14 [#allocation2]
        %v810 = vld [vmem:[%s809] sm:$0x3]
        %s811 = scalar_lea.vmem [#allocation5], 56
        %v812 = vld [vmem:[%s811] sm:$0xff]
        %v814 = vsel %vm272, %v810, 0
        %816 = vmatprep.subr.mxu0 0.0
        %817 = vmatpush1.msra.mxu0 %v812
        %818 = vmatprep.subr.mxu0 0.0
        %819 = vmatpush1.msra.mxu0 0.0
        %820 = vmatprep.subr.mxu0 0.0
        %821 = vmatpush1.msra.mxu0 0.0
        %822 = vmatprep.subr.mxu0 0.0
        %823 = vmatpush1.msra.mxu0 0.0
        %824 = vmatprep.subr.mxu0 0.0
        %825 = vmatpush1.msra.mxu0 0.0
        %826 = vmatprep.subr.mxu0 0.0
        %827 = vmatpush1.msra.mxu0 0.0
        %828 = vmatprep.subr.mxu0 0.0
        %829 = vmatpush1.msra.mxu0 0.0
        %830 = vmatprep.subr.mxu0 0.0
        %831 = vmatpush1.msra.mxu0 0.0
        %832 = vmatprep.subr.mxu0 0.0
        %833 = vmatpush1.msra.mxu0 0.0
        %834 = vmatprep.subr.mxu0 0.0
        %835 = vmatpush1.msra.mxu0 0.0
        %836 = vmatprep.subr.mxu0 0.0
        %837 = vmatpush1.msra.mxu0 0.0
        %838 = vmatprep.subr.mxu0 0.0
        %839 = vmatpush1.msra.mxu0 0.0
        %840 = vmatprep.subr.mxu0 0.0
        %841 = vmatpush1.msra.mxu0 0.0
        %842 = vmatprep.subr.mxu0 0.0
        %843 = vmatpush1.msra.mxu0 0.0
        %844 = vmatprep.subr.mxu0 0.0
        %845 = vmatpush1.msra.mxu0 0.0
        %846 = vmatprep.subr.mxu0 0.0
        %847 = vmatpush1.msra.mxu0 0.0
        %848 = vmatprep.subr.mxu0 0.0
        %849 = vmatpush1.msra.mxu0 0.0
        %850 = vmatprep.subr.mxu0 0.0
        %851 = vmatpush1.msra.mxu0 0.0
        %852 = vmatprep.subr.mxu0 0.0
        %853 = vmatpush1.msra.mxu0 0.0
        %854 = vmatprep.subr.mxu0 0.0
        %855 = vmatpush1.msra.mxu0 0.0
        %856 = vmatprep.subr.mxu0 0.0
        %857 = vmatpush1.msra.mxu0 0.0
        %858 = vmatprep.subr.mxu0 0.0
        %859 = vmatpush1.msra.mxu0 0.0
        %860 = vmatprep.subr.mxu0 0.0
        %861 = vmatpush1.msra.mxu0 0.0
        %862 = vmatprep.subr.mxu0 0.0
        %863 = vmatpush1.msra.mxu0 0.0
        %864 = vmatprep.subr.mxu0 0.0
        %865 = vmatpush1.msra.mxu0 0.0
        %866 = vmatprep.subr.mxu0 0.0
        %867 = vmatpush1.msra.mxu0 0.0
        %868 = vmatprep.subr.mxu0 0.0
        %869 = vmatpush1.msra.mxu0 0.0
        %870 = vmatprep.subr.mxu0 0.0
        %871 = vmatpush1.msra.mxu0 0.0
        %872 = vmatprep.subr.mxu0 0.0
        %873 = vmatpush1.msra.mxu0 0.0
        %874 = vmatprep.subr.mxu0 0.0
        %875 = vmatpush1.msra.mxu0 0.0
        %876 = vmatprep.subr.mxu0 0.0
        %877 = vmatpush1.msra.mxu0 0.0
        %878 = vmatprep.subr.mxu0 0.0
        %879 = vmatpush1.msra.mxu0 0.0
        %880 = vmatprep.mubr.f32.mxu0 0.0
        %881 = vmatmul.mubr.f32.gmra.mrb[0].mxu0 %v814
        %v882 = vpop.f32.mrb[0].mxu0
        %v883 = vadd.f32 0.0, %v882
        %v884 = vpop.f32.mrb[0].mxu0
        %885 = vdwg.mxu0
        %v886 = vadd.f32 %v808, %v883
        %s887 = scalar_lea.vmem %s235, 32 [#allocation2]
        %v888 = vld [vmem:[%s887] sm:$0x3]
        %s889 = scalar_lea.vmem [#allocation5], 64
        %v890 = vld [vmem:[%s889] sm:$0xff]
        %v892 = vsel %vm272, %v888, 0
        %894 = vmatprep.subr.mxu0 0.0
        %895 = vmatpush1.msra.mxu0 %v890
        %896 = vmatprep.subr.mxu0 0.0
        %897 = vmatpush1.msra.mxu0 0.0
        %898 = vmatprep.subr.mxu0 0.0
        %899 = vmatpush1.msra.mxu0 0.0
        %900 = vmatprep.subr.mxu0 0.0
        %901 = vmatpush1.msra.mxu0 0.0
        %902 = vmatprep.subr.mxu0 0.0
        %903 = vmatpush1.msra.mxu0 0.0
        %904 = vmatprep.subr.mxu0 0.0
        %905 = vmatpush1.msra.mxu0 0.0
        %906 = vmatprep.subr.mxu0 0.0
        %907 = vmatpush1.msra.mxu0 0.0
        %908 = vmatprep.subr.mxu0 0.0
        %909 = vmatpush1.msra.mxu0 0.0
        %910 = vmatprep.subr.mxu0 0.0
        %911 = vmatpush1.msra.mxu0 0.0
        %912 = vmatprep.subr.mxu0 0.0
        %913 = vmatpush1.msra.mxu0 0.0
        %914 = vmatprep.subr.mxu0 0.0
        %915 = vmatpush1.msra.mxu0 0.0
        %916 = vmatprep.subr.mxu0 0.0
        %917 = vmatpush1.msra.mxu0 0.0
        %918 = vmatprep.subr.mxu0 0.0
        %919 = vmatpush1.msra.mxu0 0.0
        %920 = vmatprep.subr.mxu0 0.0
        %921 = vmatpush1.msra.mxu0 0.0
        %922 = vmatprep.subr.mxu0 0.0
        %923 = vmatpush1.msra.mxu0 0.0
        %924 = vmatprep.subr.mxu0 0.0
        %925 = vmatpush1.msra.mxu0 0.0
        %926 = vmatprep.subr.mxu0 0.0
        %927 = vmatpush1.msra.mxu0 0.0
        %928 = vmatprep.subr.mxu0 0.0
        %929 = vmatpush1.msra.mxu0 0.0
        %930 = vmatprep.subr.mxu0 0.0
        %931 = vmatpush1.msra.mxu0 0.0
        %932 = vmatprep.subr.mxu0 0.0
        %933 = vmatpush1.msra.mxu0 0.0
        %934 = vmatprep.subr.mxu0 0.0
        %935 = vmatpush1.msra.mxu0 0.0
        %936 = vmatprep.subr.mxu0 0.0
        %937 = vmatpush1.msra.mxu0 0.0
        %938 = vmatprep.subr.mxu0 0.0
        %939 = vmatpush1.msra.mxu0 0.0
        %940 = vmatprep.subr.mxu0 0.0
        %941 = vmatpush1.msra.mxu0 0.0
        %942 = vmatprep.subr.mxu0 0.0
        %943 = vmatpush1.msra.mxu0 0.0
        %944 = vmatprep.subr.mxu0 0.0
        %945 = vmatpush1.msra.mxu0 0.0
        %946 = vmatprep.subr.mxu0 0.0
        %947 = vmatpush1.msra.mxu0 0.0
        %948 = vmatprep.subr.mxu0 0.0
        %949 = vmatpush1.msra.mxu0 0.0
        %950 = vmatprep.subr.mxu0 0.0
        %951 = vmatpush1.msra.mxu0 0.0
        %952 = vmatprep.subr.mxu0 0.0
        %953 = vmatpush1.msra.mxu0 0.0
        %954 = vmatprep.subr.mxu0 0.0
        %955 = vmatpush1.msra.mxu0 0.0
        %956 = vmatprep.subr.mxu0 0.0
        %957 = vmatpush1.msra.mxu0 0.0
        %958 = vmatprep.mubr.f32.mxu0 0.0
        %959 = vmatmul.mubr.f32.gmra.mrb[0].mxu0 %v892
        %v960 = vpop.f32.mrb[0].mxu0
        %v961 = vadd.f32 0.0, %v960
        %v962 = vpop.f32.mrb[0].mxu0
        %963 = vdwg.mxu0
        %v964 = vadd.f32 %v886, %v961
        %s965 = scalar_lea.vmem %s235, 34 [#allocation2]
        %v966 = vld [vmem:[%s965] sm:$0x3]
        %s967 = scalar_lea.vmem [#allocation5], 72
        %v968 = vld [vmem:[%s967] sm:$0xff]
        %v970 = vsel %vm272, %v966, 0
        %972 = vmatprep.subr.mxu0 0.0
        %973 = vmatpush1.msra.mxu0 %v968
        %974 = vmatprep.subr.mxu0 0.0
        %975 = vmatpush1.msra.mxu0 0.0
        %976 = vmatprep.subr.mxu0 0.0
        %977 = vmatpush1.msra.mxu0 0.0
        %978 = vmatprep.subr.mxu0 0.0
        %979 = vmatpush1.msra.mxu0 0.0
        %980 = vmatprep.subr.mxu0 0.0
        %981 = vmatpush1.msra.mxu0 0.0
        %982 = vmatprep.subr.mxu0 0.0
        %983 = vmatpush1.msra.mxu0 0.0
        %984 = vmatprep.subr.mxu0 0.0
        %985 = vmatpush1.msra.mxu0 0.0
        %986 = vmatprep.subr.mxu0 0.0
        %987 = vmatpush1.msra.mxu0 0.0
        %988 = vmatprep.subr.mxu0 0.0
        %989 = vmatpush1.msra.mxu0 0.0
        %990 = vmatprep.subr.mxu0 0.0
        %991 = vmatpush1.msra.mxu0 0.0
        %992 = vmatprep.subr.mxu0 0.0
        %993 = vmatpush1.msra.mxu0 0.0
        %994 = vmatprep.subr.mxu0 0.0
        %995 = vmatpush1.msra.mxu0 0.0
        %996 = vmatprep.subr.mxu0 0.0
        %997 = vmatpush1.msra.mxu0 0.0
        %998 = vmatprep.subr.mxu0 0.0
        %999 = vmatpush1.msra.mxu0 0.0
        %1000 = vmatprep.subr.mxu0 0.0
        %1001 = vmatpush1.msra.mxu0 0.0
        %1002 = vmatprep.subr.mxu0 0.0
        %1003 = vmatpush1.msra.mxu0 0.0
        %1004 = vmatprep.subr.mxu0 0.0
        %1005 = vmatpush1.msra.mxu0 0.0
        %1006 = vmatprep.subr.mxu0 0.0
        %1007 = vmatpush1.msra.mxu0 0.0
        %1008 = vmatprep.subr.mxu0 0.0
        %1009 = vmatpush1.msra.mxu0 0.0
        %1010 = vmatprep.subr.mxu0 0.0
        %1011 = vmatpush1.msra.mxu0 0.0
        %1012 = vmatprep.subr.mxu0 0.0
        %1013 = vmatpush1.msra.mxu0 0.0
        %1014 = vmatprep.subr.mxu0 0.0
        %1015 = vmatpush1.msra.mxu0 0.0
        %1016 = vmatprep.subr.mxu0 0.0
        %1017 = vmatpush1.msra.mxu0 0.0
        %1018 = vmatprep.subr.mxu0 0.0
        %1019 = vmatpush1.msra.mxu0 0.0
        %1020 = vmatprep.subr.mxu0 0.0
        %1021 = vmatpush1.msra.mxu0 0.0
        %1022 = vmatprep.subr.mxu0 0.0
        %1023 = vmatpush1.msra.mxu0 0.0
        %1024 = vmatprep.subr.mxu0 0.0
        %1025 = vmatpush1.msra.mxu0 0.0
        %1026 = vmatprep.subr.mxu0 0.0
        %1027 = vmatpush1.msra.mxu0 0.0
        %1028 = vmatprep.subr.mxu0 0.0
        %1029 = vmatpush1.msra.mxu0 0.0
        %1030 = vmatprep.subr.mxu0 0.0
        %1031 = vmatpush1.msra.mxu0 0.0
        %1032 = vmatprep.subr.mxu0 0.0
        %1033 = vmatpush1.msra.mxu0 0.0
        %1034 = vmatprep.subr.mxu0 0.0
        %1035 = vmatpush1.msra.mxu0 0.0
        %1036 = vmatprep.mubr.f32.mxu0 0.0
        %1037 = vmatmul.mubr.f32.gmra.mrb[0].mxu0 %v970
        %v1038 = vpop.f32.mrb[0].mxu0
        %v1039 = vadd.f32 0.0, %v1038
        %v1040 = vpop.f32.mrb[0].mxu0
        %1041 = vdwg.mxu0
        %v1042 = vadd.f32 %v964, %v1039
        %s1043 = scalar_lea.vmem %s235, 36 [#allocation2]
        %v1044 = vld [vmem:[%s1043] sm:$0x3]
        %s1045 = scalar_lea.vmem [#allocation5], 80
        %v1046 = vld [vmem:[%s1045] sm:$0xff]
        %v1048 = vsel %vm272, %v1044, 0
        %1050 = vmatprep.subr.mxu0 0.0
        %1051 = vmatpush1.msra.mxu0 %v1046
        %1052 = vmatprep.subr.mxu0 0.0
        %1053 = vmatpush1.msra.mxu0 0.0
        %1054 = vmatprep.subr.mxu0 0.0
        %1055 = vmatpush1.msra.mxu0 0.0
        %1056 = vmatprep.subr.mxu0 0.0
        %1057 = vmatpush1.msra.mxu0 0.0
        %1058 = vmatprep.subr.mxu0 0.0
        %1059 = vmatpush1.msra.mxu0 0.0
        %1060 = vmatprep.subr.mxu0 0.0
        %1061 = vmatpush1.msra.mxu0 0.0
        %1062 = vmatprep.subr.mxu0 0.0
        %1063 = vmatpush1.msra.mxu0 0.0
        %1064 = vmatprep.subr.mxu0 0.0
        %1065 = vmatpush1.msra.mxu0 0.0
        %1066 = vmatprep.subr.mxu0 0.0
        %1067 = vmatpush1.msra.mxu0 0.0
        %1068 = vmatprep.subr.mxu0 0.0
        %1069 = vmatpush1.msra.mxu0 0.0
        %1070 = vmatprep.subr.mxu0 0.0
        %1071 = vmatpush1.msra.mxu0 0.0
        %1072 = vmatprep.subr.mxu0 0.0
        %1073 = vmatpush1.msra.mxu0 0.0
        %1074 = vmatprep.subr.mxu0 0.0
        %1075 = vmatpush1.msra.mxu0 0.0
        %1076 = vmatprep.subr.mxu0 0.0
        %1077 = vmatpush1.msra.mxu0 0.0
        %1078 = vmatprep.subr.mxu0 0.0
        %1079 = vmatpush1.msra.mxu0 0.0
        %1080 = vmatprep.subr.mxu0 0.0
        %1081 = vmatpush1.msra.mxu0 0.0
        %1082 = vmatprep.subr.mxu0 0.0
        %1083 = vmatpush1.msra.mxu0 0.0
        %1084 = vmatprep.subr.mxu0 0.0
        %1085 = vmatpush1.msra.mxu0 0.0
        %1086 = vmatprep.subr.mxu0 0.0
        %1087 = vmatpush1.msra.mxu0 0.0
        %1088 = vmatprep.subr.mxu0 0.0
        %1089 = vmatpush1.msra.mxu0 0.0
        %1090 = vmatprep.subr.mxu0 0.0
        %1091 = vmatpush1.msra.mxu0 0.0
        %1092 = vmatprep.subr.mxu0 0.0
        %1093 = vmatpush1.msra.mxu0 0.0
        %1094 = vmatprep.subr.mxu0 0.0
        %1095 = vmatpush1.msra.mxu0 0.0
        %1096 = vmatprep.subr.mxu0 0.0
        %1097 = vmatpush1.msra.mxu0 0.0
        %1098 = vmatprep.subr.mxu0 0.0
        %1099 = vmatpush1.msra.mxu0 0.0
        %1100 = vmatprep.subr.mxu0 0.0
        %1101 = vmatpush1.msra.mxu0 0.0
        %1102 = vmatprep.subr.mxu0 0.0
        %1103 = vmatpush1.msra.mxu0 0.0
        %1104 = vmatprep.subr.mxu0 0.0
        %1105 = vmatpush1.msra.mxu0 0.0
        %1106 = vmatprep.subr.mxu0 0.0
        %1107 = vmatpush1.msra.mxu0 0.0
        %1108 = vmatprep.subr.mxu0 0.0
        %1109 = vmatpush1.msra.mxu0 0.0
        %1110 = vmatprep.subr.mxu0 0.0
        %1111 = vmatpush1.msra.mxu0 0.0
        %1112 = vmatprep.subr.mxu0 0.0
        %1113 = vmatpush1.msra.mxu0 0.0
        %1114 = vmatprep.mubr.f32.mxu0 0.0
        %1115 = vmatmul.mubr.f32.gmra.mrb[0].mxu0 %v1048
        %v1116 = vpop.f32.mrb[0].mxu0
        %v1117 = vadd.f32 0.0, %v1116
        %v1118 = vpop.f32.mrb[0].mxu0
        %1119 = vdwg.mxu0
        %v1120 = vadd.f32 %v1042, %v1117
        %s1121 = scalar_lea.vmem %s235, 38 [#allocation2]
        %v1122 = vld [vmem:[%s1121] sm:$0x3]
        %s1123 = scalar_lea.vmem [#allocation5], 88
        %v1124 = vld [vmem:[%s1123] sm:$0xff]
        %v1126 = vsel %vm272, %v1122, 0
        %1128 = vmatprep.subr.mxu0 0.0
        %1129 = vmatpush1.msra.mxu0 %v1124
        %1130 = vmatprep.subr.mxu0 0.0
        %1131 = vmatpush1.msra.mxu0 0.0
        %1132 = vmatprep.subr.mxu0 0.0
        %1133 = vmatpush1.msra.mxu0 0.0
        %1134 = vmatprep.subr.mxu0 0.0
        %1135 = vmatpush1.msra.mxu0 0.0
        %1136 = vmatprep.subr.mxu0 0.0
        %1137 = vmatpush1.msra.mxu0 0.0
        %1138 = vmatprep.subr.mxu0 0.0
        %1139 = vmatpush1.msra.mxu0 0.0
        %1140 = vmatprep.subr.mxu0 0.0
        %1141 = vmatpush1.msra.mxu0 0.0
        %1142 = vmatprep.subr.mxu0 0.0
        %1143 = vmatpush1.msra.mxu0 0.0
        %1144 = vmatprep.subr.mxu0 0.0
        %1145 = vmatpush1.msra.mxu0 0.0
        %1146 = vmatprep.subr.mxu0 0.0
        %1147 = vmatpush1.msra.mxu0 0.0
        %1148 = vmatprep.subr.mxu0 0.0
        %1149 = vmatpush1.msra.mxu0 0.0
        %1150 = vmatprep.subr.mxu0 0.0
        %1151 = vmatpush1.msra.mxu0 0.0
        %1152 = vmatprep.subr.mxu0 0.0
        %1153 = vmatpush1.msra.mxu0 0.0
        %1154 = vmatprep.subr.mxu0 0.0
        %1155 = vmatpush1.msra.mxu0 0.0
        %1156 = vmatprep.subr.mxu0 0.0
        %1157 = vmatpush1.msra.mxu0 0.0
        %1158 = vmatprep.subr.mxu0 0.0
        %1159 = vmatpush1.msra.mxu0 0.0
        %1160 = vmatprep.subr.mxu0 0.0
        %1161 = vmatpush1.msra.mxu0 0.0
        %1162 = vmatprep.subr.mxu0 0.0
        %1163 = vmatpush1.msra.mxu0 0.0
        %1164 = vmatprep.subr.mxu0 0.0
        %1165 = vmatpush1.msra.mxu0 0.0
        %1166 = vmatprep.subr.mxu0 0.0
        %1167 = vmatpush1.msra.mxu0 0.0
        %1168 = vmatprep.subr.mxu0 0.0
        %1169 = vmatpush1.msra.mxu0 0.0
        %1170 = vmatprep.subr.mxu0 0.0
        %1171 = vmatpush1.msra.mxu0 0.0
        %1172 = vmatprep.subr.mxu0 0.0
        %1173 = vmatpush1.msra.mxu0 0.0
        %1174 = vmatprep.subr.mxu0 0.0
        %1175 = vmatpush1.msra.mxu0 0.0
        %1176 = vmatprep.subr.mxu0 0.0
        %1177 = vmatpush1.msra.mxu0 0.0
        %1178 = vmatprep.subr.mxu0 0.0
        %1179 = vmatpush1.msra.mxu0 0.0
        %1180 = vmatprep.subr.mxu0 0.0
        %1181 = vmatpush1.msra.mxu0 0.0
        %1182 = vmatprep.subr.mxu0 0.0
        %1183 = vmatpush1.msra.mxu0 0.0
        %1184 = vmatprep.subr.mxu0 0.0
        %1185 = vmatpush1.msra.mxu0 0.0
        %1186 = vmatprep.subr.mxu0 0.0
        %1187 = vmatpush1.msra.mxu0 0.0
        %1188 = vmatprep.subr.mxu0 0.0
        %1189 = vmatpush1.msra.mxu0 0.0
        %1190 = vmatprep.subr.mxu0 0.0
        %1191 = vmatpush1.msra.mxu0 0.0
        %1192 = vmatprep.mubr.f32.mxu0 0.0
        %1193 = vmatmul.mubr.f32.gmra.mrb[0].mxu0 %v1126
        %v1194 = vpop.f32.mrb[0].mxu0
        %v1195 = vadd.f32 0.0, %v1194
        %v1196 = vpop.f32.mrb[0].mxu0
        %1197 = vdwg.mxu0
        %v1198 = vadd.f32 %v1120, %v1195
        %s1199 = scalar_lea.vmem %s235, 40 [#allocation2]
        %v1200 = vld [vmem:[%s1199] sm:$0x3]
        %s1201 = scalar_lea.vmem [#allocation5], 96
        %v1202 = vld [vmem:[%s1201] sm:$0xff]
        %v1204 = vsel %vm272, %v1200, 0
        %1206 = vmatprep.subr.mxu0 0.0
        %1207 = vmatpush1.msra.mxu0 %v1202
        %1208 = vmatprep.subr.mxu0 0.0
        %1209 = vmatpush1.msra.mxu0 0.0
        %1210 = vmatprep.subr.mxu0 0.0
        %1211 = vmatpush1.msra.mxu0 0.0
        %1212 = vmatprep.subr.mxu0 0.0
        %1213 = vmatpush1.msra.mxu0 0.0
        %1214 = vmatprep.subr.mxu0 0.0
        %1215 = vmatpush1.msra.mxu0 0.0
        %1216 = vmatprep.subr.mxu0 0.0
        %1217 = vmatpush1.msra.mxu0 0.0
        %1218 = vmatprep.subr.mxu0 0.0
        %1219 = vmatpush1.msra.mxu0 0.0
        %1220 = vmatprep.subr.mxu0 0.0
        %1221 = vmatpush1.msra.mxu0 0.0
        %1222 = vmatprep.subr.mxu0 0.0
        %1223 = vmatpush1.msra.mxu0 0.0
        %1224 = vmatprep.subr.mxu0 0.0
        %1225 = vmatpush1.msra.mxu0 0.0
        %1226 = vmatprep.subr.mxu0 0.0
        %1227 = vmatpush1.msra.mxu0 0.0
        %1228 = vmatprep.subr.mxu0 0.0
        %1229 = vmatpush1.msra.mxu0 0.0
        %1230 = vmatprep.subr.mxu0 0.0
        %1231 = vmatpush1.msra.mxu0 0.0
        %1232 = vmatprep.subr.mxu0 0.0
        %1233 = vmatpush1.msra.mxu0 0.0
        %1234 = vmatprep.subr.mxu0 0.0
        %1235 = vmatpush1.msra.mxu0 0.0
        %1236 = vmatprep.subr.mxu0 0.0
        %1237 = vmatpush1.msra.mxu0 0.0
        %1238 = vmatprep.subr.mxu0 0.0
        %1239 = vmatpush1.msra.mxu0 0.0
        %1240 = vmatprep.subr.mxu0 0.0
        %1241 = vmatpush1.msra.mxu0 0.0
        %1242 = vmatprep.subr.mxu0 0.0
        %1243 = vmatpush1.msra.mxu0 0.0
        %1244 = vmatprep.subr.mxu0 0.0
        %1245 = vmatpush1.msra.mxu0 0.0
        %1246 = vmatprep.subr.mxu0 0.0
        %1247 = vmatpush1.msra.mxu0 0.0
        %1248 = vmatprep.subr.mxu0 0.0
        %1249 = vmatpush1.msra.mxu0 0.0
        %1250 = vmatprep.subr.mxu0 0.0
        %1251 = vmatpush1.msra.mxu0 0.0
        %1252 = vmatprep.subr.mxu0 0.0
        %1253 = vmatpush1.msra.mxu0 0.0
        %1254 = vmatprep.subr.mxu0 0.0
        %1255 = vmatpush1.msra.mxu0 0.0
        %1256 = vmatprep.subr.mxu0 0.0
        %1257 = vmatpush1.msra.mxu0 0.0
        %1258 = vmatprep.subr.mxu0 0.0
        %1259 = vmatpush1.msra.mxu0 0.0
        %1260 = vmatprep.subr.mxu0 0.0
        %1261 = vmatpush1.msra.mxu0 0.0
        %1262 = vmatprep.subr.mxu0 0.0
        %1263 = vmatpush1.msra.mxu0 0.0
        %1264 = vmatprep.subr.mxu0 0.0
        %1265 = vmatpush1.msra.mxu0 0.0
        %1266 = vmatprep.subr.mxu0 0.0
        %1267 = vmatpush1.msra.mxu0 0.0
        %1268 = vmatprep.subr.mxu0 0.0
        %1269 = vmatpush1.msra.mxu0 0.0
        %1270 = vmatprep.mubr.f32.mxu0 0.0
        %1271 = vmatmul.mubr.f32.gmra.mrb[0].mxu0 %v1204
        %v1272 = vpop.f32.mrb[0].mxu0
        %v1273 = vadd.f32 0.0, %v1272
        %v1274 = vpop.f32.mrb[0].mxu0
        %1275 = vdwg.mxu0
        %v1276 = vadd.f32 %v1198, %v1273
        %s1277 = scalar_lea.vmem %s235, 42 [#allocation2]
        %v1278 = vld [vmem:[%s1277] sm:$0x3]
        %s1279 = scalar_lea.vmem [#allocation5], 104
        %v1280 = vld [vmem:[%s1279] sm:$0xff]
        %v1282 = vsel %vm272, %v1278, 0
        %1284 = vmatprep.subr.mxu0 0.0
        %1285 = vmatpush1.msra.mxu0 %v1280
        %1286 = vmatprep.subr.mxu0 0.0
        %1287 = vmatpush1.msra.mxu0 0.0
        %1288 = vmatprep.subr.mxu0 0.0
        %1289 = vmatpush1.msra.mxu0 0.0
        %1290 = vmatprep.subr.mxu0 0.0
        %1291 = vmatpush1.msra.mxu0 0.0
        %1292 = vmatprep.subr.mxu0 0.0
        %1293 = vmatpush1.msra.mxu0 0.0
        %1294 = vmatprep.subr.mxu0 0.0
        %1295 = vmatpush1.msra.mxu0 0.0
        %1296 = vmatprep.subr.mxu0 0.0
        %1297 = vmatpush1.msra.mxu0 0.0
        %1298 = vmatprep.subr.mxu0 0.0
        %1299 = vmatpush1.msra.mxu0 0.0
        %1300 = vmatprep.subr.mxu0 0.0
        %1301 = vmatpush1.msra.mxu0 0.0
        %1302 = vmatprep.subr.mxu0 0.0
        %1303 = vmatpush1.msra.mxu0 0.0
        %1304 = vmatprep.subr.mxu0 0.0
        %1305 = vmatpush1.msra.mxu0 0.0
        %1306 = vmatprep.subr.mxu0 0.0
        %1307 = vmatpush1.msra.mxu0 0.0
        %1308 = vmatprep.subr.mxu0 0.0
        %1309 = vmatpush1.msra.mxu0 0.0
        %1310 = vmatprep.subr.mxu0 0.0
        %1311 = vmatpush1.msra.mxu0 0.0
        %1312 = vmatprep.subr.mxu0 0.0
        %1313 = vmatpush1.msra.mxu0 0.0
        %1314 = vmatprep.subr.mxu0 0.0
        %1315 = vmatpush1.msra.mxu0 0.0
        %1316 = vmatprep.subr.mxu0 0.0
        %1317 = vmatpush1.msra.mxu0 0.0
        %1318 = vmatprep.subr.mxu0 0.0
        %1319 = vmatpush1.msra.mxu0 0.0
        %1320 = vmatprep.subr.mxu0 0.0
        %1321 = vmatpush1.msra.mxu0 0.0
        %1322 = vmatprep.subr.mxu0 0.0
        %1323 = vmatpush1.msra.mxu0 0.0
        %1324 = vmatprep.subr.mxu0 0.0
        %1325 = vmatpush1.msra.mxu0 0.0
        %1326 = vmatprep.subr.mxu0 0.0
        %1327 = vmatpush1.msra.mxu0 0.0
        %1328 = vmatprep.subr.mxu0 0.0
        %1329 = vmatpush1.msra.mxu0 0.0
        %1330 = vmatprep.subr.mxu0 0.0
        %1331 = vmatpush1.msra.mxu0 0.0
        %1332 = vmatprep.subr.mxu0 0.0
        %1333 = vmatpush1.msra.mxu0 0.0
        %1334 = vmatprep.subr.mxu0 0.0
        %1335 = vmatpush1.msra.mxu0 0.0
        %1336 = vmatprep.subr.mxu0 0.0
        %1337 = vmatpush1.msra.mxu0 0.0
        %1338 = vmatprep.subr.mxu0 0.0
        %1339 = vmatpush1.msra.mxu0 0.0
        %1340 = vmatprep.subr.mxu0 0.0
        %1341 = vmatpush1.msra.mxu0 0.0
        %1342 = vmatprep.subr.mxu0 0.0
        %1343 = vmatpush1.msra.mxu0 0.0
        %1344 = vmatprep.subr.mxu0 0.0
        %1345 = vmatpush1.msra.mxu0 0.0
        %1346 = vmatprep.subr.mxu0 0.0
        %1347 = vmatpush1.msra.mxu0 0.0
        %1348 = vmatprep.mubr.f32.mxu0 0.0
        %1349 = vmatmul.mubr.f32.gmra.mrb[0].mxu0 %v1282
        %v1350 = vpop.f32.mrb[0].mxu0
        %v1351 = vadd.f32 0.0, %v1350
        %v1352 = vpop.f32.mrb[0].mxu0
        %1353 = vdwg.mxu0
        %v1354 = vadd.f32 %v1276, %v1351
        %s1355 = scalar_lea.vmem %s235, 44 [#allocation2]
        %v1356 = vld [vmem:[%s1355] sm:$0x3]
        %s1357 = scalar_lea.vmem [#allocation5], 112
        %v1358 = vld [vmem:[%s1357] sm:$0xff]
        %v1360 = vsel %vm272, %v1356, 0
        %1362 = vmatprep.subr.mxu0 0.0
        %1363 = vmatpush1.msra.mxu0 %v1358
        %1364 = vmatprep.subr.mxu0 0.0
        %1365 = vmatpush1.msra.mxu0 0.0
        %1366 = vmatprep.subr.mxu0 0.0
        %1367 = vmatpush1.msra.mxu0 0.0
        %1368 = vmatprep.subr.mxu0 0.0
        %1369 = vmatpush1.msra.mxu0 0.0
        %1370 = vmatprep.subr.mxu0 0.0
        %1371 = vmatpush1.msra.mxu0 0.0
        %1372 = vmatprep.subr.mxu0 0.0
        %1373 = vmatpush1.msra.mxu0 0.0
        %1374 = vmatprep.subr.mxu0 0.0
        %1375 = vmatpush1.msra.mxu0 0.0
        %1376 = vmatprep.subr.mxu0 0.0
        %1377 = vmatpush1.msra.mxu0 0.0
        %1378 = vmatprep.subr.mxu0 0.0
        %1379 = vmatpush1.msra.mxu0 0.0
        %1380 = vmatprep.subr.mxu0 0.0
        %1381 = vmatpush1.msra.mxu0 0.0
        %1382 = vmatprep.subr.mxu0 0.0
        %1383 = vmatpush1.msra.mxu0 0.0
        %1384 = vmatprep.subr.mxu0 0.0
        %1385 = vmatpush1.msra.mxu0 0.0
        %1386 = vmatprep.subr.mxu0 0.0
        %1387 = vmatpush1.msra.mxu0 0.0
        %1388 = vmatprep.subr.mxu0 0.0
        %1389 = vmatpush1.msra.mxu0 0.0
        %1390 = vmatprep.subr.mxu0 0.0
        %1391 = vmatpush1.msra.mxu0 0.0
        %1392 = vmatprep.subr.mxu0 0.0
        %1393 = vmatpush1.msra.mxu0 0.0
        %1394 = vmatprep.subr.mxu0 0.0
        %1395 = vmatpush1.msra.mxu0 0.0
        %1396 = vmatprep.subr.mxu0 0.0
        %1397 = vmatpush1.msra.mxu0 0.0
        %1398 = vmatprep.subr.mxu0 0.0
        %1399 = vmatpush1.msra.mxu0 0.0
        %1400 = vmatprep.subr.mxu0 0.0
        %1401 = vmatpush1.msra.mxu0 0.0
        %1402 = vmatprep.subr.mxu0 0.0
        %1403 = vmatpush1.msra.mxu0 0.0
        %1404 = vmatprep.subr.mxu0 0.0
        %1405 = vmatpush1.msra.mxu0 0.0
        %1406 = vmatprep.subr.mxu0 0.0
        %1407 = vmatpush1.msra.mxu0 0.0
        %1408 = vmatprep.subr.mxu0 0.0
        %1409 = vmatpush1.msra.mxu0 0.0
        %1410 = vmatprep.subr.mxu0 0.0
        %1411 = vmatpush1.msra.mxu0 0.0
        %1412 = vmatprep.subr.mxu0 0.0
        %1413 = vmatpush1.msra.mxu0 0.0
        %1414 = vmatprep.subr.mxu0 0.0
        %1415 = vmatpush1.msra.mxu0 0.0
        %1416 = vmatprep.subr.mxu0 0.0
        %1417 = vmatpush1.msra.mxu0 0.0
        %1418 = vmatprep.subr.mxu0 0.0
        %1419 = vmatpush1.msra.mxu0 0.0
        %1420 = vmatprep.subr.mxu0 0.0
        %1421 = vmatpush1.msra.mxu0 0.0
        %1422 = vmatprep.subr.mxu0 0.0
        %1423 = vmatpush1.msra.mxu0 0.0
        %1424 = vmatprep.subr.mxu0 0.0
        %1425 = vmatpush1.msra.mxu0 0.0
        %1426 = vmatprep.mubr.f32.mxu0 0.0
        %1427 = vmatmul.mubr.f32.gmra.mrb[0].mxu0 %v1360
        %v1428 = vpop.f32.mrb[0].mxu0
        %v1429 = vadd.f32 0.0, %v1428
        %v1430 = vpop.f32.mrb[0].mxu0
        %1431 = vdwg.mxu0
        %v1432 = vadd.f32 %v1354, %v1429
        %s1433 = scalar_lea.vmem %s235, 46 [#allocation2]
        %v1434 = vld [vmem:[%s1433] sm:$0x3]
        %s1435 = scalar_lea.vmem [#allocation5], 120
        %v1436 = vld [vmem:[%s1435] sm:$0xff]
        %v1438 = vsel %vm272, %v1434, 0
        %1440 = vmatprep.subr.mxu0 0.0
        %1441 = vmatpush1.msra.mxu0 %v1436
        %1442 = vmatprep.subr.mxu0 0.0
        %1443 = vmatpush1.msra.mxu0 0.0
        %1444 = vmatprep.subr.mxu0 0.0
        %1445 = vmatpush1.msra.mxu0 0.0
        %1446 = vmatprep.subr.mxu0 0.0
        %1447 = vmatpush1.msra.mxu0 0.0
        %1448 = vmatprep.subr.mxu0 0.0
        %1449 = vmatpush1.msra.mxu0 0.0
        %1450 = vmatprep.subr.mxu0 0.0
        %1451 = vmatpush1.msra.mxu0 0.0
        %1452 = vmatprep.subr.mxu0 0.0
        %1453 = vmatpush1.msra.mxu0 0.0
        %1454 = vmatprep.subr.mxu0 0.0
        %1455 = vmatpush1.msra.mxu0 0.0
        %1456 = vmatprep.subr.mxu0 0.0
        %1457 = vmatpush1.msra.mxu0 0.0
        %1458 = vmatprep.subr.mxu0 0.0
        %1459 = vmatpush1.msra.mxu0 0.0
        %1460 = vmatprep.subr.mxu0 0.0
        %1461 = vmatpush1.msra.mxu0 0.0
        %1462 = vmatprep.subr.mxu0 0.0
        %1463 = vmatpush1.msra.mxu0 0.0
        %1464 = vmatprep.subr.mxu0 0.0
        %1465 = vmatpush1.msra.mxu0 0.0
        %1466 = vmatprep.subr.mxu0 0.0
        %1467 = vmatpush1.msra.mxu0 0.0
        %1468 = vmatprep.subr.mxu0 0.0
        %1469 = vmatpush1.msra.mxu0 0.0
        %1470 = vmatprep.subr.mxu0 0.0
        %1471 = vmatpush1.msra.mxu0 0.0
        %1472 = vmatprep.subr.mxu0 0.0
        %1473 = vmatpush1.msra.mxu0 0.0
        %1474 = vmatprep.subr.mxu0 0.0
        %1475 = vmatpush1.msra.mxu0 0.0
        %1476 = vmatprep.subr.mxu0 0.0
        %1477 = vmatpush1.msra.mxu0 0.0
        %1478 = vmatprep.subr.mxu0 0.0
        %1479 = vmatpush1.msra.mxu0 0.0
        %1480 = vmatprep.subr.mxu0 0.0
        %1481 = vmatpush1.msra.mxu0 0.0
        %1482 = vmatprep.subr.mxu0 0.0
        %1483 = vmatpush1.msra.mxu0 0.0
        %1484 = vmatprep.subr.mxu0 0.0
        %1485 = vmatpush1.msra.mxu0 0.0
        %1486 = vmatprep.subr.mxu0 0.0
        %1487 = vmatpush1.msra.mxu0 0.0
        %1488 = vmatprep.subr.mxu0 0.0
        %1489 = vmatpush1.msra.mxu0 0.0
        %1490 = vmatprep.subr.mxu0 0.0
        %1491 = vmatpush1.msra.mxu0 0.0
        %1492 = vmatprep.subr.mxu0 0.0
        %1493 = vmatpush1.msra.mxu0 0.0
        %1494 = vmatprep.subr.mxu0 0.0
        %1495 = vmatpush1.msra.mxu0 0.0
        %1496 = vmatprep.subr.mxu0 0.0
        %1497 = vmatpush1.msra.mxu0 0.0
        %1498 = vmatprep.subr.mxu0 0.0
        %1499 = vmatpush1.msra.mxu0 0.0
        %1500 = vmatprep.subr.mxu0 0.0
        %1501 = vmatpush1.msra.mxu0 0.0
        %1502 = vmatprep.subr.mxu0 0.0
        %1503 = vmatpush1.msra.mxu0 0.0
        %1504 = vmatprep.mubr.f32.mxu0 0.0
        %1505 = vmatmul.mubr.f32.gmra.mrb[0].mxu0 %v1438
        %v1506 = vpop.f32.mrb[0].mxu0
        %v1507 = vadd.f32 0.0, %v1506
        %v1508 = vpop.f32.mrb[0].mxu0
        %1509 = vdwg.mxu0
        %v1510 = vadd.f32 %v1432, %v1507
        %s1511 = scalar_lea.vmem %s235, 64 [#allocation2]
        %v1512 = vld [vmem:[%s1511] sm:$0x3]
        %s1513 = scalar_lea.vmem [#allocation5], 128
        %v1514 = vld [vmem:[%s1513] sm:$0xff]
        %v1516 = vsel %vm272, %v1512, 0
        %1518 = vmatprep.subr.mxu0 0.0
        %1519 = vmatpush1.msra.mxu0 %v1514
        %1520 = vmatprep.subr.mxu0 0.0
        %1521 = vmatpush1.msra.mxu0 0.0
        %1522 = vmatprep.subr.mxu0 0.0
        %1523 = vmatpush1.msra.mxu0 0.0
        %1524 = vmatprep.subr.mxu0 0.0
        %1525 = vmatpush1.msra.mxu0 0.0
        %1526 = vmatprep.subr.mxu0 0.0
        %1527 = vmatpush1.msra.mxu0 0.0
        %1528 = vmatprep.subr.mxu0 0.0
        %1529 = vmatpush1.msra.mxu0 0.0
        %1530 = vmatprep.subr.mxu0 0.0
        %1531 = vmatpush1.msra.mxu0 0.0
        %1532 = vmatprep.subr.mxu0 0.0
        %1533 = vmatpush1.msra.mxu0 0.0
        %1534 = vmatprep.subr.mxu0 0.0
        %1535 = vmatpush1.msra.mxu0 0.0
        %1536 = vmatprep.subr.mxu0 0.0
        %1537 = vmatpush1.msra.mxu0 0.0
        %1538 = vmatprep.subr.mxu0 0.0
        %1539 = vmatpush1.msra.mxu0 0.0
        %1540 = vmatprep.subr.mxu0 0.0
        %1541 = vmatpush1.msra.mxu0 0.0
        %1542 = vmatprep.subr.mxu0 0.0
        %1543 = vmatpush1.msra.mxu0 0.0
        %1544 = vmatprep.subr.mxu0 0.0
        %1545 = vmatpush1.msra.mxu0 0.0
        %1546 = vmatprep.subr.mxu0 0.0
        %1547 = vmatpush1.msra.mxu0 0.0
        %1548 = vmatprep.subr.mxu0 0.0
        %1549 = vmatpush1.msra.mxu0 0.0
        %1550 = vmatprep.subr.mxu0 0.0
        %1551 = vmatpush1.msra.mxu0 0.0
        %1552 = vmatprep.subr.mxu0 0.0
        %1553 = vmatpush1.msra.mxu0 0.0
        %1554 = vmatprep.subr.mxu0 0.0
        %1555 = vmatpush1.msra.mxu0 0.0
        %1556 = vmatprep.subr.mxu0 0.0
        %1557 = vmatpush1.msra.mxu0 0.0
        %1558 = vmatprep.subr.mxu0 0.0
        %1559 = vmatpush1.msra.mxu0 0.0
        %1560 = vmatprep.subr.mxu0 0.0
        %1561 = vmatpush1.msra.mxu0 0.0
        %1562 = vmatprep.subr.mxu0 0.0
        %1563 = vmatpush1.msra.mxu0 0.0
        %1564 = vmatprep.subr.mxu0 0.0
        %1565 = vmatpush1.msra.mxu0 0.0
        %1566 = vmatprep.subr.mxu0 0.0
        %1567 = vmatpush1.msra.mxu0 0.0
        %1568 = vmatprep.subr.mxu0 0.0
        %1569 = vmatpush1.msra.mxu0 0.0
        %1570 = vmatprep.subr.mxu0 0.0
        %1571 = vmatpush1.msra.mxu0 0.0
        %1572 = vmatprep.subr.mxu0 0.0
        %1573 = vmatpush1.msra.mxu0 0.0
        %1574 = vmatprep.subr.mxu0 0.0
        %1575 = vmatpush1.msra.mxu0 0.0
        %1576 = vmatprep.subr.mxu0 0.0
        %1577 = vmatpush1.msra.mxu0 0.0
        %1578 = vmatprep.subr.mxu0 0.0
        %1579 = vmatpush1.msra.mxu0 0.0
        %1580 = vmatprep.subr.mxu0 0.0
        %1581 = vmatpush1.msra.mxu0 0.0
        %1582 = vmatprep.mubr.f32.mxu0 0.0
        %1583 = vmatmul.mubr.f32.gmra.mrb[0].mxu0 %v1516
        %v1584 = vpop.f32.mrb[0].mxu0
        %v1585 = vadd.f32 0.0, %v1584
        %v1586 = vpop.f32.mrb[0].mxu0
        %1587 = vdwg.mxu0
        %v1588 = vadd.f32 %v1510, %v1585
        %s1589 = scalar_lea.vmem %s235, 66 [#allocation2]
        %v1590 = vld [vmem:[%s1589] sm:$0x3]
        %s1591 = scalar_lea.vmem [#allocation5], 136
        %v1592 = vld [vmem:[%s1591] sm:$0xff]
        %v1594 = vsel %vm272, %v1590, 0
        %1596 = vmatprep.subr.mxu0 0.0
        %1597 = vmatpush1.msra.mxu0 %v1592
        %1598 = vmatprep.subr.mxu0 0.0
        %1599 = vmatpush1.msra.mxu0 0.0
        %1600 = vmatprep.subr.mxu0 0.0
        %1601 = vmatpush1.msra.mxu0 0.0
        %1602 = vmatprep.subr.mxu0 0.0
        %1603 = vmatpush1.msra.mxu0 0.0
        %1604 = vmatprep.subr.mxu0 0.0
        %1605 = vmatpush1.msra.mxu0 0.0
        %1606 = vmatprep.subr.mxu0 0.0
        %1607 = vmatpush1.msra.mxu0 0.0
        %1608 = vmatprep.subr.mxu0 0.0
        %1609 = vmatpush1.msra.mxu0 0.0
        %1610 = vmatprep.subr.mxu0 0.0
        %1611 = vmatpush1.msra.mxu0 0.0
        %1612 = vmatprep.subr.mxu0 0.0
        %1613 = vmatpush1.msra.mxu0 0.0
        %1614 = vmatprep.subr.mxu0 0.0
        %1615 = vmatpush1.msra.mxu0 0.0
        %1616 = vmatprep.subr.mxu0 0.0
        %1617 = vmatpush1.msra.mxu0 0.0
        %1618 = vmatprep.subr.mxu0 0.0
        %1619 = vmatpush1.msra.mxu0 0.0
        %1620 = vmatprep.subr.mxu0 0.0
        %1621 = vmatpush1.msra.mxu0 0.0
        %1622 = vmatprep.subr.mxu0 0.0
        %1623 = vmatpush1.msra.mxu0 0.0
        %1624 = vmatprep.subr.mxu0 0.0
        %1625 = vmatpush1.msra.mxu0 0.0
        %1626 = vmatprep.subr.mxu0 0.0
        %1627 = vmatpush1.msra.mxu0 0.0
        %1628 = vmatprep.subr.mxu0 0.0
        %1629 = vmatpush1.msra.mxu0 0.0
        %1630 = vmatprep.subr.mxu0 0.0
        %1631 = vmatpush1.msra.mxu0 0.0
        %1632 = vmatprep.subr.mxu0 0.0
        %1633 = vmatpush1.msra.mxu0 0.0
        %1634 = vmatprep.subr.mxu0 0.0
        %1635 = vmatpush1.msra.mxu0 0.0
        %1636 = vmatprep.subr.mxu0 0.0
        %1637 = vmatpush1.msra.mxu0 0.0
        %1638 = vmatprep.subr.mxu0 0.0
        %1639 = vmatpush1.msra.mxu0 0.0
        %1640 = vmatprep.subr.mxu0 0.0
        %1641 = vmatpush1.msra.mxu0 0.0
        %1642 = vmatprep.subr.mxu0 0.0
        %1643 = vmatpush1.msra.mxu0 0.0
        %1644 = vmatprep.subr.mxu0 0.0
        %1645 = vmatpush1.msra.mxu0 0.0
        %1646 = vmatprep.subr.mxu0 0.0
        %1647 = vmatpush1.msra.mxu0 0.0
        %1648 = vmatprep.subr.mxu0 0.0
        %1649 = vmatpush1.msra.mxu0 0.0
        %1650 = vmatprep.subr.mxu0 0.0
        %1651 = vmatpush1.msra.mxu0 0.0
        %1652 = vmatprep.subr.mxu0 0.0
        %1653 = vmatpush1.msra.mxu0 0.0
        %1654 = vmatprep.subr.mxu0 0.0
        %1655 = vmatpush1.msra.mxu0 0.0
        %1656 = vmatprep.subr.mxu0 0.0
        %1657 = vmatpush1.msra.mxu0 0.0
        %1658 = vmatprep.subr.mxu0 0.0
        %1659 = vmatpush1.msra.mxu0 0.0
        %1660 = vmatprep.mubr.f32.mxu0 0.0
        %1661 = vmatmul.mubr.f32.gmra.mrb[0].mxu0 %v1594
        %v1662 = vpop.f32.mrb[0].mxu0
        %v1663 = vadd.f32 0.0, %v1662
        %v1664 = vpop.f32.mrb[0].mxu0
        %1665 = vdwg.mxu0
        %v1666 = vadd.f32 %v1588, %v1663
        %s1667 = scalar_lea.vmem %s235, 68 [#allocation2]
        %v1668 = vld [vmem:[%s1667] sm:$0x3]
        %s1669 = scalar_lea.vmem [#allocation5], 144
        %v1670 = vld [vmem:[%s1669] sm:$0xff]
        %v1672 = vsel %vm272, %v1668, 0
        %1674 = vmatprep.subr.mxu0 0.0
        %1675 = vmatpush1.msra.mxu0 %v1670
        %1676 = vmatprep.subr.mxu0 0.0
        %1677 = vmatpush1.msra.mxu0 0.0
        %1678 = vmatprep.subr.mxu0 0.0
        %1679 = vmatpush1.msra.mxu0 0.0
        %1680 = vmatprep.subr.mxu0 0.0
        %1681 = vmatpush1.msra.mxu0 0.0
        %1682 = vmatprep.subr.mxu0 0.0
        %1683 = vmatpush1.msra.mxu0 0.0
        %1684 = vmatprep.subr.mxu0 0.0
        %1685 = vmatpush1.msra.mxu0 0.0
        %1686 = vmatprep.subr.mxu0 0.0
        %1687 = vmatpush1.msra.mxu0 0.0
        %1688 = vmatprep.subr.mxu0 0.0
        %1689 = vmatpush1.msra.mxu0 0.0
        %1690 = vmatprep.subr.mxu0 0.0
        %1691 = vmatpush1.msra.mxu0 0.0
        %1692 = vmatprep.subr.mxu0 0.0
        %1693 = vmatpush1.msra.mxu0 0.0
        %1694 = vmatprep.subr.mxu0 0.0
        %1695 = vmatpush1.msra.mxu0 0.0
        %1696 = vmatprep.subr.mxu0 0.0
        %1697 = vmatpush1.msra.mxu0 0.0
        %1698 = vmatprep.subr.mxu0 0.0
        %1699 = vmatpush1.msra.mxu0 0.0
        %1700 = vmatprep.subr.mxu0 0.0
        %1701 = vmatpush1.msra.mxu0 0.0
        %1702 = vmatprep.subr.mxu0 0.0
        %1703 = vmatpush1.msra.mxu0 0.0
        %1704 = vmatprep.subr.mxu0 0.0
        %1705 = vmatpush1.msra.mxu0 0.0
        %1706 = vmatprep.subr.mxu0 0.0
        %1707 = vmatpush1.msra.mxu0 0.0
        %1708 = vmatprep.subr.mxu0 0.0
        %1709 = vmatpush1.msra.mxu0 0.0
        %1710 = vmatprep.subr.mxu0 0.0
        %1711 = vmatpush1.msra.mxu0 0.0
        %1712 = vmatprep.subr.mxu0 0.0
        %1713 = vmatpush1.msra.mxu0 0.0
        %1714 = vmatprep.subr.mxu0 0.0
        %1715 = vmatpush1.msra.mxu0 0.0
        %1716 = vmatprep.subr.mxu0 0.0
        %1717 = vmatpush1.msra.mxu0 0.0
        %1718 = vmatprep.subr.mxu0 0.0
        %1719 = vmatpush1.msra.mxu0 0.0
        %1720 = vmatprep.subr.mxu0 0.0
        %1721 = vmatpush1.msra.mxu0 0.0
        %1722 = vmatprep.subr.mxu0 0.0
        %1723 = vmatpush1.msra.mxu0 0.0
        %1724 = vmatprep.subr.mxu0 0.0
        %1725 = vmatpush1.msra.mxu0 0.0
        %1726 = vmatprep.subr.mxu0 0.0
        %1727 = vmatpush1.msra.mxu0 0.0
        %1728 = vmatprep.subr.mxu0 0.0
        %1729 = vmatpush1.msra.mxu0 0.0
        %1730 = vmatprep.subr.mxu0 0.0
        %1731 = vmatpush1.msra.mxu0 0.0
        %1732 = vmatprep.subr.mxu0 0.0
        %1733 = vmatpush1.msra.mxu0 0.0
        %1734 = vmatprep.subr.mxu0 0.0
        %1735 = vmatpush1.msra.mxu0 0.0
        %1736 = vmatprep.subr.mxu0 0.0
        %1737 = vmatpush1.msra.mxu0 0.0
        %1738 = vmatprep.mubr.f32.mxu0 0.0
        %1739 = vmatmul.mubr.f32.gmra.mrb[0].mxu0 %v1672
        %v1740 = vpop.f32.mrb[0].mxu0
        %v1741 = vadd.f32 0.0, %v1740
        %v1742 = vpop.f32.mrb[0].mxu0
        %1743 = vdwg.mxu0
        %v1744 = vadd.f32 %v1666, %v1741
        %s1745 = scalar_lea.vmem %s235, 70 [#allocation2]
        %v1746 = vld [vmem:[%s1745] sm:$0x3]
        %s1747 = scalar_lea.vmem [#allocation5], 152
        %v1748 = vld [vmem:[%s1747] sm:$0xff]
        %v1750 = vsel %vm272, %v1746, 0
        %1752 = vmatprep.subr.mxu0 0.0
        %1753 = vmatpush1.msra.mxu0 %v1748
        %1754 = vmatprep.subr.mxu0 0.0
        %1755 = vmatpush1.msra.mxu0 0.0
        %1756 = vmatprep.subr.mxu0 0.0
        %1757 = vmatpush1.msra.mxu0 0.0
        %1758 = vmatprep.subr.mxu0 0.0
        %1759 = vmatpush1.msra.mxu0 0.0
        %1760 = vmatprep.subr.mxu0 0.0
        %1761 = vmatpush1.msra.mxu0 0.0
        %1762 = vmatprep.subr.mxu0 0.0
        %1763 = vmatpush1.msra.mxu0 0.0
        %1764 = vmatprep.subr.mxu0 0.0
        %1765 = vmatpush1.msra.mxu0 0.0
        %1766 = vmatprep.subr.mxu0 0.0
        %1767 = vmatpush1.msra.mxu0 0.0
        %1768 = vmatprep.subr.mxu0 0.0
        %1769 = vmatpush1.msra.mxu0 0.0
        %1770 = vmatprep.subr.mxu0 0.0
        %1771 = vmatpush1.msra.mxu0 0.0
        %1772 = vmatprep.subr.mxu0 0.0
        %1773 = vmatpush1.msra.mxu0 0.0
        %1774 = vmatprep.subr.mxu0 0.0
        %1775 = vmatpush1.msra.mxu0 0.0
        %1776 = vmatprep.subr.mxu0 0.0
        %1777 = vmatpush1.msra.mxu0 0.0
        %1778 = vmatprep.subr.mxu0 0.0
        %1779 = vmatpush1.msra.mxu0 0.0
        %1780 = vmatprep.subr.mxu0 0.0
        %1781 = vmatpush1.msra.mxu0 0.0
        %1782 = vmatprep.subr.mxu0 0.0
        %1783 = vmatpush1.msra.mxu0 0.0
        %1784 = vmatprep.subr.mxu0 0.0
        %1785 = vmatpush1.msra.mxu0 0.0
        %1786 = vmatprep.subr.mxu0 0.0
        %1787 = vmatpush1.msra.mxu0 0.0
        %1788 = vmatprep.subr.mxu0 0.0
        %1789 = vmatpush1.msra.mxu0 0.0
        %1790 = vmatprep.subr.mxu0 0.0
        %1791 = vmatpush1.msra.mxu0 0.0
        %1792 = vmatprep.subr.mxu0 0.0
        %1793 = vmatpush1.msra.mxu0 0.0
        %1794 = vmatprep.subr.mxu0 0.0
        %1795 = vmatpush1.msra.mxu0 0.0
        %1796 = vmatprep.subr.mxu0 0.0
        %1797 = vmatpush1.msra.mxu0 0.0
        %1798 = vmatprep.subr.mxu0 0.0
        %1799 = vmatpush1.msra.mxu0 0.0
        %1800 = vmatprep.subr.mxu0 0.0
        %1801 = vmatpush1.msra.mxu0 0.0
        %1802 = vmatprep.subr.mxu0 0.0
        %1803 = vmatpush1.msra.mxu0 0.0
        %1804 = vmatprep.subr.mxu0 0.0
        %1805 = vmatpush1.msra.mxu0 0.0
        %1806 = vmatprep.subr.mxu0 0.0
        %1807 = vmatpush1.msra.mxu0 0.0
        %1808 = vmatprep.subr.mxu0 0.0
        %1809 = vmatpush1.msra.mxu0 0.0
        %1810 = vmatprep.subr.mxu0 0.0
        %1811 = vmatpush1.msra.mxu0 0.0
        %1812 = vmatprep.subr.mxu0 0.0
        %1813 = vmatpush1.msra.mxu0 0.0
        %1814 = vmatprep.subr.mxu0 0.0
        %1815 = vmatpush1.msra.mxu0 0.0
        %1816 = vmatprep.mubr.f32.mxu0 0.0
        %1817 = vmatmul.mubr.f32.gmra.mrb[0].mxu0 %v1750
        %v1818 = vpop.f32.mrb[0].mxu0
        %v1819 = vadd.f32 0.0, %v1818
        %v1820 = vpop.f32.mrb[0].mxu0
        %1821 = vdwg.mxu0
        %v1822 = vadd.f32 %v1744, %v1819
        %s1823 = scalar_lea.vmem %s235, 72 [#allocation2]
        %v1824 = vld [vmem:[%s1823] sm:$0x3]
        %s1825 = scalar_lea.vmem [#allocation5], 160
        %v1826 = vld [vmem:[%s1825] sm:$0xff]
        %v1828 = vsel %vm272, %v1824, 0
        %1830 = vmatprep.subr.mxu0 0.0
        %1831 = vmatpush1.msra.mxu0 %v1826
        %1832 = vmatprep.subr.mxu0 0.0
        %1833 = vmatpush1.msra.mxu0 0.0
        %1834 = vmatprep.subr.mxu0 0.0
        %1835 = vmatpush1.msra.mxu0 0.0
        %1836 = vmatprep.subr.mxu0 0.0
        %1837 = vmatpush1.msra.mxu0 0.0
        %1838 = vmatprep.subr.mxu0 0.0
        %1839 = vmatpush1.msra.mxu0 0.0
        %1840 = vmatprep.subr.mxu0 0.0
        %1841 = vmatpush1.msra.mxu0 0.0
        %1842 = vmatprep.subr.mxu0 0.0
        %1843 = vmatpush1.msra.mxu0 0.0
        %1844 = vmatprep.subr.mxu0 0.0
        %1845 = vmatpush1.msra.mxu0 0.0
        %1846 = vmatprep.subr.mxu0 0.0
        %1847 = vmatpush1.msra.mxu0 0.0
        %1848 = vmatprep.subr.mxu0 0.0
        %1849 = vmatpush1.msra.mxu0 0.0
        %1850 = vmatprep.subr.mxu0 0.0
        %1851 = vmatpush1.msra.mxu0 0.0
        %1852 = vmatprep.subr.mxu0 0.0
        %1853 = vmatpush1.msra.mxu0 0.0
        %1854 = vmatprep.subr.mxu0 0.0
        %1855 = vmatpush1.msra.mxu0 0.0
        %1856 = vmatprep.subr.mxu0 0.0
        %1857 = vmatpush1.msra.mxu0 0.0
        %1858 = vmatprep.subr.mxu0 0.0
        %1859 = vmatpush1.msra.mxu0 0.0
        %1860 = vmatprep.subr.mxu0 0.0
        %1861 = vmatpush1.msra.mxu0 0.0
        %1862 = vmatprep.subr.mxu0 0.0
        %1863 = vmatpush1.msra.mxu0 0.0
        %1864 = vmatprep.subr.mxu0 0.0
        %1865 = vmatpush1.msra.mxu0 0.0
        %1866 = vmatprep.subr.mxu0 0.0
        %1867 = vmatpush1.msra.mxu0 0.0
        %1868 = vmatprep.subr.mxu0 0.0
        %1869 = vmatpush1.msra.mxu0 0.0
        %1870 = vmatprep.subr.mxu0 0.0
        %1871 = vmatpush1.msra.mxu0 0.0
        %1872 = vmatprep.subr.mxu0 0.0
        %1873 = vmatpush1.msra.mxu0 0.0
        %1874 = vmatprep.subr.mxu0 0.0
        %1875 = vmatpush1.msra.mxu0 0.0
        %1876 = vmatprep.subr.mxu0 0.0
        %1877 = vmatpush1.msra.mxu0 0.0
        %1878 = vmatprep.subr.mxu0 0.0
        %1879 = vmatpush1.msra.mxu0 0.0
        %1880 = vmatprep.subr.mxu0 0.0
        %1881 = vmatpush1.msra.mxu0 0.0
        %1882 = vmatprep.subr.mxu0 0.0
        %1883 = vmatpush1.msra.mxu0 0.0
        %1884 = vmatprep.subr.mxu0 0.0
        %1885 = vmatpush1.msra.mxu0 0.0
        %1886 = vmatprep.subr.mxu0 0.0
        %1887 = vmatpush1.msra.mxu0 0.0
        %1888 = vmatprep.subr.mxu0 0.0
        %1889 = vmatpush1.msra.mxu0 0.0
        %1890 = vmatprep.subr.mxu0 0.0
        %1891 = vmatpush1.msra.mxu0 0.0
        %1892 = vmatprep.subr.mxu0 0.0
        %1893 = vmatpush1.msra.mxu0 0.0
        %1894 = vmatprep.mubr.f32.mxu0 0.0
        %1895 = vmatmul.mubr.f32.gmra.mrb[0].mxu0 %v1828
        %v1896 = vpop.f32.mrb[0].mxu0
        %v1897 = vadd.f32 0.0, %v1896
        %v1898 = vpop.f32.mrb[0].mxu0
        %1899 = vdwg.mxu0
        %v1900 = vadd.f32 %v1822, %v1897
        %s1901 = scalar_lea.vmem %s235, 74 [#allocation2]
        %v1902 = vld [vmem:[%s1901] sm:$0x3]
        %s1903 = scalar_lea.vmem [#allocation5], 168
        %v1904 = vld [vmem:[%s1903] sm:$0xff]
        %v1906 = vsel %vm272, %v1902, 0
        %1908 = vmatprep.subr.mxu0 0.0
        %1909 = vmatpush1.msra.mxu0 %v1904
        %1910 = vmatprep.subr.mxu0 0.0
        %1911 = vmatpush1.msra.mxu0 0.0
        %1912 = vmatprep.subr.mxu0 0.0
        %1913 = vmatpush1.msra.mxu0 0.0
        %1914 = vmatprep.subr.mxu0 0.0
        %1915 = vmatpush1.msra.mxu0 0.0
        %1916 = vmatprep.subr.mxu0 0.0
        %1917 = vmatpush1.msra.mxu0 0.0
        %1918 = vmatprep.subr.mxu0 0.0
        %1919 = vmatpush1.msra.mxu0 0.0
        %1920 = vmatprep.subr.mxu0 0.0
        %1921 = vmatpush1.msra.mxu0 0.0
        %1922 = vmatprep.subr.mxu0 0.0
        %1923 = vmatpush1.msra.mxu0 0.0
        %1924 = vmatprep.subr.mxu0 0.0
        %1925 = vmatpush1.msra.mxu0 0.0
        %1926 = vmatprep.subr.mxu0 0.0
        %1927 = vmatpush1.msra.mxu0 0.0
        %1928 = vmatprep.subr.mxu0 0.0
        %1929 = vmatpush1.msra.mxu0 0.0
        %1930 = vmatprep.subr.mxu0 0.0
        %1931 = vmatpush1.msra.mxu0 0.0
        %1932 = vmatprep.subr.mxu0 0.0
        %1933 = vmatpush1.msra.mxu0 0.0
        %1934 = vmatprep.subr.mxu0 0.0
        %1935 = vmatpush1.msra.mxu0 0.0
        %1936 = vmatprep.subr.mxu0 0.0
        %1937 = vmatpush1.msra.mxu0 0.0
        %1938 = vmatprep.subr.mxu0 0.0
        %1939 = vmatpush1.msra.mxu0 0.0
        %1940 = vmatprep.subr.mxu0 0.0
        %1941 = vmatpush1.msra.mxu0 0.0
        %1942 = vmatprep.subr.mxu0 0.0
        %1943 = vmatpush1.msra.mxu0 0.0
        %1944 = vmatprep.subr.mxu0 0.0
        %1945 = vmatpush1.msra.mxu0 0.0
        %1946 = vmatprep.subr.mxu0 0.0
        %1947 = vmatpush1.msra.mxu0 0.0
        %1948 = vmatprep.subr.mxu0 0.0
        %1949 = vmatpush1.msra.mxu0 0.0
        %1950 = vmatprep.subr.mxu0 0.0
        %1951 = vmatpush1.msra.mxu0 0.0
        %1952 = vmatprep.subr.mxu0 0.0
        %1953 = vmatpush1.msra.mxu0 0.0
        %1954 = vmatprep.subr.mxu0 0.0
        %1955 = vmatpush1.msra.mxu0 0.0
        %1956 = vmatprep.subr.mxu0 0.0
        %1957 = vmatpush1.msra.mxu0 0.0
        %1958 = vmatprep.subr.mxu0 0.0
        %1959 = vmatpush1.msra.mxu0 0.0
        %1960 = vmatprep.subr.mxu0 0.0
        %1961 = vmatpush1.msra.mxu0 0.0
        %1962 = vmatprep.subr.mxu0 0.0
        %1963 = vmatpush1.msra.mxu0 0.0
        %1964 = vmatprep.subr.mxu0 0.0
        %1965 = vmatpush1.msra.mxu0 0.0
        %1966 = vmatprep.subr.mxu0 0.0
        %1967 = vmatpush1.msra.mxu0 0.0
        %1968 = vmatprep.subr.mxu0 0.0
        %1969 = vmatpush1.msra.mxu0 0.0
        %1970 = vmatprep.subr.mxu0 0.0
        %1971 = vmatpush1.msra.mxu0 0.0
        %1972 = vmatprep.mubr.f32.mxu0 0.0
        %1973 = vmatmul.mubr.f32.gmra.mrb[0].mxu0 %v1906
        %v1974 = vpop.f32.mrb[0].mxu0
        %v1975 = vadd.f32 0.0, %v1974
        %v1976 = vpop.f32.mrb[0].mxu0
        %1977 = vdwg.mxu0
        %v1978 = vadd.f32 %v1900, %v1975
        %s1979 = scalar_lea.vmem %s235, 76 [#allocation2]
        %v1980 = vld [vmem:[%s1979] sm:$0x3]
        %s1981 = scalar_lea.vmem [#allocation5], 176
        %v1982 = vld [vmem:[%s1981] sm:$0xff]
        %v1984 = vsel %vm272, %v1980, 0
        %1986 = vmatprep.subr.mxu0 0.0
        %1987 = vmatpush1.msra.mxu0 %v1982
        %1988 = vmatprep.subr.mxu0 0.0
        %1989 = vmatpush1.msra.mxu0 0.0
        %1990 = vmatprep.subr.mxu0 0.0
        %1991 = vmatpush1.msra.mxu0 0.0
        %1992 = vmatprep.subr.mxu0 0.0
        %1993 = vmatpush1.msra.mxu0 0.0
        %1994 = vmatprep.subr.mxu0 0.0
        %1995 = vmatpush1.msra.mxu0 0.0
        %1996 = vmatprep.subr.mxu0 0.0
        %1997 = vmatpush1.msra.mxu0 0.0
        %1998 = vmatprep.subr.mxu0 0.0
        %1999 = vmatpush1.msra.mxu0 0.0
        %2000 = vmatprep.subr.mxu0 0.0
        %2001 = vmatpush1.msra.mxu0 0.0
        %2002 = vmatprep.subr.mxu0 0.0
        %2003 = vmatpush1.msra.mxu0 0.0
        %2004 = vmatprep.subr.mxu0 0.0
        %2005 = vmatpush1.msra.mxu0 0.0
        %2006 = vmatprep.subr.mxu0 0.0
        %2007 = vmatpush1.msra.mxu0 0.0
        %2008 = vmatprep.subr.mxu0 0.0
        %2009 = vmatpush1.msra.mxu0 0.0
        %2010 = vmatprep.subr.mxu0 0.0
        %2011 = vmatpush1.msra.mxu0 0.0
        %2012 = vmatprep.subr.mxu0 0.0
        %2013 = vmatpush1.msra.mxu0 0.0
        %2014 = vmatprep.subr.mxu0 0.0
        %2015 = vmatpush1.msra.mxu0 0.0
        %2016 = vmatprep.subr.mxu0 0.0
        %2017 = vmatpush1.msra.mxu0 0.0
        %2018 = vmatprep.subr.mxu0 0.0
        %2019 = vmatpush1.msra.mxu0 0.0
        %2020 = vmatprep.subr.mxu0 0.0
        %2021 = vmatpush1.msra.mxu0 0.0
        %2022 = vmatprep.subr.mxu0 0.0
        %2023 = vmatpush1.msra.mxu0 0.0
        %2024 = vmatprep.subr.mxu0 0.0
        %2025 = vmatpush1.msra.mxu0 0.0
        %2026 = vmatprep.subr.mxu0 0.0
        %2027 = vmatpush1.msra.mxu0 0.0
        %2028 = vmatprep.subr.mxu0 0.0
        %2029 = vmatpush1.msra.mxu0 0.0
        %2030 = vmatprep.subr.mxu0 0.0
        %2031 = vmatpush1.msra.mxu0 0.0
        %2032 = vmatprep.subr.mxu0 0.0
        %2033 = vmatpush1.msra.mxu0 0.0
        %2034 = vmatprep.subr.mxu0 0.0
        %2035 = vmatpush1.msra.mxu0 0.0
        %2036 = vmatprep.subr.mxu0 0.0
        %2037 = vmatpush1.msra.mxu0 0.0
        %2038 = vmatprep.subr.mxu0 0.0
        %2039 = vmatpush1.msra.mxu0 0.0
        %2040 = vmatprep.subr.mxu0 0.0
        %2041 = vmatpush1.msra.mxu0 0.0
        %2042 = vmatprep.subr.mxu0 0.0
        %2043 = vmatpush1.msra.mxu0 0.0
        %2044 = vmatprep.subr.mxu0 0.0
        %2045 = vmatpush1.msra.mxu0 0.0
        %2046 = vmatprep.subr.mxu0 0.0
        %2047 = vmatpush1.msra.mxu0 0.0
        %2048 = vmatprep.subr.mxu0 0.0
        %2049 = vmatpush1.msra.mxu0 0.0
        %2050 = vmatprep.mubr.f32.mxu0 0.0
        %2051 = vmatmul.mubr.f32.gmra.mrb[0].mxu0 %v1984
        %v2052 = vpop.f32.mrb[0].mxu0
        %v2053 = vadd.f32 0.0, %v2052
        %v2054 = vpop.f32.mrb[0].mxu0
        %2055 = vdwg.mxu0
        %v2056 = vadd.f32 %v1978, %v2053
        %s2057 = scalar_lea.vmem %s235, 78 [#allocation2]
        %v2058 = vld [vmem:[%s2057] sm:$0x3]
        %s2059 = scalar_lea.vmem [#allocation5], 184
        %v2060 = vld [vmem:[%s2059] sm:$0xff]
        %v2062 = vsel %vm272, %v2058, 0
        %2064 = vmatprep.subr.mxu0 0.0
        %2065 = vmatpush1.msra.mxu0 %v2060
        %2066 = vmatprep.subr.mxu0 0.0
        %2067 = vmatpush1.msra.mxu0 0.0
        %2068 = vmatprep.subr.mxu0 0.0
        %2069 = vmatpush1.msra.mxu0 0.0
        %2070 = vmatprep.subr.mxu0 0.0
        %2071 = vmatpush1.msra.mxu0 0.0
        %2072 = vmatprep.subr.mxu0 0.0
        %2073 = vmatpush1.msra.mxu0 0.0
        %2074 = vmatprep.subr.mxu0 0.0
        %2075 = vmatpush1.msra.mxu0 0.0
        %2076 = vmatprep.subr.mxu0 0.0
        %2077 = vmatpush1.msra.mxu0 0.0
        %2078 = vmatprep.subr.mxu0 0.0
        %2079 = vmatpush1.msra.mxu0 0.0
        %2080 = vmatprep.subr.mxu0 0.0
        %2081 = vmatpush1.msra.mxu0 0.0
        %2082 = vmatprep.subr.mxu0 0.0
        %2083 = vmatpush1.msra.mxu0 0.0
        %2084 = vmatprep.subr.mxu0 0.0
        %2085 = vmatpush1.msra.mxu0 0.0
        %2086 = vmatprep.subr.mxu0 0.0
        %2087 = vmatpush1.msra.mxu0 0.0
        %2088 = vmatprep.subr.mxu0 0.0
        %2089 = vmatpush1.msra.mxu0 0.0
        %2090 = vmatprep.subr.mxu0 0.0
        %2091 = vmatpush1.msra.mxu0 0.0
        %2092 = vmatprep.subr.mxu0 0.0
        %2093 = vmatpush1.msra.mxu0 0.0
        %2094 = vmatprep.subr.mxu0 0.0
        %2095 = vmatpush1.msra.mxu0 0.0
        %2096 = vmatprep.subr.mxu0 0.0
        %2097 = vmatpush1.msra.mxu0 0.0
        %2098 = vmatprep.subr.mxu0 0.0
        %2099 = vmatpush1.msra.mxu0 0.0
        %2100 = vmatprep.subr.mxu0 0.0
        %2101 = vmatpush1.msra.mxu0 0.0
        %2102 = vmatprep.subr.mxu0 0.0
        %2103 = vmatpush1.msra.mxu0 0.0
        %2104 = vmatprep.subr.mxu0 0.0
        %2105 = vmatpush1.msra.mxu0 0.0
        %2106 = vmatprep.subr.mxu0 0.0
        %2107 = vmatpush1.msra.mxu0 0.0
        %2108 = vmatprep.subr.mxu0 0.0
        %2109 = vmatpush1.msra.mxu0 0.0
        %2110 = vmatprep.subr.mxu0 0.0
        %2111 = vmatpush1.msra.mxu0 0.0
        %2112 = vmatprep.subr.mxu0 0.0
        %2113 = vmatpush1.msra.mxu0 0.0
        %2114 = vmatprep.subr.mxu0 0.0
        %2115 = vmatpush1.msra.mxu0 0.0
        %2116 = vmatprep.subr.mxu0 0.0
        %2117 = vmatpush1.msra.mxu0 0.0
        %2118 = vmatprep.subr.mxu0 0.0
        %2119 = vmatpush1.msra.mxu0 0.0
        %2120 = vmatprep.subr.mxu0 0.0
        %2121 = vmatpush1.msra.mxu0 0.0
        %2122 = vmatprep.subr.mxu0 0.0
        %2123 = vmatpush1.msra.mxu0 0.0
        %2124 = vmatprep.subr.mxu0 0.0
        %2125 = vmatpush1.msra.mxu0 0.0
        %2126 = vmatprep.subr.mxu0 0.0
        %2127 = vmatpush1.msra.mxu0 0.0
        %2128 = vmatprep.mubr.f32.mxu0 0.0
        %2129 = vmatmul.mubr.f32.gmra.mrb[0].mxu0 %v2062
        %v2130 = vpop.f32.mrb[0].mxu0
        %v2131 = vadd.f32 0.0, %v2130
        %v2132 = vpop.f32.mrb[0].mxu0
        %2133 = vdwg.mxu0
        %v2134 = vadd.f32 %v2056, %v2131
        %v2136 = vlaneseq
        %v2137 = vshrl.u32 %v2136, 7
        %v2138 = vsub.s32 0, %v2137
        %v2139 = vrot.slane %v265, %v2138
        %v2141 = vadd.f32 %v2134, %v2139
        %2142 = vst [vmem:[%s261] sm:$0x3] %v2141
        %s2143 = scalar_lea.vmem %s235, 16 [#allocation2]
        %v2144 = vld [vmem:[%s2143] sm:$0x3]
        %v2145 = vld [vmem:[#allocation5] sm:$0xff]
        %s2146 = scalar_lea.vmem %s235, 18 [#allocation2]
        %v2147 = vld [vmem:[%s2146] sm:$0x3]
        %v2148 = vld [vmem:[%s270] sm:$0xff]
        %v2150 = vsel %vm272, %v2147, 0
        %2152 = vmatprep.subr.mxu0 0.0
        %2153 = vmatpush1.msra.mxu0 %v2148
        %2154 = vmatprep.subr.mxu0 0.0
        %2155 = vmatpush1.msra.mxu0 0.0
        %2156 = vmatprep.subr.mxu0 0.0
        %2157 = vmatpush1.msra.mxu0 0.0
        %2158 = vmatprep.subr.mxu0 0.0
        %2159 = vmatpush1.msra.mxu0 0.0
        %2160 = vmatprep.subr.mxu0 0.0
        %2161 = vmatpush1.msra.mxu0 0.0
        %2162 = vmatprep.subr.mxu0 0.0
        %2163 = vmatpush1.msra.mxu0 0.0
        %2164 = vmatprep.subr.mxu0 0.0
        %2165 = vmatpush1.msra.mxu0 0.0
        %2166 = vmatprep.subr.mxu0 0.0
        %2167 = vmatpush1.msra.mxu0 0.0
        %2168 = vmatprep.subr.mxu0 0.0
        %2169 = vmatpush1.msra.mxu0 0.0
        %2170 = vmatprep.subr.mxu0 0.0
        %2171 = vmatpush1.msra.mxu0 0.0
        %2172 = vmatprep.subr.mxu0 0.0
        %2173 = vmatpush1.msra.mxu0 0.0
        %2174 = vmatprep.subr.mxu0 0.0
        %2175 = vmatpush1.msra.mxu0 0.0
        %2176 = vmatprep.subr.mxu0 0.0
        %2177 = vmatpush1.msra.mxu0 0.0
        %2178 = vmatprep.subr.mxu0 0.0
        %2179 = vmatpush1.msra.mxu0 0.0
        %2180 = vmatprep.subr.mxu0 0.0
        %2181 = vmatpush1.msra.mxu0 0.0
        %2182 = vmatprep.subr.mxu0 0.0
        %2183 = vmatpush1.msra.mxu0 0.0
        %2184 = vmatprep.subr.mxu0 0.0
        %2185 = vmatpush1.msra.mxu0 0.0
        %2186 = vmatprep.subr.mxu0 0.0
        %2187 = vmatpush1.msra.mxu0 0.0
        %2188 = vmatprep.subr.mxu0 0.0
        %2189 = vmatpush1.msra.mxu0 0.0
        %2190 = vmatprep.subr.mxu0 0.0
        %2191 = vmatpush1.msra.mxu0 0.0
        %2192 = vmatprep.subr.mxu0 0.0
        %2193 = vmatpush1.msra.mxu0 0.0
        %2194 = vmatprep.subr.mxu0 0.0
        %2195 = vmatpush1.msra.mxu0 0.0
        %2196 = vmatprep.subr.mxu0 0.0
        %2197 = vmatpush1.msra.mxu0 0.0
        %2198 = vmatprep.subr.mxu0 0.0
        %2199 = vmatpush1.msra.mxu0 0.0
        %2200 = vmatprep.subr.mxu0 0.0
        %2201 = vmatpush1.msra.mxu0 0.0
        %2202 = vmatprep.subr.mxu0 0.0
        %2203 = vmatpush1.msra.mxu0 0.0
        %2204 = vmatprep.subr.mxu0 0.0
        %2205 = vmatpush1.msra.mxu0 0.0
        %2206 = vmatprep.subr.mxu0 0.0
        %2207 = vmatpush1.msra.mxu0 0.0
        %2208 = vmatprep.subr.mxu0 0.0
        %2209 = vmatpush1.msra.mxu0 0.0
        %2210 = vmatprep.subr.mxu0 0.0
        %2211 = vmatpush1.msra.mxu0 0.0
        %2212 = vmatprep.subr.mxu0 0.0
        %2213 = vmatpush1.msra.mxu0 0.0
        %2214 = vmatprep.subr.mxu0 0.0
        %2215 = vmatpush1.msra.mxu0 0.0
        %2216 = vmatprep.mubr.f32.mxu0 0.0
        %2217 = vmatmul.mubr.f32.gmra.mrb[0].mxu0 %v2150
        %v2218 = vpop.f32.mrb[0].mxu0
        %v2219 = vadd.f32 0.0, %v2218
        %v2220 = vpop.f32.mrb[0].mxu0
        %2221 = vdwg.mxu0
        %v2223 = vsel %vm272, %v2144, 0
        %2225 = vmatprep.subr.mxu0 0.0
        %2226 = vmatpush1.msra.mxu0 %v2145
        %2227 = vmatprep.subr.mxu0 0.0
        %2228 = vmatpush1.msra.mxu0 0.0
        %2229 = vmatprep.subr.mxu0 0.0
        %2230 = vmatpush1.msra.mxu0 0.0
        %2231 = vmatprep.subr.mxu0 0.0
        %2232 = vmatpush1.msra.mxu0 0.0
        %2233 = vmatprep.subr.mxu0 0.0
        %2234 = vmatpush1.msra.mxu0 0.0
        %2235 = vmatprep.subr.mxu0 0.0
        %2236 = vmatpush1.msra.mxu0 0.0
        %2237 = vmatprep.subr.mxu0 0.0
        %2238 = vmatpush1.msra.mxu0 0.0
        %2239 = vmatprep.subr.mxu0 0.0
        %2240 = vmatpush1.msra.mxu0 0.0
        %2241 = vmatprep.subr.mxu0 0.0
        %2242 = vmatpush1.msra.mxu0 0.0
        %2243 = vmatprep.subr.mxu0 0.0
        %2244 = vmatpush1.msra.mxu0 0.0
        %2245 = vmatprep.subr.mxu0 0.0
        %2246 = vmatpush1.msra.mxu0 0.0
        %2247 = vmatprep.subr.mxu0 0.0
        %2248 = vmatpush1.msra.mxu0 0.0
        %2249 = vmatprep.subr.mxu0 0.0
        %2250 = vmatpush1.msra.mxu0 0.0
        %2251 = vmatprep.subr.mxu0 0.0
        %2252 = vmatpush1.msra.mxu0 0.0
        %2253 = vmatprep.subr.mxu0 0.0
        %2254 = vmatpush1.msra.mxu0 0.0
        %2255 = vmatprep.subr.mxu0 0.0
        %2256 = vmatpush1.msra.mxu0 0.0
        %2257 = vmatprep.subr.mxu0 0.0
        %2258 = vmatpush1.msra.mxu0 0.0
        %2259 = vmatprep.subr.mxu0 0.0
        %2260 = vmatpush1.msra.mxu0 0.0
        %2261 = vmatprep.subr.mxu0 0.0
        %2262 = vmatpush1.msra.mxu0 0.0
        %2263 = vmatprep.subr.mxu0 0.0
        %2264 = vmatpush1.msra.mxu0 0.0
        %2265 = vmatprep.subr.mxu0 0.0
        %2266 = vmatpush1.msra.mxu0 0.0
        %2267 = vmatprep.subr.mxu0 0.0
        %2268 = vmatpush1.msra.mxu0 0.0
        %2269 = vmatprep.subr.mxu0 0.0
        %2270 = vmatpush1.msra.mxu0 0.0
        %2271 = vmatprep.subr.mxu0 0.0
        %2272 = vmatpush1.msra.mxu0 0.0
        %2273 = vmatprep.subr.mxu0 0.0
        %2274 = vmatpush1.msra.mxu0 0.0
        %2275 = vmatprep.subr.mxu0 0.0
        %2276 = vmatpush1.msra.mxu0 0.0
        %2277 = vmatprep.subr.mxu0 0.0
        %2278 = vmatpush1.msra.mxu0 0.0
        %2279 = vmatprep.subr.mxu0 0.0
        %2280 = vmatpush1.msra.mxu0 0.0
        %2281 = vmatprep.subr.mxu0 0.0
        %2282 = vmatpush1.msra.mxu0 0.0
        %2283 = vmatprep.subr.mxu0 0.0
        %2284 = vmatpush1.msra.mxu0 0.0
        %2285 = vmatprep.subr.mxu0 0.0
        %2286 = vmatpush1.msra.mxu0 0.0
        %2287 = vmatprep.subr.mxu0 0.0
        %2288 = vmatpush1.msra.mxu0 0.0
        %2289 = vmatprep.mubr.f32.mxu0 0.0
        %2290 = vmatmul.mubr.f32.gmra.mrb[0].mxu0 %v2223
        %v2291 = vpop.f32.mrb[0].mxu0
        %v2292 = vadd.f32 %v2219, %v2291
        %v2293 = vpop.f32.mrb[0].mxu0
        %2294 = vdwg.mxu0
        %s2295 = scalar_lea.vmem %s235, 20 [#allocation2]
        %v2296 = vld [vmem:[%s2295] sm:$0x3]
        %v2297 = vld [vmem:[%s421] sm:$0xff]
        %v2299 = vsel %vm272, %v2296, 0
        %2301 = vmatprep.subr.mxu0 0.0
        %2302 = vmatpush1.msra.mxu0 %v2297
        %2303 = vmatprep.subr.mxu0 0.0
        %2304 = vmatpush1.msra.mxu0 0.0
        %2305 = vmatprep.subr.mxu0 0.0
        %2306 = vmatpush1.msra.mxu0 0.0
        %2307 = vmatprep.subr.mxu0 0.0
        %2308 = vmatpush1.msra.mxu0 0.0
        %2309 = vmatprep.subr.mxu0 0.0
        %2310 = vmatpush1.msra.mxu0 0.0
        %2311 = vmatprep.subr.mxu0 0.0
        %2312 = vmatpush1.msra.mxu0 0.0
        %2313 = vmatprep.subr.mxu0 0.0
        %2314 = vmatpush1.msra.mxu0 0.0
        %2315 = vmatprep.subr.mxu0 0.0
        %2316 = vmatpush1.msra.mxu0 0.0
        %2317 = vmatprep.subr.mxu0 0.0
        %2318 = vmatpush1.msra.mxu0 0.0
        %2319 = vmatprep.subr.mxu0 0.0
        %2320 = vmatpush1.msra.mxu0 0.0
        %2321 = vmatprep.subr.mxu0 0.0
        %2322 = vmatpush1.msra.mxu0 0.0
        %2323 = vmatprep.subr.mxu0 0.0
        %2324 = vmatpush1.msra.mxu0 0.0
        %2325 = vmatprep.subr.mxu0 0.0
        %2326 = vmatpush1.msra.mxu0 0.0
        %2327 = vmatprep.subr.mxu0 0.0
        %2328 = vmatpush1.msra.mxu0 0.0
        %2329 = vmatprep.subr.mxu0 0.0
        %2330 = vmatpush1.msra.mxu0 0.0
        %2331 = vmatprep.subr.mxu0 0.0
        %2332 = vmatpush1.msra.mxu0 0.0
        %2333 = vmatprep.subr.mxu0 0.0
        %2334 = vmatpush1.msra.mxu0 0.0
        %2335 = vmatprep.subr.mxu0 0.0
        %2336 = vmatpush1.msra.mxu0 0.0
        %2337 = vmatprep.subr.mxu0 0.0
        %2338 = vmatpush1.msra.mxu0 0.0
        %2339 = vmatprep.subr.mxu0 0.0
        %2340 = vmatpush1.msra.mxu0 0.0
        %2341 = vmatprep.subr.mxu0 0.0
        %2342 = vmatpush1.msra.mxu0 0.0
        %2343 = vmatprep.subr.mxu0 0.0
        %2344 = vmatpush1.msra.mxu0 0.0
        %2345 = vmatprep.subr.mxu0 0.0
        %2346 = vmatpush1.msra.mxu0 0.0
        %2347 = vmatprep.subr.mxu0 0.0
        %2348 = vmatpush1.msra.mxu0 0.0
        %2349 = vmatprep.subr.mxu0 0.0
        %2350 = vmatpush1.msra.mxu0 0.0
        %2351 = vmatprep.subr.mxu0 0.0
        %2352 = vmatpush1.msra.mxu0 0.0
        %2353 = vmatprep.subr.mxu0 0.0
        %2354 = vmatpush1.msra.mxu0 0.0
        %2355 = vmatprep.subr.mxu0 0.0
        %2356 = vmatpush1.msra.mxu0 0.0
        %2357 = vmatprep.subr.mxu0 0.0
        %2358 = vmatpush1.msra.mxu0 0.0
        %2359 = vmatprep.subr.mxu0 0.0
        %2360 = vmatpush1.msra.mxu0 0.0
        %2361 = vmatprep.subr.mxu0 0.0
        %2362 = vmatpush1.msra.mxu0 0.0
        %2363 = vmatprep.subr.mxu0 0.0
        %2364 = vmatpush1.msra.mxu0 0.0
        %2365 = vmatprep.mubr.f32.mxu0 0.0
        %2366 = vmatmul.mubr.f32.gmra.mrb[0].mxu0 %v2299
        %v2367 = vpop.f32.mrb[0].mxu0
        %v2368 = vadd.f32 0.0, %v2367
        %v2369 = vpop.f32.mrb[0].mxu0
        %2370 = vdwg.mxu0
        %v2371 = vadd.f32 %v2292, %v2368
        %s2372 = scalar_lea.vmem %s235, 22 [#allocation2]
        %v2373 = vld [vmem:[%s2372] sm:$0x3]
        %v2374 = vld [vmem:[%s499] sm:$0xff]
        %v2376 = vsel %vm272, %v2373, 0
        %2378 = vmatprep.subr.mxu0 0.0
        %2379 = vmatpush1.msra.mxu0 %v2374
        %2380 = vmatprep.subr.mxu0 0.0
        %2381 = vmatpush1.msra.mxu0 0.0
        %2382 = vmatprep.subr.mxu0 0.0
        %2383 = vmatpush1.msra.mxu0 0.0
        %2384 = vmatprep.subr.mxu0 0.0
        %2385 = vmatpush1.msra.mxu0 0.0
        %2386 = vmatprep.subr.mxu0 0.0
        %2387 = vmatpush1.msra.mxu0 0.0
        %2388 = vmatprep.subr.mxu0 0.0
        %2389 = vmatpush1.msra.mxu0 0.0
        %2390 = vmatprep.subr.mxu0 0.0
        %2391 = vmatpush1.msra.mxu0 0.0
        %2392 = vmatprep.subr.mxu0 0.0
        %2393 = vmatpush1.msra.mxu0 0.0
        %2394 = vmatprep.subr.mxu0 0.0
        %2395 = vmatpush1.msra.mxu0 0.0
        %2396 = vmatprep.subr.mxu0 0.0
        %2397 = vmatpush1.msra.mxu0 0.0
        %2398 = vmatprep.subr.mxu0 0.0
        %2399 = vmatpush1.msra.mxu0 0.0
        %2400 = vmatprep.subr.mxu0 0.0
        %2401 = vmatpush1.msra.mxu0 0.0
        %2402 = vmatprep.subr.mxu0 0.0
        %2403 = vmatpush1.msra.mxu0 0.0
        %2404 = vmatprep.subr.mxu0 0.0
        %2405 = vmatpush1.msra.mxu0 0.0
        %2406 = vmatprep.subr.mxu0 0.0
        %2407 = vmatpush1.msra.mxu0 0.0
        %2408 = vmatprep.subr.mxu0 0.0
        %2409 = vmatpush1.msra.mxu0 0.0
        %2410 = vmatprep.subr.mxu0 0.0
        %2411 = vmatpush1.msra.mxu0 0.0
        %2412 = vmatprep.subr.mxu0 0.0
        %2413 = vmatpush1.msra.mxu0 0.0
        %2414 = vmatprep.subr.mxu0 0.0
        %2415 = vmatpush1.msra.mxu0 0.0
        %2416 = vmatprep.subr.mxu0 0.0
        %2417 = vmatpush1.msra.mxu0 0.0
        %2418 = vmatprep.subr.mxu0 0.0
        %2419 = vmatpush1.msra.mxu0 0.0
        %2420 = vmatprep.subr.mxu0 0.0
        %2421 = vmatpush1.msra.mxu0 0.0
        %2422 = vmatprep.subr.mxu0 0.0
        %2423 = vmatpush1.msra.mxu0 0.0
        %2424 = vmatprep.subr.mxu0 0.0
        %2425 = vmatpush1.msra.mxu0 0.0
        %2426 = vmatprep.subr.mxu0 0.0
        %2427 = vmatpush1.msra.mxu0 0.0
        %2428 = vmatprep.subr.mxu0 0.0
        %2429 = vmatpush1.msra.mxu0 0.0
        %2430 = vmatprep.subr.mxu0 0.0
        %2431 = vmatpush1.msra.mxu0 0.0
        %2432 = vmatprep.subr.mxu0 0.0
        %2433 = vmatpush1.msra.mxu0 0.0
        %2434 = vmatprep.subr.mxu0 0.0
        %2435 = vmatpush1.msra.mxu0 0.0
        %2436 = vmatprep.subr.mxu0 0.0
        %2437 = vmatpush1.msra.mxu0 0.0
        %2438 = vmatprep.subr.mxu0 0.0
        %2439 = vmatpush1.msra.mxu0 0.0
        %2440 = vmatprep.subr.mxu0 0.0
        %2441 = vmatpush1.msra.mxu0 0.0
        %2442 = vmatprep.mubr.f32.mxu0 0.0
        %2443 = vmatmul.mubr.f32.gmra.mrb[0].mxu0 %v2376
        %v2444 = vpop.f32.mrb[0].mxu0
        %v2445 = vadd.f32 0.0, %v2444
        %v2446 = vpop.f32.mrb[0].mxu0
        %2447 = vdwg.mxu0
        %v2448 = vadd.f32 %v2371, %v2445
        %s2449 = scalar_lea.vmem %s235, 24 [#allocation2]
        %v2450 = vld [vmem:[%s2449] sm:$0x3]
        %v2451 = vld [vmem:[%s577] sm:$0xff]
        %v2453 = vsel %vm272, %v2450, 0
        %2455 = vmatprep.subr.mxu0 0.0
        %2456 = vmatpush1.msra.mxu0 %v2451
        %2457 = vmatprep.subr.mxu0 0.0
        %2458 = vmatpush1.msra.mxu0 0.0
        %2459 = vmatprep.subr.mxu0 0.0
        %2460 = vmatpush1.msra.mxu0 0.0
        %2461 = vmatprep.subr.mxu0 0.0
        %2462 = vmatpush1.msra.mxu0 0.0
        %2463 = vmatprep.subr.mxu0 0.0
        %2464 = vmatpush1.msra.mxu0 0.0
        %2465 = vmatprep.subr.mxu0 0.0
        %2466 = vmatpush1.msra.mxu0 0.0
        %2467 = vmatprep.subr.mxu0 0.0
        %2468 = vmatpush1.msra.mxu0 0.0
        %2469 = vmatprep.subr.mxu0 0.0
        %2470 = vmatpush1.msra.mxu0 0.0
        %2471 = vmatprep.subr.mxu0 0.0
        %2472 = vmatpush1.msra.mxu0 0.0
        %2473 = vmatprep.subr.mxu0 0.0
        %2474 = vmatpush1.msra.mxu0 0.0
        %2475 = vmatprep.subr.mxu0 0.0
        %2476 = vmatpush1.msra.mxu0 0.0
        %2477 = vmatprep.subr.mxu0 0.0
        %2478 = vmatpush1.msra.mxu0 0.0
        %2479 = vmatprep.subr.mxu0 0.0
        %2480 = vmatpush1.msra.mxu0 0.0
        %2481 = vmatprep.subr.mxu0 0.0
        %2482 = vmatpush1.msra.mxu0 0.0
        %2483 = vmatprep.subr.mxu0 0.0
        %2484 = vmatpush1.msra.mxu0 0.0
        %2485 = vmatprep.subr.mxu0 0.0
        %2486 = vmatpush1.msra.mxu0 0.0
        %2487 = vmatprep.subr.mxu0 0.0
        %2488 = vmatpush1.msra.mxu0 0.0
        %2489 = vmatprep.subr.mxu0 0.0
        %2490 = vmatpush1.msra.mxu0 0.0
        %2491 = vmatprep.subr.mxu0 0.0
        %2492 = vmatpush1.msra.mxu0 0.0
        %2493 = vmatprep.subr.mxu0 0.0
        %2494 = vmatpush1.msra.mxu0 0.0
        %2495 = vmatprep.subr.mxu0 0.0
        %2496 = vmatpush1.msra.mxu0 0.0
        %2497 = vmatprep.subr.mxu0 0.0
        %2498 = vmatpush1.msra.mxu0 0.0
        %2499 = vmatprep.subr.mxu0 0.0
        %2500 = vmatpush1.msra.mxu0 0.0
        %2501 = vmatprep.subr.mxu0 0.0
        %2502 = vmatpush1.msra.mxu0 0.0
        %2503 = vmatprep.subr.mxu0 0.0
        %2504 = vmatpush1.msra.mxu0 0.0
        %2505 = vmatprep.subr.mxu0 0.0
        %2506 = vmatpush1.msra.mxu0 0.0
        %2507 = vmatprep.subr.mxu0 0.0
        %2508 = vmatpush1.msra.mxu0 0.0
        %2509 = vmatprep.subr.mxu0 0.0
        %2510 = vmatpush1.msra.mxu0 0.0
        %2511 = vmatprep.subr.mxu0 0.0
        %2512 = vmatpush1.msra.mxu0 0.0
        %2513 = vmatprep.subr.mxu0 0.0
        %2514 = vmatpush1.msra.mxu0 0.0
        %2515 = vmatprep.subr.mxu0 0.0
        %2516 = vmatpush1.msra.mxu0 0.0
        %2517 = vmatprep.subr.mxu0 0.0
        %2518 = vmatpush1.msra.mxu0 0.0
        %2519 = vmatprep.mubr.f32.mxu0 0.0
        %2520 = vmatmul.mubr.f32.gmra.mrb[0].mxu0 %v2453
        %v2521 = vpop.f32.mrb[0].mxu0
        %v2522 = vadd.f32 0.0, %v2521
        %v2523 = vpop.f32.mrb[0].mxu0
        %2524 = vdwg.mxu0
        %v2525 = vadd.f32 %v2448, %v2522
        %s2526 = scalar_lea.vmem %s235, 26 [#allocation2]
        %v2527 = vld [vmem:[%s2526] sm:$0x3]
        %v2528 = vld [vmem:[%s655] sm:$0xff]
        %v2530 = vsel %vm272, %v2527, 0
        %2532 = vmatprep.subr.mxu0 0.0
        %2533 = vmatpush1.msra.mxu0 %v2528
        %2534 = vmatprep.subr.mxu0 0.0
        %2535 = vmatpush1.msra.mxu0 0.0
        %2536 = vmatprep.subr.mxu0 0.0
        %2537 = vmatpush1.msra.mxu0 0.0
        %2538 = vmatprep.subr.mxu0 0.0
        %2539 = vmatpush1.msra.mxu0 0.0
        %2540 = vmatprep.subr.mxu0 0.0
        %2541 = vmatpush1.msra.mxu0 0.0
        %2542 = vmatprep.subr.mxu0 0.0
        %2543 = vmatpush1.msra.mxu0 0.0
        %2544 = vmatprep.subr.mxu0 0.0
        %2545 = vmatpush1.msra.mxu0 0.0
        %2546 = vmatprep.subr.mxu0 0.0
        %2547 = vmatpush1.msra.mxu0 0.0
        %2548 = vmatprep.subr.mxu0 0.0
        %2549 = vmatpush1.msra.mxu0 0.0
        %2550 = vmatprep.subr.mxu0 0.0
        %2551 = vmatpush1.msra.mxu0 0.0
        %2552 = vmatprep.subr.mxu0 0.0
        %2553 = vmatpush1.msra.mxu0 0.0
        %2554 = vmatprep.subr.mxu0 0.0
        %2555 = vmatpush1.msra.mxu0 0.0
        %2556 = vmatprep.subr.mxu0 0.0
        %2557 = vmatpush1.msra.mxu0 0.0
        %2558 = vmatprep.subr.mxu0 0.0
        %2559 = vmatpush1.msra.mxu0 0.0
        %2560 = vmatprep.subr.mxu0 0.0
        %2561 = vmatpush1.msra.mxu0 0.0
        %2562 = vmatprep.subr.mxu0 0.0
        %2563 = vmatpush1.msra.mxu0 0.0
        %2564 = vmatprep.subr.mxu0 0.0
        %2565 = vmatpush1.msra.mxu0 0.0
        %2566 = vmatprep.subr.mxu0 0.0
        %2567 = vmatpush1.msra.mxu0 0.0
        %2568 = vmatprep.subr.mxu0 0.0
        %2569 = vmatpush1.msra.mxu0 0.0
        %2570 = vmatprep.subr.mxu0 0.0
        %2571 = vmatpush1.msra.mxu0 0.0
        %2572 = vmatprep.subr.mxu0 0.0
        %2573 = vmatpush1.msra.mxu0 0.0
        %2574 = vmatprep.subr.mxu0 0.0
        %2575 = vmatpush1.msra.mxu0 0.0
        %2576 = vmatprep.subr.mxu0 0.0
        %2577 = vmatpush1.msra.mxu0 0.0
        %2578 = vmatprep.subr.mxu0 0.0
        %2579 = vmatpush1.msra.mxu0 0.0
        %2580 = vmatprep.subr.mxu0 0.0
        %2581 = vmatpush1.msra.mxu0 0.0
        %2582 = vmatprep.subr.mxu0 0.0
        %2583 = vmatpush1.msra.mxu0 0.0
        %2584 = vmatprep.subr.mxu0 0.0
        %2585 = vmatpush1.msra.mxu0 0.0
        %2586 = vmatprep.subr.mxu0 0.0
        %2587 = vmatpush1.msra.mxu0 0.0
        %2588 = vmatprep.subr.mxu0 0.0
        %2589 = vmatpush1.msra.mxu0 0.0
        %2590 = vmatprep.subr.mxu0 0.0
        %2591 = vmatpush1.msra.mxu0 0.0
        %2592 = vmatprep.subr.mxu0 0.0
        %2593 = vmatpush1.msra.mxu0 0.0
        %2594 = vmatprep.subr.mxu0 0.0
        %2595 = vmatpush1.msra.mxu0 0.0
        %2596 = vmatprep.mubr.f32.mxu0 0.0
        %2597 = vmatmul.mubr.f32.gmra.mrb[0].mxu0 %v2530
        %v2598 = vpop.f32.mrb[0].mxu0
        %v2599 = vadd.f32 0.0, %v2598
        %v2600 = vpop.f32.mrb[0].mxu0
        %2601 = vdwg.mxu0
        %v2602 = vadd.f32 %v2525, %v2599
        %s2603 = scalar_lea.vmem %s235, 28 [#allocation2]
        %v2604 = vld [vmem:[%s2603] sm:$0x3]
        %v2605 = vld [vmem:[%s733] sm:$0xff]
        %v2607 = vsel %vm272, %v2604, 0
        %2609 = vmatprep.subr.mxu0 0.0
        %2610 = vmatpush1.msra.mxu0 %v2605
        %2611 = vmatprep.subr.mxu0 0.0
        %2612 = vmatpush1.msra.mxu0 0.0
        %2613 = vmatprep.subr.mxu0 0.0
        %2614 = vmatpush1.msra.mxu0 0.0
        %2615 = vmatprep.subr.mxu0 0.0
        %2616 = vmatpush1.msra.mxu0 0.0
        %2617 = vmatprep.subr.mxu0 0.0
        %2618 = vmatpush1.msra.mxu0 0.0
        %2619 = vmatprep.subr.mxu0 0.0
        %2620 = vmatpush1.msra.mxu0 0.0
        %2621 = vmatprep.subr.mxu0 0.0
        %2622 = vmatpush1.msra.mxu0 0.0
        %2623 = vmatprep.subr.mxu0 0.0
        %2624 = vmatpush1.msra.mxu0 0.0
        %2625 = vmatprep.subr.mxu0 0.0
        %2626 = vmatpush1.msra.mxu0 0.0
        %2627 = vmatprep.subr.mxu0 0.0
        %2628 = vmatpush1.msra.mxu0 0.0
        %2629 = vmatprep.subr.mxu0 0.0
        %2630 = vmatpush1.msra.mxu0 0.0
        %2631 = vmatprep.subr.mxu0 0.0
        %2632 = vmatpush1.msra.mxu0 0.0
        %2633 = vmatprep.subr.mxu0 0.0
        %2634 = vmatpush1.msra.mxu0 0.0
        %2635 = vmatprep.subr.mxu0 0.0
        %2636 = vmatpush1.msra.mxu0 0.0
        %2637 = vmatprep.subr.mxu0 0.0
        %2638 = vmatpush1.msra.mxu0 0.0
        %2639 = vmatprep.subr.mxu0 0.0
        %2640 = vmatpush1.msra.mxu0 0.0
        %2641 = vmatprep.subr.mxu0 0.0
        %2642 = vmatpush1.msra.mxu0 0.0
        %2643 = vmatprep.subr.mxu0 0.0
        %2644 = vmatpush1.msra.mxu0 0.0
        %2645 = vmatprep.subr.mxu0 0.0
        %2646 = vmatpush1.msra.mxu0 0.0
        %2647 = vmatprep.subr.mxu0 0.0
        %2648 = vmatpush1.msra.mxu0 0.0
        %2649 = vmatprep.subr.mxu0 0.0
        %2650 = vmatpush1.msra.mxu0 0.0
        %2651 = vmatprep.subr.mxu0 0.0
        %2652 = vmatpush1.msra.mxu0 0.0
        %2653 = vmatprep.subr.mxu0 0.0
        %2654 = vmatpush1.msra.mxu0 0.0
        %2655 = vmatprep.subr.mxu0 0.0
        %2656 = vmatpush1.msra.mxu0 0.0
        %2657 = vmatprep.subr.mxu0 0.0
        %2658 = vmatpush1.msra.mxu0 0.0
        %2659 = vmatprep.subr.mxu0 0.0
        %2660 = vmatpush1.msra.mxu0 0.0
        %2661 = vmatprep.subr.mxu0 0.0
        %2662 = vmatpush1.msra.mxu0 0.0
        %2663 = vmatprep.subr.mxu0 0.0
        %2664 = vmatpush1.msra.mxu0 0.0
        %2665 = vmatprep.subr.mxu0 0.0
        %2666 = vmatpush1.msra.mxu0 0.0
        %2667 = vmatprep.subr.mxu0 0.0
        %2668 = vmatpush1.msra.mxu0 0.0
        %2669 = vmatprep.subr.mxu0 0.0
        %2670 = vmatpush1.msra.mxu0 0.0
        %2671 = vmatprep.subr.mxu0 0.0
        %2672 = vmatpush1.msra.mxu0 0.0
        %2673 = vmatprep.mubr.f32.mxu0 0.0
        %2674 = vmatmul.mubr.f32.gmra.mrb[0].mxu0 %v2607
        %v2675 = vpop.f32.mrb[0].mxu0
        %v2676 = vadd.f32 0.0, %v2675
        %v2677 = vpop.f32.mrb[0].mxu0
        %2678 = vdwg.mxu0
        %v2679 = vadd.f32 %v2602, %v2676
        %s2680 = scalar_lea.vmem %s235, 30 [#allocation2]
        %v2681 = vld [vmem:[%s2680] sm:$0x3]
        %v2682 = vld [vmem:[%s811] sm:$0xff]
        %v2684 = vsel %vm272, %v2681, 0
        %2686 = vmatprep.subr.mxu0 0.0
        %2687 = vmatpush1.msra.mxu0 %v2682
        %2688 = vmatprep.subr.mxu0 0.0
        %2689 = vmatpush1.msra.mxu0 0.0
        %2690 = vmatprep.subr.mxu0 0.0
        %2691 = vmatpush1.msra.mxu0 0.0
        %2692 = vmatprep.subr.mxu0 0.0
        %2693 = vmatpush1.msra.mxu0 0.0
        %2694 = vmatprep.subr.mxu0 0.0
        %2695 = vmatpush1.msra.mxu0 0.0
        %2696 = vmatprep.subr.mxu0 0.0
        %2697 = vmatpush1.msra.mxu0 0.0
        %2698 = vmatprep.subr.mxu0 0.0
        %2699 = vmatpush1.msra.mxu0 0.0
        %2700 = vmatprep.subr.mxu0 0.0
        %2701 = vmatpush1.msra.mxu0 0.0
        %2702 = vmatprep.subr.mxu0 0.0
        %2703 = vmatpush1.msra.mxu0 0.0
        %2704 = vmatprep.subr.mxu0 0.0
        %2705 = vmatpush1.msra.mxu0 0.0
        %2706 = vmatprep.subr.mxu0 0.0
        %2707 = vmatpush1.msra.mxu0 0.0
        %2708 = vmatprep.subr.mxu0 0.0
        %2709 = vmatpush1.msra.mxu0 0.0
        %2710 = vmatprep.subr.mxu0 0.0
        %2711 = vmatpush1.msra.mxu0 0.0
        %2712 = vmatprep.subr.mxu0 0.0
        %2713 = vmatpush1.msra.mxu0 0.0
        %2714 = vmatprep.subr.mxu0 0.0
        %2715 = vmatpush1.msra.mxu0 0.0
        %2716 = vmatprep.subr.mxu0 0.0
        %2717 = vmatpush1.msra.mxu0 0.0
        %2718 = vmatprep.subr.mxu0 0.0
        %2719 = vmatpush1.msra.mxu0 0.0
        %2720 = vmatprep.subr.mxu0 0.0
        %2721 = vmatpush1.msra.mxu0 0.0
        %2722 = vmatprep.subr.mxu0 0.0
        %2723 = vmatpush1.msra.mxu0 0.0
        %2724 = vmatprep.subr.mxu0 0.0
        %2725 = vmatpush1.msra.mxu0 0.0
        %2726 = vmatprep.subr.mxu0 0.0
        %2727 = vmatpush1.msra.mxu0 0.0
        %2728 = vmatprep.subr.mxu0 0.0
        %2729 = vmatpush1.msra.mxu0 0.0
        %2730 = vmatprep.subr.mxu0 0.0
        %2731 = vmatpush1.msra.mxu0 0.0
        %2732 = vmatprep.subr.mxu0 0.0
        %2733 = vmatpush1.msra.mxu0 0.0
        %2734 = vmatprep.subr.mxu0 0.0
        %2735 = vmatpush1.msra.mxu0 0.0
        %2736 = vmatprep.subr.mxu0 0.0
        %2737 = vmatpush1.msra.mxu0 0.0
        %2738 = vmatprep.subr.mxu0 0.0
        %2739 = vmatpush1.msra.mxu0 0.0
        %2740 = vmatprep.subr.mxu0 0.0
        %2741 = vmatpush1.msra.mxu0 0.0
        %2742 = vmatprep.subr.mxu0 0.0
        %2743 = vmatpush1.msra.mxu0 0.0
        %2744 = vmatprep.subr.mxu0 0.0
        %2745 = vmatpush1.msra.mxu0 0.0
        %2746 = vmatprep.subr.mxu0 0.0
        %2747 = vmatpush1.msra.mxu0 0.0
        %2748 = vmatprep.subr.mxu0 0.0
        %2749 = vmatpush1.msra.mxu0 0.0
        %2750 = vmatprep.mubr.f32.mxu0 0.0
        %2751 = vmatmul.mubr.f32.gmra.mrb[0].mxu0 %v2684
        %v2752 = vpop.f32.mrb[0].mxu0
        %v2753 = vadd.f32 0.0, %v2752
        %v2754 = vpop.f32.mrb[0].mxu0
        %2755 = vdwg.mxu0
        %v2756 = vadd.f32 %v2679, %v2753
        %s2757 = scalar_lea.vmem %s235, 48 [#allocation2]
        %v2758 = vld [vmem:[%s2757] sm:$0x3]
        %v2759 = vld [vmem:[%s889] sm:$0xff]
        %v2761 = vsel %vm272, %v2758, 0
        %2763 = vmatprep.subr.mxu0 0.0
        %2764 = vmatpush1.msra.mxu0 %v2759
        %2765 = vmatprep.subr.mxu0 0.0
        %2766 = vmatpush1.msra.mxu0 0.0
        %2767 = vmatprep.subr.mxu0 0.0
        %2768 = vmatpush1.msra.mxu0 0.0
        %2769 = vmatprep.subr.mxu0 0.0
        %2770 = vmatpush1.msra.mxu0 0.0
        %2771 = vmatprep.subr.mxu0 0.0
        %2772 = vmatpush1.msra.mxu0 0.0
        %2773 = vmatprep.subr.mxu0 0.0
        %2774 = vmatpush1.msra.mxu0 0.0
        %2775 = vmatprep.subr.mxu0 0.0
        %2776 = vmatpush1.msra.mxu0 0.0
        %2777 = vmatprep.subr.mxu0 0.0
        %2778 = vmatpush1.msra.mxu0 0.0
        %2779 = vmatprep.subr.mxu0 0.0
        %2780 = vmatpush1.msra.mxu0 0.0
        %2781 = vmatprep.subr.mxu0 0.0
        %2782 = vmatpush1.msra.mxu0 0.0
        %2783 = vmatprep.subr.mxu0 0.0
        %2784 = vmatpush1.msra.mxu0 0.0
        %2785 = vmatprep.subr.mxu0 0.0
        %2786 = vmatpush1.msra.mxu0 0.0
        %2787 = vmatprep.subr.mxu0 0.0
        %2788 = vmatpush1.msra.mxu0 0.0
        %2789 = vmatprep.subr.mxu0 0.0
        %2790 = vmatpush1.msra.mxu0 0.0
        %2791 = vmatprep.subr.mxu0 0.0
        %2792 = vmatpush1.msra.mxu0 0.0
        %2793 = vmatprep.subr.mxu0 0.0
        %2794 = vmatpush1.msra.mxu0 0.0
        %2795 = vmatprep.subr.mxu0 0.0
        %2796 = vmatpush1.msra.mxu0 0.0
        %2797 = vmatprep.subr.mxu0 0.0
        %2798 = vmatpush1.msra.mxu0 0.0
        %2799 = vmatprep.subr.mxu0 0.0
        %2800 = vmatpush1.msra.mxu0 0.0
        %2801 = vmatprep.subr.mxu0 0.0
        %2802 = vmatpush1.msra.mxu0 0.0
        %2803 = vmatprep.subr.mxu0 0.0
        %2804 = vmatpush1.msra.mxu0 0.0
        %2805 = vmatprep.subr.mxu0 0.0
        %2806 = vmatpush1.msra.mxu0 0.0
        %2807 = vmatprep.subr.mxu0 0.0
        %2808 = vmatpush1.msra.mxu0 0.0
        %2809 = vmatprep.subr.mxu0 0.0
        %2810 = vmatpush1.msra.mxu0 0.0
        %2811 = vmatprep.subr.mxu0 0.0
        %2812 = vmatpush1.msra.mxu0 0.0
        %2813 = vmatprep.subr.mxu0 0.0
        %2814 = vmatpush1.msra.mxu0 0.0
        %2815 = vmatprep.subr.mxu0 0.0
        %2816 = vmatpush1.msra.mxu0 0.0
        %2817 = vmatprep.subr.mxu0 0.0
        %2818 = vmatpush1.msra.mxu0 0.0
        %2819 = vmatprep.subr.mxu0 0.0
        %2820 = vmatpush1.msra.mxu0 0.0
        %2821 = vmatprep.subr.mxu0 0.0
        %2822 = vmatpush1.msra.mxu0 0.0
        %2823 = vmatprep.subr.mxu0 0.0
        %2824 = vmatpush1.msra.mxu0 0.0
        %2825 = vmatprep.subr.mxu0 0.0
        %2826 = vmatpush1.msra.mxu0 0.0
        %2827 = vmatprep.mubr.f32.mxu0 0.0
        %2828 = vmatmul.mubr.f32.gmra.mrb[0].mxu0 %v2761
        %v2829 = vpop.f32.mrb[0].mxu0
        %v2830 = vadd.f32 0.0, %v2829
        %v2831 = vpop.f32.mrb[0].mxu0
        %2832 = vdwg.mxu0
        %v2833 = vadd.f32 %v2756, %v2830
        %s2834 = scalar_lea.vmem %s235, 50 [#allocation2]
        %v2835 = vld [vmem:[%s2834] sm:$0x3]
        %v2836 = vld [vmem:[%s967] sm:$0xff]
        %v2838 = vsel %vm272, %v2835, 0
        %2840 = vmatprep.subr.mxu0 0.0
        %2841 = vmatpush1.msra.mxu0 %v2836
        %2842 = vmatprep.subr.mxu0 0.0
        %2843 = vmatpush1.msra.mxu0 0.0
        %2844 = vmatprep.subr.mxu0 0.0
        %2845 = vmatpush1.msra.mxu0 0.0
        %2846 = vmatprep.subr.mxu0 0.0
        %2847 = vmatpush1.msra.mxu0 0.0
        %2848 = vmatprep.subr.mxu0 0.0
        %2849 = vmatpush1.msra.mxu0 0.0
        %2850 = vmatprep.subr.mxu0 0.0
        %2851 = vmatpush1.msra.mxu0 0.0
        %2852 = vmatprep.subr.mxu0 0.0
        %2853 = vmatpush1.msra.mxu0 0.0
        %2854 = vmatprep.subr.mxu0 0.0
        %2855 = vmatpush1.msra.mxu0 0.0
        %2856 = vmatprep.subr.mxu0 0.0
        %2857 = vmatpush1.msra.mxu0 0.0
        %2858 = vmatprep.subr.mxu0 0.0
        %2859 = vmatpush1.msra.mxu0 0.0
        %2860 = vmatprep.subr.mxu0 0.0
        %2861 = vmatpush1.msra.mxu0 0.0
        %2862 = vmatprep.subr.mxu0 0.0
        %2863 = vmatpush1.msra.mxu0 0.0
        %2864 = vmatprep.subr.mxu0 0.0
        %2865 = vmatpush1.msra.mxu0 0.0
        %2866 = vmatprep.subr.mxu0 0.0
        %2867 = vmatpush1.msra.mxu0 0.0
        %2868 = vmatprep.subr.mxu0 0.0
        %2869 = vmatpush1.msra.mxu0 0.0
        %2870 = vmatprep.subr.mxu0 0.0
        %2871 = vmatpush1.msra.mxu0 0.0
        %2872 = vmatprep.subr.mxu0 0.0
        %2873 = vmatpush1.msra.mxu0 0.0
        %2874 = vmatprep.subr.mxu0 0.0
        %2875 = vmatpush1.msra.mxu0 0.0
        %2876 = vmatprep.subr.mxu0 0.0
        %2877 = vmatpush1.msra.mxu0 0.0
        %2878 = vmatprep.subr.mxu0 0.0
        %2879 = vmatpush1.msra.mxu0 0.0
        %2880 = vmatprep.subr.mxu0 0.0
        %2881 = vmatpush1.msra.mxu0 0.0
        %2882 = vmatprep.subr.mxu0 0.0
        %2883 = vmatpush1.msra.mxu0 0.0
        %2884 = vmatprep.subr.mxu0 0.0
        %2885 = vmatpush1.msra.mxu0 0.0
        %2886 = vmatprep.subr.mxu0 0.0
        %2887 = vmatpush1.msra.mxu0 0.0
        %2888 = vmatprep.subr.mxu0 0.0
        %2889 = vmatpush1.msra.mxu0 0.0
        %2890 = vmatprep.subr.mxu0 0.0
        %2891 = vmatpush1.msra.mxu0 0.0
        %2892 = vmatprep.subr.mxu0 0.0
        %2893 = vmatpush1.msra.mxu0 0.0
        %2894 = vmatprep.subr.mxu0 0.0
        %2895 = vmatpush1.msra.mxu0 0.0
        %2896 = vmatprep.subr.mxu0 0.0
        %2897 = vmatpush1.msra.mxu0 0.0
        %2898 = vmatprep.subr.mxu0 0.0
        %2899 = vmatpush1.msra.mxu0 0.0
        %2900 = vmatprep.subr.mxu0 0.0
        %2901 = vmatpush1.msra.mxu0 0.0
        %2902 = vmatprep.subr.mxu0 0.0
        %2903 = vmatpush1.msra.mxu0 0.0
        %2904 = vmatprep.mubr.f32.mxu0 0.0
        %2905 = vmatmul.mubr.f32.gmra.mrb[0].mxu0 %v2838
        %v2906 = vpop.f32.mrb[0].mxu0
        %v2907 = vadd.f32 0.0, %v2906
        %v2908 = vpop.f32.mrb[0].mxu0
        %2909 = vdwg.mxu0
        %v2910 = vadd.f32 %v2833, %v2907
        %s2911 = scalar_lea.vmem %s235, 52 [#allocation2]
        %v2912 = vld [vmem:[%s2911] sm:$0x3]
        %v2913 = vld [vmem:[%s1045] sm:$0xff]
        %v2915 = vsel %vm272, %v2912, 0
        %2917 = vmatprep.subr.mxu0 0.0
        %2918 = vmatpush1.msra.mxu0 %v2913
        %2919 = vmatprep.subr.mxu0 0.0
        %2920 = vmatpush1.msra.mxu0 0.0
        %2921 = vmatprep.subr.mxu0 0.0
        %2922 = vmatpush1.msra.mxu0 0.0
        %2923 = vmatprep.subr.mxu0 0.0
        %2924 = vmatpush1.msra.mxu0 0.0
        %2925 = vmatprep.subr.mxu0 0.0
        %2926 = vmatpush1.msra.mxu0 0.0
        %2927 = vmatprep.subr.mxu0 0.0
        %2928 = vmatpush1.msra.mxu0 0.0
        %2929 = vmatprep.subr.mxu0 0.0
        %2930 = vmatpush1.msra.mxu0 0.0
        %2931 = vmatprep.subr.mxu0 0.0
        %2932 = vmatpush1.msra.mxu0 0.0
        %2933 = vmatprep.subr.mxu0 0.0
        %2934 = vmatpush1.msra.mxu0 0.0
        %2935 = vmatprep.subr.mxu0 0.0
        %2936 = vmatpush1.msra.mxu0 0.0
        %2937 = vmatprep.subr.mxu0 0.0
        %2938 = vmatpush1.msra.mxu0 0.0
        %2939 = vmatprep.subr.mxu0 0.0
        %2940 = vmatpush1.msra.mxu0 0.0
        %2941 = vmatprep.subr.mxu0 0.0
        %2942 = vmatpush1.msra.mxu0 0.0
        %2943 = vmatprep.subr.mxu0 0.0
        %2944 = vmatpush1.msra.mxu0 0.0
        %2945 = vmatprep.subr.mxu0 0.0
        %2946 = vmatpush1.msra.mxu0 0.0
        %2947 = vmatprep.subr.mxu0 0.0
        %2948 = vmatpush1.msra.mxu0 0.0
        %2949 = vmatprep.subr.mxu0 0.0
        %2950 = vmatpush1.msra.mxu0 0.0
        %2951 = vmatprep.subr.mxu0 0.0
        %2952 = vmatpush1.msra.mxu0 0.0
        %2953 = vmatprep.subr.mxu0 0.0
        %2954 = vmatpush1.msra.mxu0 0.0
        %2955 = vmatprep.subr.mxu0 0.0
        %2956 = vmatpush1.msra.mxu0 0.0
        %2957 = vmatprep.subr.mxu0 0.0
        %2958 = vmatpush1.msra.mxu0 0.0
        %2959 = vmatprep.subr.mxu0 0.0
        %2960 = vmatpush1.msra.mxu0 0.0
        %2961 = vmatprep.subr.mxu0 0.0
        %2962 = vmatpush1.msra.mxu0 0.0
        %2963 = vmatprep.subr.mxu0 0.0
        %2964 = vmatpush1.msra.mxu0 0.0
        %2965 = vmatprep.subr.mxu0 0.0
        %2966 = vmatpush1.msra.mxu0 0.0
        %2967 = vmatprep.subr.mxu0 0.0
        %2968 = vmatpush1.msra.mxu0 0.0
        %2969 = vmatprep.subr.mxu0 0.0
        %2970 = vmatpush1.msra.mxu0 0.0
        %2971 = vmatprep.subr.mxu0 0.0
        %2972 = vmatpush1.msra.mxu0 0.0
        %2973 = vmatprep.subr.mxu0 0.0
        %2974 = vmatpush1.msra.mxu0 0.0
        %2975 = vmatprep.subr.mxu0 0.0
        %2976 = vmatpush1.msra.mxu0 0.0
        %2977 = vmatprep.subr.mxu0 0.0
        %2978 = vmatpush1.msra.mxu0 0.0
        %2979 = vmatprep.subr.mxu0 0.0
        %2980 = vmatpush1.msra.mxu0 0.0
        %2981 = vmatprep.mubr.f32.mxu0 0.0
        %2982 = vmatmul.mubr.f32.gmra.mrb[0].mxu0 %v2915
        %v2983 = vpop.f32.mrb[0].mxu0
        %v2984 = vadd.f32 0.0, %v2983
        %v2985 = vpop.f32.mrb[0].mxu0
        %2986 = vdwg.mxu0
        %v2987 = vadd.f32 %v2910, %v2984
        %s2988 = scalar_lea.vmem %s235, 54 [#allocation2]
        %v2989 = vld [vmem:[%s2988] sm:$0x3]
        %v2990 = vld [vmem:[%s1123] sm:$0xff]
        %v2992 = vsel %vm272, %v2989, 0
        %2994 = vmatprep.subr.mxu0 0.0
        %2995 = vmatpush1.msra.mxu0 %v2990
        %2996 = vmatprep.subr.mxu0 0.0
        %2997 = vmatpush1.msra.mxu0 0.0
        %2998 = vmatprep.subr.mxu0 0.0
        %2999 = vmatpush1.msra.mxu0 0.0
        %3000 = vmatprep.subr.mxu0 0.0
        %3001 = vmatpush1.msra.mxu0 0.0
        %3002 = vmatprep.subr.mxu0 0.0
        %3003 = vmatpush1.msra.mxu0 0.0
        %3004 = vmatprep.subr.mxu0 0.0
        %3005 = vmatpush1.msra.mxu0 0.0
        %3006 = vmatprep.subr.mxu0 0.0
        %3007 = vmatpush1.msra.mxu0 0.0
        %3008 = vmatprep.subr.mxu0 0.0
        %3009 = vmatpush1.msra.mxu0 0.0
        %3010 = vmatprep.subr.mxu0 0.0
        %3011 = vmatpush1.msra.mxu0 0.0
        %3012 = vmatprep.subr.mxu0 0.0
        %3013 = vmatpush1.msra.mxu0 0.0
        %3014 = vmatprep.subr.mxu0 0.0
        %3015 = vmatpush1.msra.mxu0 0.0
        %3016 = vmatprep.subr.mxu0 0.0
        %3017 = vmatpush1.msra.mxu0 0.0
        %3018 = vmatprep.subr.mxu0 0.0
        %3019 = vmatpush1.msra.mxu0 0.0
        %3020 = vmatprep.subr.mxu0 0.0
        %3021 = vmatpush1.msra.mxu0 0.0
        %3022 = vmatprep.subr.mxu0 0.0
        %3023 = vmatpush1.msra.mxu0 0.0
        %3024 = vmatprep.subr.mxu0 0.0
        %3025 = vmatpush1.msra.mxu0 0.0
        %3026 = vmatprep.subr.mxu0 0.0
        %3027 = vmatpush1.msra.mxu0 0.0
        %3028 = vmatprep.subr.mxu0 0.0
        %3029 = vmatpush1.msra.mxu0 0.0
        %3030 = vmatprep.subr.mxu0 0.0
        %3031 = vmatpush1.msra.mxu0 0.0
        %3032 = vmatprep.subr.mxu0 0.0
        %3033 = vmatpush1.msra.mxu0 0.0
        %3034 = vmatprep.subr.mxu0 0.0
        %3035 = vmatpush1.msra.mxu0 0.0
        %3036 = vmatprep.subr.mxu0 0.0
        %3037 = vmatpush1.msra.mxu0 0.0
        %3038 = vmatprep.subr.mxu0 0.0
        %3039 = vmatpush1.msra.mxu0 0.0
        %3040 = vmatprep.subr.mxu0 0.0
        %3041 = vmatpush1.msra.mxu0 0.0
        %3042 = vmatprep.subr.mxu0 0.0
        %3043 = vmatpush1.msra.mxu0 0.0
        %3044 = vmatprep.subr.mxu0 0.0
        %3045 = vmatpush1.msra.mxu0 0.0
        %3046 = vmatprep.subr.mxu0 0.0
        %3047 = vmatpush1.msra.mxu0 0.0
        %3048 = vmatprep.subr.mxu0 0.0
        %3049 = vmatpush1.msra.mxu0 0.0
        %3050 = vmatprep.subr.mxu0 0.0
        %3051 = vmatpush1.msra.mxu0 0.0
        %3052 = vmatprep.subr.mxu0 0.0
        %3053 = vmatpush1.msra.mxu0 0.0
        %3054 = vmatprep.subr.mxu0 0.0
        %3055 = vmatpush1.msra.mxu0 0.0
        %3056 = vmatprep.subr.mxu0 0.0
        %3057 = vmatpush1.msra.mxu0 0.0
        %3058 = vmatprep.mubr.f32.mxu0 0.0
        %3059 = vmatmul.mubr.f32.gmra.mrb[0].mxu0 %v2992
        %v3060 = vpop.f32.mrb[0].mxu0
        %v3061 = vadd.f32 0.0, %v3060
        %v3062 = vpop.f32.mrb[0].mxu0
        %3063 = vdwg.mxu0
        %v3064 = vadd.f32 %v2987, %v3061
        %s3065 = scalar_lea.vmem %s235, 56 [#allocation2]
        %v3066 = vld [vmem:[%s3065] sm:$0x3]
        %v3067 = vld [vmem:[%s1201] sm:$0xff]
        %v3069 = vsel %vm272, %v3066, 0
        %3071 = vmatprep.subr.mxu0 0.0
        %3072 = vmatpush1.msra.mxu0 %v3067
        %3073 = vmatprep.subr.mxu0 0.0
        %3074 = vmatpush1.msra.mxu0 0.0
        %3075 = vmatprep.subr.mxu0 0.0
        %3076 = vmatpush1.msra.mxu0 0.0
        %3077 = vmatprep.subr.mxu0 0.0
        %3078 = vmatpush1.msra.mxu0 0.0
        %3079 = vmatprep.subr.mxu0 0.0
        %3080 = vmatpush1.msra.mxu0 0.0
        %3081 = vmatprep.subr.mxu0 0.0
        %3082 = vmatpush1.msra.mxu0 0.0
        %3083 = vmatprep.subr.mxu0 0.0
        %3084 = vmatpush1.msra.mxu0 0.0
        %3085 = vmatprep.subr.mxu0 0.0
        %3086 = vmatpush1.msra.mxu0 0.0
        %3087 = vmatprep.subr.mxu0 0.0
        %3088 = vmatpush1.msra.mxu0 0.0
        %3089 = vmatprep.subr.mxu0 0.0
        %3090 = vmatpush1.msra.mxu0 0.0
        %3091 = vmatprep.subr.mxu0 0.0
        %3092 = vmatpush1.msra.mxu0 0.0
        %3093 = vmatprep.subr.mxu0 0.0
        %3094 = vmatpush1.msra.mxu0 0.0
        %3095 = vmatprep.subr.mxu0 0.0
        %3096 = vmatpush1.msra.mxu0 0.0
        %3097 = vmatprep.subr.mxu0 0.0
        %3098 = vmatpush1.msra.mxu0 0.0
        %3099 = vmatprep.subr.mxu0 0.0
        %3100 = vmatpush1.msra.mxu0 0.0
        %3101 = vmatprep.subr.mxu0 0.0
        %3102 = vmatpush1.msra.mxu0 0.0
        %3103 = vmatprep.subr.mxu0 0.0
        %3104 = vmatpush1.msra.mxu0 0.0
        %3105 = vmatprep.subr.mxu0 0.0
        %3106 = vmatpush1.msra.mxu0 0.0
        %3107 = vmatprep.subr.mxu0 0.0
        %3108 = vmatpush1.msra.mxu0 0.0
        %3109 = vmatprep.subr.mxu0 0.0
        %3110 = vmatpush1.msra.mxu0 0.0
        %3111 = vmatprep.subr.mxu0 0.0
        %3112 = vmatpush1.msra.mxu0 0.0
        %3113 = vmatprep.subr.mxu0 0.0
        %3114 = vmatpush1.msra.mxu0 0.0
        %3115 = vmatprep.subr.mxu0 0.0
        %3116 = vmatpush1.msra.mxu0 0.0
        %3117 = vmatprep.subr.mxu0 0.0
        %3118 = vmatpush1.msra.mxu0 0.0
        %3119 = vmatprep.subr.mxu0 0.0
        %3120 = vmatpush1.msra.mxu0 0.0
        %3121 = vmatprep.subr.mxu0 0.0
        %3122 = vmatpush1.msra.mxu0 0.0
        %3123 = vmatprep.subr.mxu0 0.0
        %3124 = vmatpush1.msra.mxu0 0.0
        %3125 = vmatprep.subr.mxu0 0.0
        %3126 = vmatpush1.msra.mxu0 0.0
        %3127 = vmatprep.subr.mxu0 0.0
        %3128 = vmatpush1.msra.mxu0 0.0
        %3129 = vmatprep.subr.mxu0 0.0
        %3130 = vmatpush1.msra.mxu0 0.0
        %3131 = vmatprep.subr.mxu0 0.0
        %3132 = vmatpush1.msra.mxu0 0.0
        %3133 = vmatprep.subr.mxu0 0.0
        %3134 = vmatpush1.msra.mxu0 0.0
        %3135 = vmatprep.mubr.f32.mxu0 0.0
        %3136 = vmatmul.mubr.f32.gmra.mrb[0].mxu0 %v3069
        %v3137 = vpop.f32.mrb[0].mxu0
        %v3138 = vadd.f32 0.0, %v3137
        %v3139 = vpop.f32.mrb[0].mxu0
        %3140 = vdwg.mxu0
        %v3141 = vadd.f32 %v3064, %v3138
        %s3142 = scalar_lea.vmem %s235, 58 [#allocation2]
        %v3143 = vld [vmem:[%s3142] sm:$0x3]
        %v3144 = vld [vmem:[%s1279] sm:$0xff]
        %v3146 = vsel %vm272, %v3143, 0
        %3148 = vmatprep.subr.mxu0 0.0
        %3149 = vmatpush1.msra.mxu0 %v3144
        %3150 = vmatprep.subr.mxu0 0.0
        %3151 = vmatpush1.msra.mxu0 0.0
        %3152 = vmatprep.subr.mxu0 0.0
        %3153 = vmatpush1.msra.mxu0 0.0
        %3154 = vmatprep.subr.mxu0 0.0
        %3155 = vmatpush1.msra.mxu0 0.0
        %3156 = vmatprep.subr.mxu0 0.0
        %3157 = vmatpush1.msra.mxu0 0.0
        %3158 = vmatprep.subr.mxu0 0.0
        %3159 = vmatpush1.msra.mxu0 0.0
        %3160 = vmatprep.subr.mxu0 0.0
        %3161 = vmatpush1.msra.mxu0 0.0
        %3162 = vmatprep.subr.mxu0 0.0
        %3163 = vmatpush1.msra.mxu0 0.0
        %3164 = vmatprep.subr.mxu0 0.0
        %3165 = vmatpush1.msra.mxu0 0.0
        %3166 = vmatprep.subr.mxu0 0.0
        %3167 = vmatpush1.msra.mxu0 0.0
        %3168 = vmatprep.subr.mxu0 0.0
        %3169 = vmatpush1.msra.mxu0 0.0
        %3170 = vmatprep.subr.mxu0 0.0
        %3171 = vmatpush1.msra.mxu0 0.0
        %3172 = vmatprep.subr.mxu0 0.0
        %3173 = vmatpush1.msra.mxu0 0.0
        %3174 = vmatprep.subr.mxu0 0.0
        %3175 = vmatpush1.msra.mxu0 0.0
        %3176 = vmatprep.subr.mxu0 0.0
        %3177 = vmatpush1.msra.mxu0 0.0
        %3178 = vmatprep.subr.mxu0 0.0
        %3179 = vmatpush1.msra.mxu0 0.0
        %3180 = vmatprep.subr.mxu0 0.0
        %3181 = vmatpush1.msra.mxu0 0.0
        %3182 = vmatprep.subr.mxu0 0.0
        %3183 = vmatpush1.msra.mxu0 0.0
        %3184 = vmatprep.subr.mxu0 0.0
        %3185 = vmatpush1.msra.mxu0 0.0
        %3186 = vmatprep.subr.mxu0 0.0
        %3187 = vmatpush1.msra.mxu0 0.0
        %3188 = vmatprep.subr.mxu0 0.0
        %3189 = vmatpush1.msra.mxu0 0.0
        %3190 = vmatprep.subr.mxu0 0.0
        %3191 = vmatpush1.msra.mxu0 0.0
        %3192 = vmatprep.subr.mxu0 0.0
        %3193 = vmatpush1.msra.mxu0 0.0
        %3194 = vmatprep.subr.mxu0 0.0
        %3195 = vmatpush1.msra.mxu0 0.0
        %3196 = vmatprep.subr.mxu0 0.0
        %3197 = vmatpush1.msra.mxu0 0.0
        %3198 = vmatprep.subr.mxu0 0.0
        %3199 = vmatpush1.msra.mxu0 0.0
        %3200 = vmatprep.subr.mxu0 0.0
        %3201 = vmatpush1.msra.mxu0 0.0
        %3202 = vmatprep.subr.mxu0 0.0
        %3203 = vmatpush1.msra.mxu0 0.0
        %3204 = vmatprep.subr.mxu0 0.0
        %3205 = vmatpush1.msra.mxu0 0.0
        %3206 = vmatprep.subr.mxu0 0.0
        %3207 = vmatpush1.msra.mxu0 0.0
        %3208 = vmatprep.subr.mxu0 0.0
        %3209 = vmatpush1.msra.mxu0 0.0
        %3210 = vmatprep.subr.mxu0 0.0
        %3211 = vmatpush1.msra.mxu0 0.0
        %3212 = vmatprep.mubr.f32.mxu0 0.0
        %3213 = vmatmul.mubr.f32.gmra.mrb[0].mxu0 %v3146
        %v3214 = vpop.f32.mrb[0].mxu0
        %v3215 = vadd.f32 0.0, %v3214
        %v3216 = vpop.f32.mrb[0].mxu0
        %3217 = vdwg.mxu0
        %v3218 = vadd.f32 %v3141, %v3215
        %s3219 = scalar_lea.vmem %s235, 60 [#allocation2]
        %v3220 = vld [vmem:[%s3219] sm:$0x3]
        %v3221 = vld [vmem:[%s1357] sm:$0xff]
        %v3223 = vsel %vm272, %v3220, 0
        %3225 = vmatprep.subr.mxu0 0.0
        %3226 = vmatpush1.msra.mxu0 %v3221
        %3227 = vmatprep.subr.mxu0 0.0
        %3228 = vmatpush1.msra.mxu0 0.0
        %3229 = vmatprep.subr.mxu0 0.0
        %3230 = vmatpush1.msra.mxu0 0.0
        %3231 = vmatprep.subr.mxu0 0.0
        %3232 = vmatpush1.msra.mxu0 0.0
        %3233 = vmatprep.subr.mxu0 0.0
        %3234 = vmatpush1.msra.mxu0 0.0
        %3235 = vmatprep.subr.mxu0 0.0
        %3236 = vmatpush1.msra.mxu0 0.0
        %3237 = vmatprep.subr.mxu0 0.0
        %3238 = vmatpush1.msra.mxu0 0.0
        %3239 = vmatprep.subr.mxu0 0.0
        %3240 = vmatpush1.msra.mxu0 0.0
        %3241 = vmatprep.subr.mxu0 0.0
        %3242 = vmatpush1.msra.mxu0 0.0
        %3243 = vmatprep.subr.mxu0 0.0
        %3244 = vmatpush1.msra.mxu0 0.0
        %3245 = vmatprep.subr.mxu0 0.0
        %3246 = vmatpush1.msra.mxu0 0.0
        %3247 = vmatprep.subr.mxu0 0.0
        %3248 = vmatpush1.msra.mxu0 0.0
        %3249 = vmatprep.subr.mxu0 0.0
        %3250 = vmatpush1.msra.mxu0 0.0
        %3251 = vmatprep.subr.mxu0 0.0
        %3252 = vmatpush1.msra.mxu0 0.0
        %3253 = vmatprep.subr.mxu0 0.0
        %3254 = vmatpush1.msra.mxu0 0.0
        %3255 = vmatprep.subr.mxu0 0.0
        %3256 = vmatpush1.msra.mxu0 0.0
        %3257 = vmatprep.subr.mxu0 0.0
        %3258 = vmatpush1.msra.mxu0 0.0
        %3259 = vmatprep.subr.mxu0 0.0
        %3260 = vmatpush1.msra.mxu0 0.0
        %3261 = vmatprep.subr.mxu0 0.0
        %3262 = vmatpush1.msra.mxu0 0.0
        %3263 = vmatprep.subr.mxu0 0.0
        %3264 = vmatpush1.msra.mxu0 0.0
        %3265 = vmatprep.subr.mxu0 0.0
        %3266 = vmatpush1.msra.mxu0 0.0
        %3267 = vmatprep.subr.mxu0 0.0
        %3268 = vmatpush1.msra.mxu0 0.0
        %3269 = vmatprep.subr.mxu0 0.0
        %3270 = vmatpush1.msra.mxu0 0.0
        %3271 = vmatprep.subr.mxu0 0.0
        %3272 = vmatpush1.msra.mxu0 0.0
        %3273 = vmatprep.subr.mxu0 0.0
        %3274 = vmatpush1.msra.mxu0 0.0
        %3275 = vmatprep.subr.mxu0 0.0
        %3276 = vmatpush1.msra.mxu0 0.0
        %3277 = vmatprep.subr.mxu0 0.0
        %3278 = vmatpush1.msra.mxu0 0.0
        %3279 = vmatprep.subr.mxu0 0.0
        %3280 = vmatpush1.msra.mxu0 0.0
        %3281 = vmatprep.subr.mxu0 0.0
        %3282 = vmatpush1.msra.mxu0 0.0
        %3283 = vmatprep.subr.mxu0 0.0
        %3284 = vmatpush1.msra.mxu0 0.0
        %3285 = vmatprep.subr.mxu0 0.0
        %3286 = vmatpush1.msra.mxu0 0.0
        %3287 = vmatprep.subr.mxu0 0.0
        %3288 = vmatpush1.msra.mxu0 0.0
        %3289 = vmatprep.mubr.f32.mxu0 0.0
        %3290 = vmatmul.mubr.f32.gmra.mrb[0].mxu0 %v3223
        %v3291 = vpop.f32.mrb[0].mxu0
        %v3292 = vadd.f32 0.0, %v3291
        %v3293 = vpop.f32.mrb[0].mxu0
        %3294 = vdwg.mxu0
        %v3295 = vadd.f32 %v3218, %v3292
        %s3296 = scalar_lea.vmem %s235, 62 [#allocation2]
        %v3297 = vld [vmem:[%s3296] sm:$0x3]
        %v3298 = vld [vmem:[%s1435] sm:$0xff]
        %v3300 = vsel %vm272, %v3297, 0
        %3302 = vmatprep.subr.mxu0 0.0
        %3303 = vmatpush1.msra.mxu0 %v3298
        %3304 = vmatprep.subr.mxu0 0.0
        %3305 = vmatpush1.msra.mxu0 0.0
        %3306 = vmatprep.subr.mxu0 0.0
        %3307 = vmatpush1.msra.mxu0 0.0
        %3308 = vmatprep.subr.mxu0 0.0
        %3309 = vmatpush1.msra.mxu0 0.0
        %3310 = vmatprep.subr.mxu0 0.0
        %3311 = vmatpush1.msra.mxu0 0.0
        %3312 = vmatprep.subr.mxu0 0.0
        %3313 = vmatpush1.msra.mxu0 0.0
        %3314 = vmatprep.subr.mxu0 0.0
        %3315 = vmatpush1.msra.mxu0 0.0
        %3316 = vmatprep.subr.mxu0 0.0
        %3317 = vmatpush1.msra.mxu0 0.0
        %3318 = vmatprep.subr.mxu0 0.0
        %3319 = vmatpush1.msra.mxu0 0.0
        %3320 = vmatprep.subr.mxu0 0.0
        %3321 = vmatpush1.msra.mxu0 0.0
        %3322 = vmatprep.subr.mxu0 0.0
        %3323 = vmatpush1.msra.mxu0 0.0
        %3324 = vmatprep.subr.mxu0 0.0
        %3325 = vmatpush1.msra.mxu0 0.0
        %3326 = vmatprep.subr.mxu0 0.0
        %3327 = vmatpush1.msra.mxu0 0.0
        %3328 = vmatprep.subr.mxu0 0.0
        %3329 = vmatpush1.msra.mxu0 0.0
        %3330 = vmatprep.subr.mxu0 0.0
        %3331 = vmatpush1.msra.mxu0 0.0
        %3332 = vmatprep.subr.mxu0 0.0
        %3333 = vmatpush1.msra.mxu0 0.0
        %3334 = vmatprep.subr.mxu0 0.0
        %3335 = vmatpush1.msra.mxu0 0.0
        %3336 = vmatprep.subr.mxu0 0.0
        %3337 = vmatpush1.msra.mxu0 0.0
        %3338 = vmatprep.subr.mxu0 0.0
        %3339 = vmatpush1.msra.mxu0 0.0
        %3340 = vmatprep.subr.mxu0 0.0
        %3341 = vmatpush1.msra.mxu0 0.0
        %3342 = vmatprep.subr.mxu0 0.0
        %3343 = vmatpush1.msra.mxu0 0.0
        %3344 = vmatprep.subr.mxu0 0.0
        %3345 = vmatpush1.msra.mxu0 0.0
        %3346 = vmatprep.subr.mxu0 0.0
        %3347 = vmatpush1.msra.mxu0 0.0
        %3348 = vmatprep.subr.mxu0 0.0
        %3349 = vmatpush1.msra.mxu0 0.0
        %3350 = vmatprep.subr.mxu0 0.0
        %3351 = vmatpush1.msra.mxu0 0.0
        %3352 = vmatprep.subr.mxu0 0.0
        %3353 = vmatpush1.msra.mxu0 0.0
        %3354 = vmatprep.subr.mxu0 0.0
        %3355 = vmatpush1.msra.mxu0 0.0
        %3356 = vmatprep.subr.mxu0 0.0
        %3357 = vmatpush1.msra.mxu0 0.0
        %3358 = vmatprep.subr.mxu0 0.0
        %3359 = vmatpush1.msra.mxu0 0.0
        %3360 = vmatprep.subr.mxu0 0.0
        %3361 = vmatpush1.msra.mxu0 0.0
        %3362 = vmatprep.subr.mxu0 0.0
        %3363 = vmatpush1.msra.mxu0 0.0
        %3364 = vmatprep.subr.mxu0 0.0
        %3365 = vmatpush1.msra.mxu0 0.0
        %3366 = vmatprep.mubr.f32.mxu0 0.0
        %3367 = vmatmul.mubr.f32.gmra.mrb[0].mxu0 %v3300
        %v3368 = vpop.f32.mrb[0].mxu0
        %v3369 = vadd.f32 0.0, %v3368
        %v3370 = vpop.f32.mrb[0].mxu0
        %3371 = vdwg.mxu0
        %v3372 = vadd.f32 %v3295, %v3369
        %s3373 = scalar_lea.vmem %s235, 80 [#allocation2]
        %v3374 = vld [vmem:[%s3373] sm:$0x3]
        %v3375 = vld [vmem:[%s1513] sm:$0xff]
        %v3377 = vsel %vm272, %v3374, 0
        %3379 = vmatprep.subr.mxu0 0.0
        %3380 = vmatpush1.msra.mxu0 %v3375
        %3381 = vmatprep.subr.mxu0 0.0
        %3382 = vmatpush1.msra.mxu0 0.0
        %3383 = vmatprep.subr.mxu0 0.0
        %3384 = vmatpush1.msra.mxu0 0.0
        %3385 = vmatprep.subr.mxu0 0.0
        %3386 = vmatpush1.msra.mxu0 0.0
        %3387 = vmatprep.subr.mxu0 0.0
        %3388 = vmatpush1.msra.mxu0 0.0
        %3389 = vmatprep.subr.mxu0 0.0
        %3390 = vmatpush1.msra.mxu0 0.0
        %3391 = vmatprep.subr.mxu0 0.0
        %3392 = vmatpush1.msra.mxu0 0.0
        %3393 = vmatprep.subr.mxu0 0.0
        %3394 = vmatpush1.msra.mxu0 0.0
        %3395 = vmatprep.subr.mxu0 0.0
        %3396 = vmatpush1.msra.mxu0 0.0
        %3397 = vmatprep.subr.mxu0 0.0
        %3398 = vmatpush1.msra.mxu0 0.0
        %3399 = vmatprep.subr.mxu0 0.0
        %3400 = vmatpush1.msra.mxu0 0.0
        %3401 = vmatprep.subr.mxu0 0.0
        %3402 = vmatpush1.msra.mxu0 0.0
        %3403 = vmatprep.subr.mxu0 0.0
        %3404 = vmatpush1.msra.mxu0 0.0
        %3405 = vmatprep.subr.mxu0 0.0
        %3406 = vmatpush1.msra.mxu0 0.0
        %3407 = vmatprep.subr.mxu0 0.0
        %3408 = vmatpush1.msra.mxu0 0.0
        %3409 = vmatprep.subr.mxu0 0.0
        %3410 = vmatpush1.msra.mxu0 0.0
        %3411 = vmatprep.subr.mxu0 0.0
        %3412 = vmatpush1.msra.mxu0 0.0
        %3413 = vmatprep.subr.mxu0 0.0
        %3414 = vmatpush1.msra.mxu0 0.0
        %3415 = vmatprep.subr.mxu0 0.0
        %3416 = vmatpush1.msra.mxu0 0.0
        %3417 = vmatprep.subr.mxu0 0.0
        %3418 = vmatpush1.msra.mxu0 0.0
        %3419 = vmatprep.subr.mxu0 0.0
        %3420 = vmatpush1.msra.mxu0 0.0
        %3421 = vmatprep.subr.mxu0 0.0
        %3422 = vmatpush1.msra.mxu0 0.0
        %3423 = vmatprep.subr.mxu0 0.0
        %3424 = vmatpush1.msra.mxu0 0.0
        %3425 = vmatprep.subr.mxu0 0.0
        %3426 = vmatpush1.msra.mxu0 0.0
        %3427 = vmatprep.subr.mxu0 0.0
        %3428 = vmatpush1.msra.mxu0 0.0
        %3429 = vmatprep.subr.mxu0 0.0
        %3430 = vmatpush1.msra.mxu0 0.0
        %3431 = vmatprep.subr.mxu0 0.0
        %3432 = vmatpush1.msra.mxu0 0.0
        %3433 = vmatprep.subr.mxu0 0.0
        %3434 = vmatpush1.msra.mxu0 0.0
        %3435 = vmatprep.subr.mxu0 0.0
        %3436 = vmatpush1.msra.mxu0 0.0
        %3437 = vmatprep.subr.mxu0 0.0
        %3438 = vmatpush1.msra.mxu0 0.0
        %3439 = vmatprep.subr.mxu0 0.0
        %3440 = vmatpush1.msra.mxu0 0.0
        %3441 = vmatprep.subr.mxu0 0.0
        %3442 = vmatpush1.msra.mxu0 0.0
        %3443 = vmatprep.mubr.f32.mxu0 0.0
        %3444 = vmatmul.mubr.f32.gmra.mrb[0].mxu0 %v3377
        %v3445 = vpop.f32.mrb[0].mxu0
        %v3446 = vadd.f32 0.0, %v3445
        %v3447 = vpop.f32.mrb[0].mxu0
        %3448 = vdwg.mxu0
        %v3449 = vadd.f32 %v3372, %v3446
        %s3450 = scalar_lea.vmem %s235, 82 [#allocation2]
        %v3451 = vld [vmem:[%s3450] sm:$0x3]
        %v3452 = vld [vmem:[%s1591] sm:$0xff]
        %v3454 = vsel %vm272, %v3451, 0
        %3456 = vmatprep.subr.mxu0 0.0
        %3457 = vmatpush1.msra.mxu0 %v3452
        %3458 = vmatprep.subr.mxu0 0.0
        %3459 = vmatpush1.msra.mxu0 0.0
        %3460 = vmatprep.subr.mxu0 0.0
        %3461 = vmatpush1.msra.mxu0 0.0
        %3462 = vmatprep.subr.mxu0 0.0
        %3463 = vmatpush1.msra.mxu0 0.0
        %3464 = vmatprep.subr.mxu0 0.0
        %3465 = vmatpush1.msra.mxu0 0.0
        %3466 = vmatprep.subr.mxu0 0.0
        %3467 = vmatpush1.msra.mxu0 0.0
        %3468 = vmatprep.subr.mxu0 0.0
        %3469 = vmatpush1.msra.mxu0 0.0
        %3470 = vmatprep.subr.mxu0 0.0
        %3471 = vmatpush1.msra.mxu0 0.0
        %3472 = vmatprep.subr.mxu0 0.0
        %3473 = vmatpush1.msra.mxu0 0.0
        %3474 = vmatprep.subr.mxu0 0.0
        %3475 = vmatpush1.msra.mxu0 0.0
        %3476 = vmatprep.subr.mxu0 0.0
        %3477 = vmatpush1.msra.mxu0 0.0
        %3478 = vmatprep.subr.mxu0 0.0
        %3479 = vmatpush1.msra.mxu0 0.0
        %3480 = vmatprep.subr.mxu0 0.0
        %3481 = vmatpush1.msra.mxu0 0.0
        %3482 = vmatprep.subr.mxu0 0.0
        %3483 = vmatpush1.msra.mxu0 0.0
        %3484 = vmatprep.subr.mxu0 0.0
        %3485 = vmatpush1.msra.mxu0 0.0
        %3486 = vmatprep.subr.mxu0 0.0
        %3487 = vmatpush1.msra.mxu0 0.0
        %3488 = vmatprep.subr.mxu0 0.0
        %3489 = vmatpush1.msra.mxu0 0.0
        %3490 = vmatprep.subr.mxu0 0.0
        %3491 = vmatpush1.msra.mxu0 0.0
        %3492 = vmatprep.subr.mxu0 0.0
        %3493 = vmatpush1.msra.mxu0 0.0
        %3494 = vmatprep.subr.mxu0 0.0
        %3495 = vmatpush1.msra.mxu0 0.0
        %3496 = vmatprep.subr.mxu0 0.0
        %3497 = vmatpush1.msra.mxu0 0.0
        %3498 = vmatprep.subr.mxu0 0.0
        %3499 = vmatpush1.msra.mxu0 0.0
        %3500 = vmatprep.subr.mxu0 0.0
        %3501 = vmatpush1.msra.mxu0 0.0
        %3502 = vmatprep.subr.mxu0 0.0
        %3503 = vmatpush1.msra.mxu0 0.0
        %3504 = vmatprep.subr.mxu0 0.0
        %3505 = vmatpush1.msra.mxu0 0.0
        %3506 = vmatprep.subr.mxu0 0.0
        %3507 = vmatpush1.msra.mxu0 0.0
        %3508 = vmatprep.subr.mxu0 0.0
        %3509 = vmatpush1.msra.mxu0 0.0
        %3510 = vmatprep.subr.mxu0 0.0
        %3511 = vmatpush1.msra.mxu0 0.0
        %3512 = vmatprep.subr.mxu0 0.0
        %3513 = vmatpush1.msra.mxu0 0.0
        %3514 = vmatprep.subr.mxu0 0.0
        %3515 = vmatpush1.msra.mxu0 0.0
        %3516 = vmatprep.subr.mxu0 0.0
        %3517 = vmatpush1.msra.mxu0 0.0
        %3518 = vmatprep.subr.mxu0 0.0
        %3519 = vmatpush1.msra.mxu0 0.0
        %3520 = vmatprep.mubr.f32.mxu0 0.0
        %3521 = vmatmul.mubr.f32.gmra.mrb[0].mxu0 %v3454
        %v3522 = vpop.f32.mrb[0].mxu0
        %v3523 = vadd.f32 0.0, %v3522
        %v3524 = vpop.f32.mrb[0].mxu0
        %3525 = vdwg.mxu0
        %v3526 = vadd.f32 %v3449, %v3523
        %s3527 = scalar_lea.vmem %s235, 84 [#allocation2]
        %v3528 = vld [vmem:[%s3527] sm:$0x3]
        %v3529 = vld [vmem:[%s1669] sm:$0xff]
        %v3531 = vsel %vm272, %v3528, 0
        %3533 = vmatprep.subr.mxu0 0.0
        %3534 = vmatpush1.msra.mxu0 %v3529
        %3535 = vmatprep.subr.mxu0 0.0
        %3536 = vmatpush1.msra.mxu0 0.0
        %3537 = vmatprep.subr.mxu0 0.0
        %3538 = vmatpush1.msra.mxu0 0.0
        %3539 = vmatprep.subr.mxu0 0.0
        %3540 = vmatpush1.msra.mxu0 0.0
        %3541 = vmatprep.subr.mxu0 0.0
        %3542 = vmatpush1.msra.mxu0 0.0
        %3543 = vmatprep.subr.mxu0 0.0
        %3544 = vmatpush1.msra.mxu0 0.0
        %3545 = vmatprep.subr.mxu0 0.0
        %3546 = vmatpush1.msra.mxu0 0.0
        %3547 = vmatprep.subr.mxu0 0.0
        %3548 = vmatpush1.msra.mxu0 0.0
        %3549 = vmatprep.subr.mxu0 0.0
        %3550 = vmatpush1.msra.mxu0 0.0
        %3551 = vmatprep.subr.mxu0 0.0
        %3552 = vmatpush1.msra.mxu0 0.0
        %3553 = vmatprep.subr.mxu0 0.0
        %3554 = vmatpush1.msra.mxu0 0.0
        %3555 = vmatprep.subr.mxu0 0.0
        %3556 = vmatpush1.msra.mxu0 0.0
        %3557 = vmatprep.subr.mxu0 0.0
        %3558 = vmatpush1.msra.mxu0 0.0
        %3559 = vmatprep.subr.mxu0 0.0
        %3560 = vmatpush1.msra.mxu0 0.0
        %3561 = vmatprep.subr.mxu0 0.0
        %3562 = vmatpush1.msra.mxu0 0.0
        %3563 = vmatprep.subr.mxu0 0.0
        %3564 = vmatpush1.msra.mxu0 0.0
        %3565 = vmatprep.subr.mxu0 0.0
        %3566 = vmatpush1.msra.mxu0 0.0
        %3567 = vmatprep.subr.mxu0 0.0
        %3568 = vmatpush1.msra.mxu0 0.0
        %3569 = vmatprep.subr.mxu0 0.0
        %3570 = vmatpush1.msra.mxu0 0.0
        %3571 = vmatprep.subr.mxu0 0.0
        %3572 = vmatpush1.msra.mxu0 0.0
        %3573 = vmatprep.subr.mxu0 0.0
        %3574 = vmatpush1.msra.mxu0 0.0
        %3575 = vmatprep.subr.mxu0 0.0
        %3576 = vmatpush1.msra.mxu0 0.0
        %3577 = vmatprep.subr.mxu0 0.0
        %3578 = vmatpush1.msra.mxu0 0.0
        %3579 = vmatprep.subr.mxu0 0.0
        %3580 = vmatpush1.msra.mxu0 0.0
        %3581 = vmatprep.subr.mxu0 0.0
        %3582 = vmatpush1.msra.mxu0 0.0
        %3583 = vmatprep.subr.mxu0 0.0
        %3584 = vmatpush1.msra.mxu0 0.0
        %3585 = vmatprep.subr.mxu0 0.0
        %3586 = vmatpush1.msra.mxu0 0.0
        %3587 = vmatprep.subr.mxu0 0.0
        %3588 = vmatpush1.msra.mxu0 0.0
        %3589 = vmatprep.subr.mxu0 0.0
        %3590 = vmatpush1.msra.mxu0 0.0
        %3591 = vmatprep.subr.mxu0 0.0
        %3592 = vmatpush1.msra.mxu0 0.0
        %3593 = vmatprep.subr.mxu0 0.0
        %3594 = vmatpush1.msra.mxu0 0.0
        %3595 = vmatprep.subr.mxu0 0.0
        %3596 = vmatpush1.msra.mxu0 0.0
        %3597 = vmatprep.mubr.f32.mxu0 0.0
        %3598 = vmatmul.mubr.f32.gmra.mrb[0].mxu0 %v3531
        %v3599 = vpop.f32.mrb[0].mxu0
        %v3600 = vadd.f32 0.0, %v3599
        %v3601 = vpop.f32.mrb[0].mxu0
        %3602 = vdwg.mxu0
        %v3603 = vadd.f32 %v3526, %v3600
        %s3604 = scalar_lea.vmem %s235, 86 [#allocation2]
        %v3605 = vld [vmem:[%s3604] sm:$0x3]
        %v3606 = vld [vmem:[%s1747] sm:$0xff]
        %v3608 = vsel %vm272, %v3605, 0
        %3610 = vmatprep.subr.mxu0 0.0
        %3611 = vmatpush1.msra.mxu0 %v3606
        %3612 = vmatprep.subr.mxu0 0.0
        %3613 = vmatpush1.msra.mxu0 0.0
        %3614 = vmatprep.subr.mxu0 0.0
        %3615 = vmatpush1.msra.mxu0 0.0
        %3616 = vmatprep.subr.mxu0 0.0
        %3617 = vmatpush1.msra.mxu0 0.0
        %3618 = vmatprep.subr.mxu0 0.0
        %3619 = vmatpush1.msra.mxu0 0.0
        %3620 = vmatprep.subr.mxu0 0.0
        %3621 = vmatpush1.msra.mxu0 0.0
        %3622 = vmatprep.subr.mxu0 0.0
        %3623 = vmatpush1.msra.mxu0 0.0
        %3624 = vmatprep.subr.mxu0 0.0
        %3625 = vmatpush1.msra.mxu0 0.0
        %3626 = vmatprep.subr.mxu0 0.0
        %3627 = vmatpush1.msra.mxu0 0.0
        %3628 = vmatprep.subr.mxu0 0.0
        %3629 = vmatpush1.msra.mxu0 0.0
        %3630 = vmatprep.subr.mxu0 0.0
        %3631 = vmatpush1.msra.mxu0 0.0
        %3632 = vmatprep.subr.mxu0 0.0
        %3633 = vmatpush1.msra.mxu0 0.0
        %3634 = vmatprep.subr.mxu0 0.0
        %3635 = vmatpush1.msra.mxu0 0.0
        %3636 = vmatprep.subr.mxu0 0.0
        %3637 = vmatpush1.msra.mxu0 0.0
        %3638 = vmatprep.subr.mxu0 0.0
        %3639 = vmatpush1.msra.mxu0 0.0
        %3640 = vmatprep.subr.mxu0 0.0
        %3641 = vmatpush1.msra.mxu0 0.0
        %3642 = vmatprep.subr.mxu0 0.0
        %3643 = vmatpush1.msra.mxu0 0.0
        %3644 = vmatprep.subr.mxu0 0.0
        %3645 = vmatpush1.msra.mxu0 0.0
        %3646 = vmatprep.subr.mxu0 0.0
        %3647 = vmatpush1.msra.mxu0 0.0
        %3648 = vmatprep.subr.mxu0 0.0
        %3649 = vmatpush1.msra.mxu0 0.0
        %3650 = vmatprep.subr.mxu0 0.0
        %3651 = vmatpush1.msra.mxu0 0.0
        %3652 = vmatprep.subr.mxu0 0.0
        %3653 = vmatpush1.msra.mxu0 0.0
        %3654 = vmatprep.subr.mxu0 0.0
        %3655 = vmatpush1.msra.mxu0 0.0
        %3656 = vmatprep.subr.mxu0 0.0
        %3657 = vmatpush1.msra.mxu0 0.0
        %3658 = vmatprep.subr.mxu0 0.0
        %3659 = vmatpush1.msra.mxu0 0.0
        %3660 = vmatprep.subr.mxu0 0.0
        %3661 = vmatpush1.msra.mxu0 0.0
        %3662 = vmatprep.subr.mxu0 0.0
        %3663 = vmatpush1.msra.mxu0 0.0
        %3664 = vmatprep.subr.mxu0 0.0
        %3665 = vmatpush1.msra.mxu0 0.0
        %3666 = vmatprep.subr.mxu0 0.0
        %3667 = vmatpush1.msra.mxu0 0.0
        %3668 = vmatprep.subr.mxu0 0.0
        %3669 = vmatpush1.msra.mxu0 0.0
        %3670 = vmatprep.subr.mxu0 0.0
        %3671 = vmatpush1.msra.mxu0 0.0
        %3672 = vmatprep.subr.mxu0 0.0
        %3673 = vmatpush1.msra.mxu0 0.0
        %3674 = vmatprep.mubr.f32.mxu0 0.0
        %3675 = vmatmul.mubr.f32.gmra.mrb[0].mxu0 %v3608
        %v3676 = vpop.f32.mrb[0].mxu0
        %v3677 = vadd.f32 0.0, %v3676
        %v3678 = vpop.f32.mrb[0].mxu0
        %3679 = vdwg.mxu0
        %v3680 = vadd.f32 %v3603, %v3677
        %s3681 = scalar_lea.vmem %s235, 88 [#allocation2]
        %v3682 = vld [vmem:[%s3681] sm:$0x3]
        %v3683 = vld [vmem:[%s1825] sm:$0xff]
        %v3685 = vsel %vm272, %v3682, 0
        %3687 = vmatprep.subr.mxu0 0.0
        %3688 = vmatpush1.msra.mxu0 %v3683
        %3689 = vmatprep.subr.mxu0 0.0
        %3690 = vmatpush1.msra.mxu0 0.0
        %3691 = vmatprep.subr.mxu0 0.0
        %3692 = vmatpush1.msra.mxu0 0.0
        %3693 = vmatprep.subr.mxu0 0.0
        %3694 = vmatpush1.msra.mxu0 0.0
        %3695 = vmatprep.subr.mxu0 0.0
        %3696 = vmatpush1.msra.mxu0 0.0
        %3697 = vmatprep.subr.mxu0 0.0
        %3698 = vmatpush1.msra.mxu0 0.0
        %3699 = vmatprep.subr.mxu0 0.0
        %3700 = vmatpush1.msra.mxu0 0.0
        %3701 = vmatprep.subr.mxu0 0.0
        %3702 = vmatpush1.msra.mxu0 0.0
        %3703 = vmatprep.subr.mxu0 0.0
        %3704 = vmatpush1.msra.mxu0 0.0
        %3705 = vmatprep.subr.mxu0 0.0
        %3706 = vmatpush1.msra.mxu0 0.0
        %3707 = vmatprep.subr.mxu0 0.0
        %3708 = vmatpush1.msra.mxu0 0.0
        %3709 = vmatprep.subr.mxu0 0.0
        %3710 = vmatpush1.msra.mxu0 0.0
        %3711 = vmatprep.subr.mxu0 0.0
        %3712 = vmatpush1.msra.mxu0 0.0
        %3713 = vmatprep.subr.mxu0 0.0
        %3714 = vmatpush1.msra.mxu0 0.0
        %3715 = vmatprep.subr.mxu0 0.0
        %3716 = vmatpush1.msra.mxu0 0.0
        %3717 = vmatprep.subr.mxu0 0.0
        %3718 = vmatpush1.msra.mxu0 0.0
        %3719 = vmatprep.subr.mxu0 0.0
        %3720 = vmatpush1.msra.mxu0 0.0
        %3721 = vmatprep.subr.mxu0 0.0
        %3722 = vmatpush1.msra.mxu0 0.0
        %3723 = vmatprep.subr.mxu0 0.0
        %3724 = vmatpush1.msra.mxu0 0.0
        %3725 = vmatprep.subr.mxu0 0.0
        %3726 = vmatpush1.msra.mxu0 0.0
        %3727 = vmatprep.subr.mxu0 0.0
        %3728 = vmatpush1.msra.mxu0 0.0
        %3729 = vmatprep.subr.mxu0 0.0
        %3730 = vmatpush1.msra.mxu0 0.0
        %3731 = vmatprep.subr.mxu0 0.0
        %3732 = vmatpush1.msra.mxu0 0.0
        %3733 = vmatprep.subr.mxu0 0.0
        %3734 = vmatpush1.msra.mxu0 0.0
        %3735 = vmatprep.subr.mxu0 0.0
        %3736 = vmatpush1.msra.mxu0 0.0
        %3737 = vmatprep.subr.mxu0 0.0
        %3738 = vmatpush1.msra.mxu0 0.0
        %3739 = vmatprep.subr.mxu0 0.0
        %3740 = vmatpush1.msra.mxu0 0.0
        %3741 = vmatprep.subr.mxu0 0.0
        %3742 = vmatpush1.msra.mxu0 0.0
        %3743 = vmatprep.subr.mxu0 0.0
        %3744 = vmatpush1.msra.mxu0 0.0
        %3745 = vmatprep.subr.mxu0 0.0
        %3746 = vmatpush1.msra.mxu0 0.0
        %3747 = vmatprep.subr.mxu0 0.0
        %3748 = vmatpush1.msra.mxu0 0.0
        %3749 = vmatprep.subr.mxu0 0.0
        %3750 = vmatpush1.msra.mxu0 0.0
        %3751 = vmatprep.mubr.f32.mxu0 0.0
        %3752 = vmatmul.mubr.f32.gmra.mrb[0].mxu0 %v3685
        %v3753 = vpop.f32.mrb[0].mxu0
        %v3754 = vadd.f32 0.0, %v3753
        %v3755 = vpop.f32.mrb[0].mxu0
        %3756 = vdwg.mxu0
        %v3757 = vadd.f32 %v3680, %v3754
        %s3758 = scalar_lea.vmem %s235, 90 [#allocation2]
        %v3759 = vld [vmem:[%s3758] sm:$0x3]
        %v3760 = vld [vmem:[%s1903] sm:$0xff]
        %v3762 = vsel %vm272, %v3759, 0
        %3764 = vmatprep.subr.mxu0 0.0
        %3765 = vmatpush1.msra.mxu0 %v3760
        %3766 = vmatprep.subr.mxu0 0.0
        %3767 = vmatpush1.msra.mxu0 0.0
        %3768 = vmatprep.subr.mxu0 0.0
        %3769 = vmatpush1.msra.mxu0 0.0
        %3770 = vmatprep.subr.mxu0 0.0
        %3771 = vmatpush1.msra.mxu0 0.0
        %3772 = vmatprep.subr.mxu0 0.0
        %3773 = vmatpush1.msra.mxu0 0.0
        %3774 = vmatprep.subr.mxu0 0.0
        %3775 = vmatpush1.msra.mxu0 0.0
        %3776 = vmatprep.subr.mxu0 0.0
        %3777 = vmatpush1.msra.mxu0 0.0
        %3778 = vmatprep.subr.mxu0 0.0
        %3779 = vmatpush1.msra.mxu0 0.0
        %3780 = vmatprep.subr.mxu0 0.0
        %3781 = vmatpush1.msra.mxu0 0.0
        %3782 = vmatprep.subr.mxu0 0.0
        %3783 = vmatpush1.msra.mxu0 0.0
        %3784 = vmatprep.subr.mxu0 0.0
        %3785 = vmatpush1.msra.mxu0 0.0
        %3786 = vmatprep.subr.mxu0 0.0
        %3787 = vmatpush1.msra.mxu0 0.0
        %3788 = vmatprep.subr.mxu0 0.0
        %3789 = vmatpush1.msra.mxu0 0.0
        %3790 = vmatprep.subr.mxu0 0.0
        %3791 = vmatpush1.msra.mxu0 0.0
        %3792 = vmatprep.subr.mxu0 0.0
        %3793 = vmatpush1.msra.mxu0 0.0
        %3794 = vmatprep.subr.mxu0 0.0
        %3795 = vmatpush1.msra.mxu0 0.0
        %3796 = vmatprep.subr.mxu0 0.0
        %3797 = vmatpush1.msra.mxu0 0.0
        %3798 = vmatprep.subr.mxu0 0.0
        %3799 = vmatpush1.msra.mxu0 0.0
        %3800 = vmatprep.subr.mxu0 0.0
        %3801 = vmatpush1.msra.mxu0 0.0
        %3802 = vmatprep.subr.mxu0 0.0
        %3803 = vmatpush1.msra.mxu0 0.0
        %3804 = vmatprep.subr.mxu0 0.0
        %3805 = vmatpush1.msra.mxu0 0.0
        %3806 = vmatprep.subr.mxu0 0.0
        %3807 = vmatpush1.msra.mxu0 0.0
        %3808 = vmatprep.subr.mxu0 0.0
        %3809 = vmatpush1.msra.mxu0 0.0
        %3810 = vmatprep.subr.mxu0 0.0
        %3811 = vmatpush1.msra.mxu0 0.0
        %3812 = vmatprep.subr.mxu0 0.0
        %3813 = vmatpush1.msra.mxu0 0.0
        %3814 = vmatprep.subr.mxu0 0.0
        %3815 = vmatpush1.msra.mxu0 0.0
        %3816 = vmatprep.subr.mxu0 0.0
        %3817 = vmatpush1.msra.mxu0 0.0
        %3818 = vmatprep.subr.mxu0 0.0
        %3819 = vmatpush1.msra.mxu0 0.0
        %3820 = vmatprep.subr.mxu0 0.0
        %3821 = vmatpush1.msra.mxu0 0.0
        %3822 = vmatprep.subr.mxu0 0.0
        %3823 = vmatpush1.msra.mxu0 0.0
        %3824 = vmatprep.subr.mxu0 0.0
        %3825 = vmatpush1.msra.mxu0 0.0
        %3826 = vmatprep.subr.mxu0 0.0
        %3827 = vmatpush1.msra.mxu0 0.0
        %3828 = vmatprep.mubr.f32.mxu0 0.0
        %3829 = vmatmul.mubr.f32.gmra.mrb[0].mxu0 %v3762
        %v3830 = vpop.f32.mrb[0].mxu0
        %v3831 = vadd.f32 0.0, %v3830
        %v3832 = vpop.f32.mrb[0].mxu0
        %3833 = vdwg.mxu0
        %v3834 = vadd.f32 %v3757, %v3831
        %s3835 = scalar_lea.vmem %s235, 92 [#allocation2]
        %v3836 = vld [vmem:[%s3835] sm:$0x3]
        %v3837 = vld [vmem:[%s1981] sm:$0xff]
        %v3839 = vsel %vm272, %v3836, 0
        %3841 = vmatprep.subr.mxu0 0.0
        %3842 = vmatpush1.msra.mxu0 %v3837
        %3843 = vmatprep.subr.mxu0 0.0
        %3844 = vmatpush1.msra.mxu0 0.0
        %3845 = vmatprep.subr.mxu0 0.0
        %3846 = vmatpush1.msra.mxu0 0.0
        %3847 = vmatprep.subr.mxu0 0.0
        %3848 = vmatpush1.msra.mxu0 0.0
        %3849 = vmatprep.subr.mxu0 0.0
        %3850 = vmatpush1.msra.mxu0 0.0
        %3851 = vmatprep.subr.mxu0 0.0
        %3852 = vmatpush1.msra.mxu0 0.0
        %3853 = vmatprep.subr.mxu0 0.0
        %3854 = vmatpush1.msra.mxu0 0.0
        %3855 = vmatprep.subr.mxu0 0.0
        %3856 = vmatpush1.msra.mxu0 0.0
        %3857 = vmatprep.subr.mxu0 0.0
        %3858 = vmatpush1.msra.mxu0 0.0
        %3859 = vmatprep.subr.mxu0 0.0
        %3860 = vmatpush1.msra.mxu0 0.0
        %3861 = vmatprep.subr.mxu0 0.0
        %3862 = vmatpush1.msra.mxu0 0.0
        %3863 = vmatprep.subr.mxu0 0.0
        %3864 = vmatpush1.msra.mxu0 0.0
        %3865 = vmatprep.subr.mxu0 0.0
        %3866 = vmatpush1.msra.mxu0 0.0
        %3867 = vmatprep.subr.mxu0 0.0
        %3868 = vmatpush1.msra.mxu0 0.0
        %3869 = vmatprep.subr.mxu0 0.0
        %3870 = vmatpush1.msra.mxu0 0.0
        %3871 = vmatprep.subr.mxu0 0.0
        %3872 = vmatpush1.msra.mxu0 0.0
        %3873 = vmatprep.subr.mxu0 0.0
        %3874 = vmatpush1.msra.mxu0 0.0
        %3875 = vmatprep.subr.mxu0 0.0
        %3876 = vmatpush1.msra.mxu0 0.0
        %3877 = vmatprep.subr.mxu0 0.0
        %3878 = vmatpush1.msra.mxu0 0.0
        %3879 = vmatprep.subr.mxu0 0.0
        %3880 = vmatpush1.msra.mxu0 0.0
        %3881 = vmatprep.subr.mxu0 0.0
        %3882 = vmatpush1.msra.mxu0 0.0
        %3883 = vmatprep.subr.mxu0 0.0
        %3884 = vmatpush1.msra.mxu0 0.0
        %3885 = vmatprep.subr.mxu0 0.0
        %3886 = vmatpush1.msra.mxu0 0.0
        %3887 = vmatprep.subr.mxu0 0.0
        %3888 = vmatpush1.msra.mxu0 0.0
        %3889 = vmatprep.subr.mxu0 0.0
        %3890 = vmatpush1.msra.mxu0 0.0
        %3891 = vmatprep.subr.mxu0 0.0
        %3892 = vmatpush1.msra.mxu0 0.0
        %3893 = vmatprep.subr.mxu0 0.0
        %3894 = vmatpush1.msra.mxu0 0.0
        %3895 = vmatprep.subr.mxu0 0.0
        %3896 = vmatpush1.msra.mxu0 0.0
        %3897 = vmatprep.subr.mxu0 0.0
        %3898 = vmatpush1.msra.mxu0 0.0
        %3899 = vmatprep.subr.mxu0 0.0
        %3900 = vmatpush1.msra.mxu0 0.0
        %3901 = vmatprep.subr.mxu0 0.0
        %3902 = vmatpush1.msra.mxu0 0.0
        %3903 = vmatprep.subr.mxu0 0.0
        %3904 = vmatpush1.msra.mxu0 0.0
        %3905 = vmatprep.mubr.f32.mxu0 0.0
        %3906 = vmatmul.mubr.f32.gmra.mrb[0].mxu0 %v3839
        %v3907 = vpop.f32.mrb[0].mxu0
        %v3908 = vadd.f32 0.0, %v3907
        %v3909 = vpop.f32.mrb[0].mxu0
        %3910 = vdwg.mxu0
        %v3911 = vadd.f32 %v3834, %v3908
        %s3912 = scalar_lea.vmem %s235, 94 [#allocation2]
        %v3913 = vld [vmem:[%s3912] sm:$0x3]
        %v3914 = vld [vmem:[%s2059] sm:$0xff]
        %v3916 = vsel %vm272, %v3913, 0
        %3918 = vmatprep.subr.mxu0 0.0
        %3919 = vmatpush1.msra.mxu0 %v3914
        %3920 = vmatprep.subr.mxu0 0.0
        %3921 = vmatpush1.msra.mxu0 0.0
        %3922 = vmatprep.subr.mxu0 0.0
        %3923 = vmatpush1.msra.mxu0 0.0
        %3924 = vmatprep.subr.mxu0 0.0
        %3925 = vmatpush1.msra.mxu0 0.0
        %3926 = vmatprep.subr.mxu0 0.0
        %3927 = vmatpush1.msra.mxu0 0.0
        %3928 = vmatprep.subr.mxu0 0.0
        %3929 = vmatpush1.msra.mxu0 0.0
        %3930 = vmatprep.subr.mxu0 0.0
        %3931 = vmatpush1.msra.mxu0 0.0
        %3932 = vmatprep.subr.mxu0 0.0
        %3933 = vmatpush1.msra.mxu0 0.0
        %3934 = vmatprep.subr.mxu0 0.0
        %3935 = vmatpush1.msra.mxu0 0.0
        %3936 = vmatprep.subr.mxu0 0.0
        %3937 = vmatpush1.msra.mxu0 0.0
        %3938 = vmatprep.subr.mxu0 0.0
        %3939 = vmatpush1.msra.mxu0 0.0
        %3940 = vmatprep.subr.mxu0 0.0
        %3941 = vmatpush1.msra.mxu0 0.0
        %3942 = vmatprep.subr.mxu0 0.0
        %3943 = vmatpush1.msra.mxu0 0.0
        %3944 = vmatprep.subr.mxu0 0.0
        %3945 = vmatpush1.msra.mxu0 0.0
        %3946 = vmatprep.subr.mxu0 0.0
        %3947 = vmatpush1.msra.mxu0 0.0
        %3948 = vmatprep.subr.mxu0 0.0
        %3949 = vmatpush1.msra.mxu0 0.0
        %3950 = vmatprep.subr.mxu0 0.0
        %3951 = vmatpush1.msra.mxu0 0.0
        %3952 = vmatprep.subr.mxu0 0.0
        %3953 = vmatpush1.msra.mxu0 0.0
        %3954 = vmatprep.subr.mxu0 0.0
        %3955 = vmatpush1.msra.mxu0 0.0
        %3956 = vmatprep.subr.mxu0 0.0
        %3957 = vmatpush1.msra.mxu0 0.0
        %3958 = vmatprep.subr.mxu0 0.0
        %3959 = vmatpush1.msra.mxu0 0.0
        %3960 = vmatprep.subr.mxu0 0.0
        %3961 = vmatpush1.msra.mxu0 0.0
        %3962 = vmatprep.subr.mxu0 0.0
        %3963 = vmatpush1.msra.mxu0 0.0
        %3964 = vmatprep.subr.mxu0 0.0
        %3965 = vmatpush1.msra.mxu0 0.0
        %3966 = vmatprep.subr.mxu0 0.0
        %3967 = vmatpush1.msra.mxu0 0.0
        %3968 = vmatprep.subr.mxu0 0.0
        %3969 = vmatpush1.msra.mxu0 0.0
        %3970 = vmatprep.subr.mxu0 0.0
        %3971 = vmatpush1.msra.mxu0 0.0
        %3972 = vmatprep.subr.mxu0 0.0
        %3973 = vmatpush1.msra.mxu0 0.0
        %3974 = vmatprep.subr.mxu0 0.0
        %3975 = vmatpush1.msra.mxu0 0.0
        %3976 = vmatprep.subr.mxu0 0.0
        %3977 = vmatpush1.msra.mxu0 0.0
        %3978 = vmatprep.subr.mxu0 0.0
        %3979 = vmatpush1.msra.mxu0 0.0
        %3980 = vmatprep.subr.mxu0 0.0
        %3981 = vmatpush1.msra.mxu0 0.0
        %3982 = vmatprep.mubr.f32.mxu0 0.0
        %3983 = vmatmul.mubr.f32.gmra.mrb[0].mxu0 %v3916
        %v3984 = vpop.f32.mrb[0].mxu0
        %v3985 = vadd.f32 0.0, %v3984
        %v3986 = vpop.f32.mrb[0].mxu0
        %3987 = vdwg.mxu0
        %v3988 = vadd.f32 %v3911, %v3985
        %v3989 = vadd.f32 %v3988, %v2139
        %s3990 = scalar_lea.vmem %s261, 2 [#allocation7]
        %3991 = vst [vmem:[%s3990] sm:$0x3] %v3989
        %s3992 = sand.u32 %s124, 1
        %s3993 = scalar_lea.sflag [#allocation4], %s3992
        %s3994 = sand.u32 %s124, 1
        %s3995 = smul.addr %s3994, 4
        %s3996 = scalar_lea.vmem [#allocation7], %s3995
        // Predicated region
        $region41: #{tpu_custom_call.1} parent=31 // pred_check
          %p3997 = pneg %p134
        $region42: #{tpu_custom_call.1} parent=31 // pred_check_branch
          %3999 = sbr.rel (%p3997) target = $region44
        $region43: #{tpu_custom_call.1} parent=31 // pred_region
          %s4000 = smul.u32 2, %s28
          %s4002 = ssub.s32 64, 64
          %4003 = vsyncadd %s3993, %s4002
          %s4004 = smul.addr %s27, 2
          %s4005 = sadd.s32 %s4000, %s4004
          %s4006 = smul.addr %s26, 4
          %s4007 = sadd.s32 %s4005, %s4006
          %s4008 = smul.addr %s4007, 32
          %s4009 = scalar_lea.hbm %s3, %s4008
          %s4010 = sshll.u32 %s3996, 4
          %s4011 = int_to_ptr.vmem [resolvable:$true] %s4010
          %4016 = dma.vmem_to_hbm [thread:$0]  %s4011, 64, %s4009, %s3993, 32, 32, 2
        $region44: #{tpu_custom_call.1} parent=31 // pred_fallthru
          _
      $region32: #{tpu_custom_call.1} parent=5 // pred_fallthru
        _
      %p4017 = scmp.le.s32.totalorder 2, %s16
      // Predicated region
      $region45: #{tpu_custom_call.1} parent=5 // pred_check
        %p4018 = pneg %p4017
      $region46: #{tpu_custom_call.1} parent=5 // pred_check_branch
        %4020 = sbr.rel (%p4018) target = $region48
      $region47: #{tpu_custom_call.1} parent=5 // pred_region
        %s4021 = ssub.s32 %s16, 2
        // Predicated region
        $region49: #{tpu_custom_call.1} parent=47 // pred_check
          %p4022 = pneg %p140
        $region50: #{tpu_custom_call.1} parent=47 // pred_check_branch
          %4024 = sbr.rel (%p4022) target = $region52
        $region51: #{tpu_custom_call.1} parent=47 // pred_region
          %s4025 = sand.u32 %s125, 1
          %s4026 = scalar_lea.sflag [#allocation4], %s4025
          %s4027 = sand.u32 %s125, 1
          %s4028 = smul.addr %s4027, 4
          %s4029 = scalar_lea.vmem [#allocation7], %s4028
          %4030 = dma.done %s4026, 64
        $region52: #{tpu_custom_call.1} parent=47 // pred_fallthru
          _
      $region48: #{tpu_custom_call.1} parent=5 // pred_fallthru
        _
    $region6: #{tpu_custom_call.1} parent=1 // loop_footer
      %s20 = sadd.s32 1, %s16
    $region7: #{tpu_custom_call.1} parent=1 // loop_footer_branch
      %15 = sbr.rel target = $region3
    $region8: #{tpu_custom_call.1} parent=1 // loop_exit
      _
    %4031 = vsyncpa [#allocation3], 1
    %s4032 = scalar_lea.sflag [#allocation3], 1
    %4033 = vsyncpa %s4032, 1
    %4034 = vsyncpa [#allocation6], 1
    %4035 = vsyncpa [#allocation4], 1
    %s4036 = scalar_lea.sflag [#allocation4], 1
    %4037 = vsyncpa %s4036, 1

</llo_original>
